<compile_context>
chip_gen: v7x
topology: tpu7x:2x2x1
jax: 0.10.0
libtpu: 0.0.40
codegen_flags: <defaults>
</compile_context>

<pallas_src>
import math
import functools

import jax
import jax.numpy as jnp
from jax import lax
from jax.experimental import pallas as pl
from jax.experimental.pallas import tpu as pltpu

NEG_BIG = -1e30  # finite "-inf": keeps softmax NaN-free even if a window has 0 valid keys


# ----------------------------- Pallas kernel -------------------------------

def _window_mha_kernel(x_ref, pos_ref, bias_ref,
                       wqk_ref, wv_ref, wo_ref,
                       bqk_ref, bv_ref, bo_ref,
                       out_ref, *, nhead):
    """One grid step = multi-head attention for a block of B windows.

    x_ref, pos_ref : (B*S, C)       bf16 activations (windows flattened to rows)
    bias_ref       : (1, B*S, B*S)  bf16 additive mask (block-diag + key padding)
    wqk_ref        : (C, 2C)        bf16 fused [Wq^T | Wk^T]
    wv_ref, wo_ref : (C, C)         bf16
    bqk/bv/bo_ref  : (1, 2C)/(1, C)/(1, C) f32 biases
    out_ref        : (B*S, C)       f32 output
    """
    C = out_ref.shape[-1]
    hd = C // nhead
    scale = 1.0 / math.sqrt(hd)

    x = x_ref[...]                       # (BS, C) bf16
    qk_in = x + pos_ref[...]             # q = k = feat + pos ; v = feat

    # Fused Q/K projection: one (BS, C) @ (C, 2C) MXU matmul, f32 accumulation.
    qk = lax.dot_general(qk_in, wqk_ref[...], (((1,), (0,)), ((), ())),
                         preferred_element_type=jnp.float32)
    qk = qk + bqk_ref[...]                                  # (BS, 2C) f32
    q = (qk[:, :C] * scale).astype(jnp.bfloat16)            # MHA scales q by 1/sqrt(hd)
    k = qk[:, C:].astype(jnp.bfloat16)

    v = lax.dot_general(x, wv_ref[...], (((1,), (0,)), ((), ())),
                        preferred_element_type=jnp.float32)
    v = (v + bv_ref[...]).astype(jnp.bfloat16)              # (BS, C)

    bias = bias_ref[0].astype(jnp.float32)                  # (BS, BS)
    wo = wo_ref[...]                                        # (C, C) bf16

    # Per head: one big (BS, hd) x (hd, BS) score matmul over the whole block;
    # the block-diagonal additive bias removes cross-window attention.  The
    # head output is folded straight into its slice of the output projection
    # (accumulated in f32), so no concatenate is needed.
    acc = jnp.zeros(out_ref.shape, jnp.float32)
    for h in range(nhead):                                  # nhead small & static
        sl = slice(h * hd, (h + 1) * hd)
        s = lax.dot_general(q[:, sl], k[:, sl], (((1,), (1,)), ((), ())),
                            preferred_element_type=jnp.float32)      # (BS, BS)
        s = s + bias
        s = s - jnp.max(s, axis=-1, keepdims=True)
        p = jnp.exp(s)
        p = p * pl.reciprocal(jnp.sum(p, axis=-1, keepdims=True), approx=True)
        oh = lax.dot_general(p.astype(jnp.bfloat16), v[:, sl],
                             (((1,), (0,)), ((), ())),
                             preferred_element_type=jnp.float32)     # (BS, hd)
        acc = acc + lax.dot_general(oh.astype(jnp.bfloat16), wo[sl, :],
                                    (((1,), (0,)), ((), ())),
                                    preferred_element_type=jnp.float32)

    out_ref[...] = (acc + bo_ref[...]).astype(out_ref.dtype)


# ------------------------------- Wrapper ------------------------------------

@functools.partial(jax.jit, static_argnames=("nhead", "windows_per_block"))
def window_attention_pallas(feat, pos, key_padding_mask, params, nhead,
                            windows_per_block=16):
    """feat, pos: (N, S, C) f32; key_padding_mask: (N, S) bool (True = pad)."""
    N, S, C = feat.shape
    assert C % nhead == 0
    B = windows_per_block
    n_blocks = (N + B - 1) // B
    Np = n_blocks * B
    if Np != N:  # pad window axis so every grid step handles exactly B windows
        padw = Np - N
        feat = jnp.concatenate([feat, jnp.zeros((padw, S, C), feat.dtype)], 0)
        pos = jnp.concatenate([pos, jnp.zeros((padw, S, C), pos.dtype)], 0)
        key_padding_mask = jnp.concatenate(
            [key_padding_mask, jnp.ones((padw, S), key_padding_mask.dtype)], 0)
    BS = B * S

    # bf16 activations: halves DMA bytes; matmuls accumulate in f32 in-kernel.
    x2d = feat.reshape(Np * S, C).astype(jnp.bfloat16)
    p2d = pos.reshape(Np * S, C).astype(jnp.bfloat16)

    # Precomputed additive attention bias per window block:
    # block-diagonal (a query only sees keys of its own window) + key padding.
    kbias = jnp.where(key_padding_mask, NEG_BIG, 0.0).astype(jnp.float32)
    kbias = kbias.reshape(n_blocks, 1, BS)
    win_id = jnp.arange(BS, dtype=jnp.int32) // S
    blockdiag = jnp.where(win_id[:, None] == win_id[None, :], 0.0, NEG_BIG)
    bias = (blockdiag[None, :, :] + kbias).astype(jnp.bfloat16)   # (n_blocks, BS, BS)

    # Fused / bf16 weights (Q and K both consume feat+pos).
    wqk_t = jnp.concatenate([params["wq_t"], params["wk_t"]], axis=1).astype(jnp.bfloat16)
    wv_t = params["wv_t"].astype(jnp.bfloat16)
    wo_t = params["wo_t"].astype(jnp.bfloat16)
    bqk = jnp.concatenate([params["bq"], params["bk"]], axis=1).astype(jnp.float32)
    bv = params["bv"].astype(jnp.float32)
    bo = params["bo"].astype(jnp.float32)

    kernel = functools.partial(_window_mha_kernel, nhead=nhead)
    row_spec = pl.BlockSpec((BS, C), lambda i: (i, 0))

    def rep(shape):                       # weights/biases: same block every step
        return pl.BlockSpec(shape, lambda i: (0, 0))

    out = pl.pallas_call(
        kernel,
        grid=(n_blocks,),
        in_specs=[
            row_spec,                                        # feat rows
            row_spec,                                        # pos rows
            pl.BlockSpec((1, BS, BS), lambda i: (i, 0, 0)),  # additive bias
            rep((C, 2 * C)),                                 # [Wq | Wk]^T
            rep((C, C)),                                     # Wv^T
            rep((C, C)),                                     # Wo^T
            rep((1, 2 * C)),                                 # [bq | bk]
            rep((1, C)),                                     # bv
            rep((1, C)),                                     # bo
        ],
        out_specs=row_spec,
        out_shape=jax.ShapeDtypeStruct((Np * S, C), jnp.float32),
        compiler_params=pltpu.CompilerParams(
            dimension_semantics=("parallel",)),
    )(x2d, p2d, bias, wqk_t, wv_t, wo_t, bqk, bv, bo)

    return out.reshape(Np, S, C)[:N]


# --------------------------- Pure-JAX reference ------------------------------

def window_attention_ref(feat, pos, key_padding_mask, params, nhead):
    N, S, C = feat.shape
    hd = C // nhead
    qk = feat + pos
    q = qk @ params["wq_t"] + params["bq"]
    k = qk @ params["wk_t"] + params["bk"]
    v = feat @ params["wv_t"] + params["bv"]

    def split(t):  # (N, S, C) -> (N, H, S, hd)
        return t.reshape(N, S, nhead, hd).transpose(0, 2, 1, 3)

    q, k, v = split(q) / math.sqrt(hd), split(k), split(v)
    s = jnp.einsum("nhqd,nhkd->nhqk", q, k)
    s = s + jnp.where(key_padding_mask[:, None, None, :], -jnp.inf, 0.0)
    p = jax.nn.softmax(s, axis=-1)
    o = jnp.einsum("nhqk,nhkd->nhqd", p, v)
    o = o.transpose(0, 2, 1, 3).reshape(N, S, C)
    return o @ params["wo_t"] + params["bo"]


# --------------------------------- Main --------------------------------------

if __name__ == "__main__":
    d_model = 128     # SST's d_model (keeps all loads/stores lane-dense)
    nhead = 8
    n_windows = 40    # not a multiple of windows_per_block -> exercises padding
    seq = 8

    key = jax.random.PRNGKey(0)
    k_feat, k_pos, k_valid, k_w, k_b, k_wo, k_bo = jax.random.split(key, 7)

    feat = jax.random.normal(k_feat, (n_windows, seq, d_model), dtype=jnp.float32)
    pos = jax.random.normal(k_pos, (n_windows, seq, d_model), dtype=jnp.float32) * 0.1

    # key_padding_mask: True = padded token (ignored as key); >=1 valid key/window.
    n_valid = jax.random.randint(k_valid, (n_windows,), 1, seq + 1)
    key_padding_mask = jnp.arange(seq)[None, :] >= n_valid[:, None]     # (N, S) bool

    # Parameters mirroring nn.MultiheadAttention:
    #   in_proj_weight (3C, C), in_proj_bias (3C,), out_proj (C, C) + (C,)
    in_proj_weight = jax.random.normal(k_w, (3 * d_model, d_model), jnp.float32) * 0.05
    in_proj_bias = jax.random.normal(k_b, (3 * d_model,), jnp.float32) * 0.01
    out_proj_weight = jax.random.normal(k_wo, (d_model, d_model), jnp.float32) * 0.05
    out_proj_bias = jax.random.normal(k_bo, (d_model,), jnp.float32) * 0.01

    params = {
        "wq_t": in_proj_weight[0 * d_model:1 * d_model].T,
        "wk_t": in_proj_weight[1 * d_model:2 * d_model].T,
        "wv_t": in_proj_weight[2 * d_model:3 * d_model].T,
        "wo_t": out_proj_weight.T,
        "bq": in_proj_bias[0 * d_model:1 * d_model].reshape(1, d_model),
        "bk": in_proj_bias[1 * d_model:2 * d_model].reshape(1, d_model),
        "bv": in_proj_bias[2 * d_model:3 * d_model].reshape(1, d_model),
        "bo": out_proj_bias.reshape(1, d_model),
    }

    out = window_attention_pallas(feat, pos, key_padding_mask, params, nhead=nhead)
    out = jax.block_until_ready(out)

    ref = window_attention_ref(feat, pos, key_padding_mask, params, nhead)
    assert out.shape == (n_windows, seq, d_model)
    max_err = jnp.max(jnp.abs(out - ref))
    assert jnp.allclose(out, ref, atol=3e-2, rtol=3e-2), f"max abs err {max_err}"

    print("KERNEL_OK")
</pallas_src>

<mosaic_0001>
module attributes {stable_mosaic.version = 11 : i64} {
  func.func @_window_mha_kernel(%arg0: i32, %arg1: memref<128x128xbf16, #tpu.memory_space<vmem>>, %arg2: memref<128x128xbf16, #tpu.memory_space<vmem>>, %arg3: memref<1x128x128xbf16, #tpu.memory_space<vmem>>, %arg4: memref<128x256xbf16, #tpu.memory_space<vmem>>, %arg5: memref<128x128xbf16, #tpu.memory_space<vmem>>, %arg6: memref<128x128xbf16, #tpu.memory_space<vmem>>, %arg7: memref<1x256xf32, #tpu.memory_space<vmem>>, %arg8: memref<1x128xf32, #tpu.memory_space<vmem>>, %arg9: memref<1x128xf32, #tpu.memory_space<vmem>>, %arg10: memref<128x128xf32, #tpu.memory_space<vmem>>) attributes {dimension_semantics = [#tpu.dimension_semantics<parallel>], iteration_bounds = array<i64: 3>, scalar_prefetch = 0 : i64, scratch_operands = 0 : i64, tpu.core_type = #tpu.core_type<tc>, window_params = [{transform_indices = @transform_0, window_bounds = array<i64: 128, 128>}, {transform_indices = @transform_1, window_bounds = array<i64: 128, 128>}, {transform_indices = @transform_2, window_bounds = array<i64: 1, 128, 128>}, {pipeline_mode = #tpu.pipeline_mode<synchronous>, transform_indices = @transform_3, window_bounds = array<i64: 128, 256>}, {pipeline_mode = #tpu.pipeline_mode<synchronous>, transform_indices = @transform_4, window_bounds = array<i64: 128, 128>}, {pipeline_mode = #tpu.pipeline_mode<synchronous>, transform_indices = @transform_5, window_bounds = array<i64: 128, 128>}, {pipeline_mode = #tpu.pipeline_mode<synchronous>, transform_indices = @transform_6, window_bounds = array<i64: 1, 256>}, {pipeline_mode = #tpu.pipeline_mode<synchronous>, transform_indices = @transform_7, window_bounds = array<i64: 1, 128>}, {pipeline_mode = #tpu.pipeline_mode<synchronous>, transform_indices = @transform_8, window_bounds = array<i64: 1, 128>}, {transform_indices = @transform_9, window_bounds = array<i64: 128, 128>}]} {
    %c0 = arith.constant 0 : index
    %c0_0 = arith.constant 0 : index
    %0 = vector.load %arg1[%c0, %c0_0] : memref<128x128xbf16, #tpu.memory_space<vmem>>, vector<128x128xbf16>
    %c0_1 = arith.constant 0 : index
    %c0_2 = arith.constant 0 : index
    %1 = vector.load %arg2[%c0_1, %c0_2] : memref<128x128xbf16, #tpu.memory_space<vmem>>, vector<128x128xbf16>
    %2 = arith.addf %0, %1 : vector<128x128xbf16>
    %c0_3 = arith.constant 0 : index
    %c0_4 = arith.constant 0 : index
    %3 = vector.load %arg4[%c0_3, %c0_4] : memref<128x256xbf16, #tpu.memory_space<vmem>>, vector<128x256xbf16>
    %cst = arith.constant dense<0.000000e+00> : vector<128x256xf32>
    %4 = tpu.matmul %2, %3, %cst {dimension_numbers = #tpu.dot_dimension_numbers<[1], [0], [0], [1], [0, 0, 1, 1], [], []>} : vector<128x128xbf16>, vector<128x256xbf16>, vector<128x256xf32> -> vector<128x256xf32>
    %c0_5 = arith.constant 0 : index
    %c0_6 = arith.constant 0 : index
    %5 = vector.load %arg7[%c0_5, %c0_6] : memref<1x256xf32, #tpu.memory_space<vmem>>, vector<1x256xf32>
    %6 = vector.broadcast %5 : vector<1x256xf32> to vector<128x256xf32>
    %7 = arith.addf %4, %6 : vector<128x256xf32>
    %8 = vector.extract_strided_slice %7 {offsets = [0, 0], sizes = [128, 128], strides = [1, 1]} : vector<128x256xf32> to vector<128x128xf32>
    %cst_7 = arith.constant 2.500000e-01 : f32
    %9 = vector.broadcast %cst_7 : f32 to vector<128x128xf32>
    %10 = arith.mulf %8, %9 : vector<128x128xf32>
    %11 = arith.truncf %10 : vector<128x128xf32> to vector<128x128xbf16>
    %12 = vector.extract_strided_slice %7 {offsets = [0, 128], sizes = [128, 128], strides = [1, 1]} : vector<128x256xf32> to vector<128x128xf32>
    %13 = arith.truncf %12 : vector<128x128xf32> to vector<128x128xbf16>
    %c0_8 = arith.constant 0 : index
    %c0_9 = arith.constant 0 : index
    %14 = vector.load %arg5[%c0_8, %c0_9] : memref<128x128xbf16, #tpu.memory_space<vmem>>, vector<128x128xbf16>
    %cst_10 = arith.constant dense<0.000000e+00> : vector<128x128xf32>
    %15 = tpu.matmul %0, %14, %cst_10 {dimension_numbers = #tpu.dot_dimension_numbers<[1], [0], [0], [1], [0, 0, 1, 1], [], []>} : vector<128x128xbf16>, vector<128x128xbf16>, vector<128x128xf32> -> vector<128x128xf32>
    %c0_11 = arith.constant 0 : index
    %c0_12 = arith.constant 0 : index
    %16 = vector.load %arg8[%c0_11, %c0_12] : memref<1x128xf32, #tpu.memory_space<vmem>>, vector<1x128xf32>
    %17 = vector.broadcast %16 : vector<1x128xf32> to vector<128x128xf32>
    %18 = arith.addf %15, %17 : vector<128x128xf32>
    %19 = arith.truncf %18 : vector<128x128xf32> to vector<128x128xbf16>
    %c0_13 = arith.constant 0 : index
    %c0_14 = arith.constant 0 : index
    %c0_15 = arith.constant 0 : index
    %20 = vector.load %arg3[%c0_13, %c0_14, %c0_15] : memref<1x128x128xbf16, #tpu.memory_space<vmem>>, vector<1x128x128xbf16>
    %21 = vector.shape_cast %20 : vector<1x128x128xbf16> to vector<128x128xbf16>
    %22 = arith.extf %21 : vector<128x128xbf16> to vector<128x128xf32>
    %c0_16 = arith.constant 0 : index
    %c0_17 = arith.constant 0 : index
    %23 = vector.load %arg6[%c0_16, %c0_17] : memref<128x128xbf16, #tpu.memory_space<vmem>>, vector<128x128xbf16>
    %cst_18 = arith.constant 0.000000e+00 : f32
    %24 = vector.broadcast %cst_18 : f32 to vector<128x128xf32>
    %25 = vector.extract_strided_slice %11 {offsets = [0, 0], sizes = [128, 16], strides = [1, 1]} : vector<128x128xbf16> to vector<128x16xbf16>
    %26 = vector.extract_strided_slice %13 {offsets = [0, 0], sizes = [128, 16], strides = [1, 1]} : vector<128x128xbf16> to vector<128x16xbf16>
    %cst_19 = arith.constant dense<0.000000e+00> : vector<128x128xf32>
    %27 = tpu.matmul %25, %26, %cst_19 {dimension_numbers = #tpu.dot_dimension_numbers<[1], [1], [0], [0], [0, 0, 1, 0], [], []>} : vector<128x16xbf16>, vector<128x16xbf16>, vector<128x128xf32> -> vector<128x128xf32>
    %28 = arith.addf %27, %22 : vector<128x128xf32>
    %cst_20 = arith.constant dense<0xFF800000> : vector<128xf32>
    %29 = vector.multi_reduction <maximumf>, %28, %cst_20 [1] : vector<128x128xf32> to vector<128xf32>
    %30 = vector.shape_cast %29 : vector<128xf32> to vector<128x1xf32>
    %31 = vector.broadcast %30 : vector<128x1xf32> to vector<128x128xf32>
    %32 = arith.subf %28, %31 : vector<128x128xf32>
    %33 = math.exp %32 : vector<128x128xf32>
    %cst_21 = arith.constant dense<0.000000e+00> : vector<128xf32>
    %34 = vector.multi_reduction <add>, %33, %cst_21 [1] : vector<128x128xf32> to vector<128xf32>
    %35 = vector.shape_cast %34 : vector<128xf32> to vector<128x1xf32>
    %36 = tpu.reciprocal %35 {approx = true} : vector<128x1xf32> -> vector<128x1xf32>
    %37 = vector.broadcast %36 : vector<128x1xf32> to vector<128x128xf32>
    %38 = arith.mulf %33, %37 : vector<128x128xf32>
    %39 = arith.truncf %38 : vector<128x128xf32> to vector<128x128xbf16>
    %40 = vector.extract_strided_slice %19 {offsets = [0, 0], sizes = [128, 16], strides = [1, 1]} : vector<128x128xbf16> to vector<128x16xbf16>
    %cst_22 = arith.constant dense<0.000000e+00> : vector<128x16xf32>
    %41 = tpu.matmul %39, %40, %cst_22 {dimension_numbers = #tpu.dot_dimension_numbers<[1], [0], [0], [1], [0, 0, 1, 1], [], []>} : vector<128x128xbf16>, vector<128x16xbf16>, vector<128x16xf32> -> vector<128x16xf32>
    %42 = arith.truncf %41 : vector<128x16xf32> to vector<128x16xbf16>
    %43 = vector.extract_strided_slice %23 {offsets = [0, 0], sizes = [16, 128], strides = [1, 1]} : vector<128x128xbf16> to vector<16x128xbf16>
    %cst_23 = arith.constant dense<0.000000e+00> : vector<128x128xf32>
    %44 = tpu.matmul %42, %43, %cst_23 {dimension_numbers = #tpu.dot_dimension_numbers<[1], [0], [0], [1], [0, 0, 1, 1], [], []>} : vector<128x16xbf16>, vector<16x128xbf16>, vector<128x128xf32> -> vector<128x128xf32>
    %45 = arith.addf %24, %44 : vector<128x128xf32>
    %46 = vector.extract_strided_slice %11 {offsets = [0, 16], sizes = [128, 16], strides = [1, 1]} : vector<128x128xbf16> to vector<128x16xbf16>
    %47 = vector.extract_strided_slice %13 {offsets = [0, 16], sizes = [128, 16], strides = [1, 1]} : vector<128x128xbf16> to vector<128x16xbf16>
    %cst_24 = arith.constant dense<0.000000e+00> : vector<128x128xf32>
    %48 = tpu.matmul %46, %47, %cst_24 {dimension_numbers = #tpu.dot_dimension_numbers<[1], [1], [0], [0], [0, 0, 1, 0], [], []>} : vector<128x16xbf16>, vector<128x16xbf16>, vector<128x128xf32> -> vector<128x128xf32>
    %49 = arith.addf %48, %22 : vector<128x128xf32>
    %cst_25 = arith.constant dense<0xFF800000> : vector<128xf32>
    %50 = vector.multi_reduction <maximumf>, %49, %cst_25 [1] : vector<128x128xf32> to vector<128xf32>
    %51 = vector.shape_cast %50 : vector<128xf32> to vector<128x1xf32>
    %52 = vector.broadcast %51 : vector<128x1xf32> to vector<128x128xf32>
    %53 = arith.subf %49, %52 : vector<128x128xf32>
    %54 = math.exp %53 : vector<128x128xf32>
    %cst_26 = arith.constant dense<0.000000e+00> : vector<128xf32>
    %55 = vector.multi_reduction <add>, %54, %cst_26 [1] : vector<128x128xf32> to vector<128xf32>
    %56 = vector.shape_cast %55 : vector<128xf32> to vector<128x1xf32>
    %57 = tpu.reciprocal %56 {approx = true} : vector<128x1xf32> -> vector<128x1xf32>
    %58 = vector.broadcast %57 : vector<128x1xf32> to vector<128x128xf32>
    %59 = arith.mulf %54, %58 : vector<128x128xf32>
    %60 = arith.truncf %59 : vector<128x128xf32> to vector<128x128xbf16>
    %61 = vector.extract_strided_slice %19 {offsets = [0, 16], sizes = [128, 16], strides = [1, 1]} : vector<128x128xbf16> to vector<128x16xbf16>
    %cst_27 = arith.constant dense<0.000000e+00> : vector<128x16xf32>
    %62 = tpu.matmul %60, %61, %cst_27 {dimension_numbers = #tpu.dot_dimension_numbers<[1], [0], [0], [1], [0, 0, 1, 1], [], []>} : vector<128x128xbf16>, vector<128x16xbf16>, vector<128x16xf32> -> vector<128x16xf32>
    %63 = arith.truncf %62 : vector<128x16xf32> to vector<128x16xbf16>
    %64 = vector.extract_strided_slice %23 {offsets = [16, 0], sizes = [16, 128], strides = [1, 1]} : vector<128x128xbf16> to vector<16x128xbf16>
    %cst_28 = arith.constant dense<0.000000e+00> : vector<128x128xf32>
    %65 = tpu.matmul %63, %64, %cst_28 {dimension_numbers = #tpu.dot_dimension_numbers<[1], [0], [0], [1], [0, 0, 1, 1], [], []>} : vector<128x16xbf16>, vector<16x128xbf16>, vector<128x128xf32> -> vector<128x128xf32>
    %66 = arith.addf %45, %65 : vector<128x128xf32>
    %67 = vector.extract_strided_slice %11 {offsets = [0, 32], sizes = [128, 16], strides = [1, 1]} : vector<128x128xbf16> to vector<128x16xbf16>
    %68 = vector.extract_strided_slice %13 {offsets = [0, 32], sizes = [128, 16], strides = [1, 1]} : vector<128x128xbf16> to vector<128x16xbf16>
    %cst_29 = arith.constant dense<0.000000e+00> : vector<128x128xf32>
    %69 = tpu.matmul %67, %68, %cst_29 {dimension_numbers = #tpu.dot_dimension_numbers<[1], [1], [0], [0], [0, 0, 1, 0], [], []>} : vector<128x16xbf16>, vector<128x16xbf16>, vector<128x128xf32> -> vector<128x128xf32>
    %70 = arith.addf %69, %22 : vector<128x128xf32>
    %cst_30 = arith.constant dense<0xFF800000> : vector<128xf32>
    %71 = vector.multi_reduction <maximumf>, %70, %cst_30 [1] : vector<128x128xf32> to vector<128xf32>
    %72 = vector.shape_cast %71 : vector<128xf32> to vector<128x1xf32>
    %73 = vector.broadcast %72 : vector<128x1xf32> to vector<128x128xf32>
    %74 = arith.subf %70, %73 : vector<128x128xf32>
    %75 = math.exp %74 : vector<128x128xf32>
    %cst_31 = arith.constant dense<0.000000e+00> : vector<128xf32>
    %76 = vector.multi_reduction <add>, %75, %cst_31 [1] : vector<128x128xf32> to vector<128xf32>
    %77 = vector.shape_cast %76 : vector<128xf32> to vector<128x1xf32>
    %78 = tpu.reciprocal %77 {approx = true} : vector<128x1xf32> -> vector<128x1xf32>
    %79 = vector.broadcast %78 : vector<128x1xf32> to vector<128x128xf32>
    %80 = arith.mulf %75, %79 : vector<128x128xf32>
    %81 = arith.truncf %80 : vector<128x128xf32> to vector<128x128xbf16>
    %82 = vector.extract_strided_slice %19 {offsets = [0, 32], sizes = [128, 16], strides = [1, 1]} : vector<128x128xbf16> to vector<128x16xbf16>
    %cst_32 = arith.constant dense<0.000000e+00> : vector<128x16xf32>
    %83 = tpu.matmul %81, %82, %cst_32 {dimension_numbers = #tpu.dot_dimension_numbers<[1], [0], [0], [1], [0, 0, 1, 1], [], []>} : vector<128x128xbf16>, vector<128x16xbf16>, vector<128x16xf32> -> vector<128x16xf32>
    %84 = arith.truncf %83 : vector<128x16xf32> to vector<128x16xbf16>
    %85 = vector.extract_strided_slice %23 {offsets = [32, 0], sizes = [16, 128], strides = [1, 1]} : vector<128x128xbf16> to vector<16x128xbf16>
    %cst_33 = arith.constant dense<0.000000e+00> : vector<128x128xf32>
    %86 = tpu.matmul %84, %85, %cst_33 {dimension_numbers = #tpu.dot_dimension_numbers<[1], [0], [0], [1], [0, 0, 1, 1], [], []>} : vector<128x16xbf16>, vector<16x128xbf16>, vector<128x128xf32> -> vector<128x128xf32>
    %87 = arith.addf %66, %86 : vector<128x128xf32>
    %88 = vector.extract_strided_slice %11 {offsets = [0, 48], sizes = [128, 16], strides = [1, 1]} : vector<128x128xbf16> to vector<128x16xbf16>
    %89 = vector.extract_strided_slice %13 {offsets = [0, 48], sizes = [128, 16], strides = [1, 1]} : vector<128x128xbf16> to vector<128x16xbf16>
    %cst_34 = arith.constant dense<0.000000e+00> : vector<128x128xf32>
    %90 = tpu.matmul %88, %89, %cst_34 {dimension_numbers = #tpu.dot_dimension_numbers<[1], [1], [0], [0], [0, 0, 1, 0], [], []>} : vector<128x16xbf16>, vector<128x16xbf16>, vector<128x128xf32> -> vector<128x128xf32>
    %91 = arith.addf %90, %22 : vector<128x128xf32>
    %cst_35 = arith.constant dense<0xFF800000> : vector<128xf32>
    %92 = vector.multi_reduction <maximumf>, %91, %cst_35 [1] : vector<128x128xf32> to vector<128xf32>
    %93 = vector.shape_cast %92 : vector<128xf32> to vector<128x1xf32>
    %94 = vector.broadcast %93 : vector<128x1xf32> to vector<128x128xf32>
    %95 = arith.subf %91, %94 : vector<128x128xf32>
    %96 = math.exp %95 : vector<128x128xf32>
    %cst_36 = arith.constant dense<0.000000e+00> : vector<128xf32>
    %97 = vector.multi_reduction <add>, %96, %cst_36 [1] : vector<128x128xf32> to vector<128xf32>
    %98 = vector.shape_cast %97 : vector<128xf32> to vector<128x1xf32>
    %99 = tpu.reciprocal %98 {approx = true} : vector<128x1xf32> -> vector<128x1xf32>
    %100 = vector.broadcast %99 : vector<128x1xf32> to vector<128x128xf32>
    %101 = arith.mulf %96, %100 : vector<128x128xf32>
    %102 = arith.truncf %101 : vector<128x128xf32> to vector<128x128xbf16>
    %103 = vector.extract_strided_slice %19 {offsets = [0, 48], sizes = [128, 16], strides = [1, 1]} : vector<128x128xbf16> to vector<128x16xbf16>
    %cst_37 = arith.constant dense<0.000000e+00> : vector<128x16xf32>
    %104 = tpu.matmul %102, %103, %cst_37 {dimension_numbers = #tpu.dot_dimension_numbers<[1], [0], [0], [1], [0, 0, 1, 1], [], []>} : vector<128x128xbf16>, vector<128x16xbf16>, vector<128x16xf32> -> vector<128x16xf32>
    %105 = arith.truncf %104 : vector<128x16xf32> to vector<128x16xbf16>
    %106 = vector.extract_strided_slice %23 {offsets = [48, 0], sizes = [16, 128], strides = [1, 1]} : vector<128x128xbf16> to vector<16x128xbf16>
    %cst_38 = arith.constant dense<0.000000e+00> : vector<128x128xf32>
    %107 = tpu.matmul %105, %106, %cst_38 {dimension_numbers = #tpu.dot_dimension_numbers<[1], [0], [0], [1], [0, 0, 1, 1], [], []>} : vector<128x16xbf16>, vector<16x128xbf16>, vector<128x128xf32> -> vector<128x128xf32>
    %108 = arith.addf %87, %107 : vector<128x128xf32>
    %109 = vector.extract_strided_slice %11 {offsets = [0, 64], sizes = [128, 16], strides = [1, 1]} : vector<128x128xbf16> to vector<128x16xbf16>
    %110 = vector.extract_strided_slice %13 {offsets = [0, 64], sizes = [128, 16], strides = [1, 1]} : vector<128x128xbf16> to vector<128x16xbf16>
    %cst_39 = arith.constant dense<0.000000e+00> : vector<128x128xf32>
    %111 = tpu.matmul %109, %110, %cst_39 {dimension_numbers = #tpu.dot_dimension_numbers<[1], [1], [0], [0], [0, 0, 1, 0], [], []>} : vector<128x16xbf16>, vector<128x16xbf16>, vector<128x128xf32> -> vector<128x128xf32>
    %112 = arith.addf %111, %22 : vector<128x128xf32>
    %cst_40 = arith.constant dense<0xFF800000> : vector<128xf32>
    %113 = vector.multi_reduction <maximumf>, %112, %cst_40 [1] : vector<128x128xf32> to vector<128xf32>
    %114 = vector.shape_cast %113 : vector<128xf32> to vector<128x1xf32>
    %115 = vector.broadcast %114 : vector<128x1xf32> to vector<128x128xf32>
    %116 = arith.subf %112, %115 : vector<128x128xf32>
    %117 = math.exp %116 : vector<128x128xf32>
    %cst_41 = arith.constant dense<0.000000e+00> : vector<128xf32>
    %118 = vector.multi_reduction <add>, %117, %cst_41 [1] : vector<128x128xf32> to vector<128xf32>
    %119 = vector.shape_cast %118 : vector<128xf32> to vector<128x1xf32>
    %120 = tpu.reciprocal %119 {approx = true} : vector<128x1xf32> -> vector<128x1xf32>
    %121 = vector.broadcast %120 : vector<128x1xf32> to vector<128x128xf32>
    %122 = arith.mulf %117, %121 : vector<128x128xf32>
    %123 = arith.truncf %122 : vector<128x128xf32> to vector<128x128xbf16>
    %124 = vector.extract_strided_slice %19 {offsets = [0, 64], sizes = [128, 16], strides = [1, 1]} : vector<128x128xbf16> to vector<128x16xbf16>
    %cst_42 = arith.constant dense<0.000000e+00> : vector<128x16xf32>
    %125 = tpu.matmul %123, %124, %cst_42 {dimension_numbers = #tpu.dot_dimension_numbers<[1], [0], [0], [1], [0, 0, 1, 1], [], []>} : vector<128x128xbf16>, vector<128x16xbf16>, vector<128x16xf32> -> vector<128x16xf32>
    %126 = arith.truncf %125 : vector<128x16xf32> to vector<128x16xbf16>
    %127 = vector.extract_strided_slice %23 {offsets = [64, 0], sizes = [16, 128], strides = [1, 1]} : vector<128x128xbf16> to vector<16x128xbf16>
    %cst_43 = arith.constant dense<0.000000e+00> : vector<128x128xf32>
    %128 = tpu.matmul %126, %127, %cst_43 {dimension_numbers = #tpu.dot_dimension_numbers<[1], [0], [0], [1], [0, 0, 1, 1], [], []>} : vector<128x16xbf16>, vector<16x128xbf16>, vector<128x128xf32> -> vector<128x128xf32>
    %129 = arith.addf %108, %128 : vector<128x128xf32>
    %130 = vector.extract_strided_slice %11 {offsets = [0, 80], sizes = [128, 16], strides = [1, 1]} : vector<128x128xbf16> to vector<128x16xbf16>
    %131 = vector.extract_strided_slice %13 {offsets = [0, 80], sizes = [128, 16], strides = [1, 1]} : vector<128x128xbf16> to vector<128x16xbf16>
    %cst_44 = arith.constant dense<0.000000e+00> : vector<128x128xf32>
    %132 = tpu.matmul %130, %131, %cst_44 {dimension_numbers = #tpu.dot_dimension_numbers<[1], [1], [0], [0], [0, 0, 1, 0], [], []>} : vector<128x16xbf16>, vector<128x16xbf16>, vector<128x128xf32> -> vector<128x128xf32>
    %133 = arith.addf %132, %22 : vector<128x128xf32>
    %cst_45 = arith.constant dense<0xFF800000> : vector<128xf32>
    %134 = vector.multi_reduction <maximumf>, %133, %cst_45 [1] : vector<128x128xf32> to vector<128xf32>
    %135 = vector.shape_cast %134 : vector<128xf32> to vector<128x1xf32>
    %136 = vector.broadcast %135 : vector<128x1xf32> to vector<128x128xf32>
    %137 = arith.subf %133, %136 : vector<128x128xf32>
    %138 = math.exp %137 : vector<128x128xf32>
    %cst_46 = arith.constant dense<0.000000e+00> : vector<128xf32>
    %139 = vector.multi_reduction <add>, %138, %cst_46 [1] : vector<128x128xf32> to vector<128xf32>
    %140 = vector.shape_cast %139 : vector<128xf32> to vector<128x1xf32>
    %141 = tpu.reciprocal %140 {approx = true} : vector<128x1xf32> -> vector<128x1xf32>
    %142 = vector.broadcast %141 : vector<128x1xf32> to vector<128x128xf32>
    %143 = arith.mulf %138, %142 : vector<128x128xf32>
    %144 = arith.truncf %143 : vector<128x128xf32> to vector<128x128xbf16>
    %145 = vector.extract_strided_slice %19 {offsets = [0, 80], sizes = [128, 16], strides = [1, 1]} : vector<128x128xbf16> to vector<128x16xbf16>
    %cst_47 = arith.constant dense<0.000000e+00> : vector<128x16xf32>
    %146 = tpu.matmul %144, %145, %cst_47 {dimension_numbers = #tpu.dot_dimension_numbers<[1], [0], [0], [1], [0, 0, 1, 1], [], []>} : vector<128x128xbf16>, vector<128x16xbf16>, vector<128x16xf32> -> vector<128x16xf32>
    %147 = arith.truncf %146 : vector<128x16xf32> to vector<128x16xbf16>
    %148 = vector.extract_strided_slice %23 {offsets = [80, 0], sizes = [16, 128], strides = [1, 1]} : vector<128x128xbf16> to vector<16x128xbf16>
    %cst_48 = arith.constant dense<0.000000e+00> : vector<128x128xf32>
    %149 = tpu.matmul %147, %148, %cst_48 {dimension_numbers = #tpu.dot_dimension_numbers<[1], [0], [0], [1], [0, 0, 1, 1], [], []>} : vector<128x16xbf16>, vector<16x128xbf16>, vector<128x128xf32> -> vector<128x128xf32>
    %150 = arith.addf %129, %149 : vector<128x128xf32>
    %151 = vector.extract_strided_slice %11 {offsets = [0, 96], sizes = [128, 16], strides = [1, 1]} : vector<128x128xbf16> to vector<128x16xbf16>
    %152 = vector.extract_strided_slice %13 {offsets = [0, 96], sizes = [128, 16], strides = [1, 1]} : vector<128x128xbf16> to vector<128x16xbf16>
    %cst_49 = arith.constant dense<0.000000e+00> : vector<128x128xf32>
    %153 = tpu.matmul %151, %152, %cst_49 {dimension_numbers = #tpu.dot_dimension_numbers<[1], [1], [0], [0], [0, 0, 1, 0], [], []>} : vector<128x16xbf16>, vector<128x16xbf16>, vector<128x128xf32> -> vector<128x128xf32>
    %154 = arith.addf %153, %22 : vector<128x128xf32>
    %cst_50 = arith.constant dense<0xFF800000> : vector<128xf32>
    %155 = vector.multi_reduction <maximumf>, %154, %cst_50 [1] : vector<128x128xf32> to vector<128xf32>
    %156 = vector.shape_cast %155 : vector<128xf32> to vector<128x1xf32>
    %157 = vector.broadcast %156 : vector<128x1xf32> to vector<128x128xf32>
    %158 = arith.subf %154, %157 : vector<128x128xf32>
    %159 = math.exp %158 : vector<128x128xf32>
    %cst_51 = arith.constant dense<0.000000e+00> : vector<128xf32>
    %160 = vector.multi_reduction <add>, %159, %cst_51 [1] : vector<128x128xf32> to vector<128xf32>
    %161 = vector.shape_cast %160 : vector<128xf32> to vector<128x1xf32>
    %162 = tpu.reciprocal %161 {approx = true} : vector<128x1xf32> -> vector<128x1xf32>
    %163 = vector.broadcast %162 : vector<128x1xf32> to vector<128x128xf32>
    %164 = arith.mulf %159, %163 : vector<128x128xf32>
    %165 = arith.truncf %164 : vector<128x128xf32> to vector<128x128xbf16>
    %166 = vector.extract_strided_slice %19 {offsets = [0, 96], sizes = [128, 16], strides = [1, 1]} : vector<128x128xbf16> to vector<128x16xbf16>
    %cst_52 = arith.constant dense<0.000000e+00> : vector<128x16xf32>
    %167 = tpu.matmul %165, %166, %cst_52 {dimension_numbers = #tpu.dot_dimension_numbers<[1], [0], [0], [1], [0, 0, 1, 1], [], []>} : vector<128x128xbf16>, vector<128x16xbf16>, vector<128x16xf32> -> vector<128x16xf32>
    %168 = arith.truncf %167 : vector<128x16xf32> to vector<128x16xbf16>
    %169 = vector.extract_strided_slice %23 {offsets = [96, 0], sizes = [16, 128], strides = [1, 1]} : vector<128x128xbf16> to vector<16x128xbf16>
    %cst_53 = arith.constant dense<0.000000e+00> : vector<128x128xf32>
    %170 = tpu.matmul %168, %169, %cst_53 {dimension_numbers = #tpu.dot_dimension_numbers<[1], [0], [0], [1], [0, 0, 1, 1], [], []>} : vector<128x16xbf16>, vector<16x128xbf16>, vector<128x128xf32> -> vector<128x128xf32>
    %171 = arith.addf %150, %170 : vector<128x128xf32>
    %172 = vector.extract_strided_slice %11 {offsets = [0, 112], sizes = [128, 16], strides = [1, 1]} : vector<128x128xbf16> to vector<128x16xbf16>
    %173 = vector.extract_strided_slice %13 {offsets = [0, 112], sizes = [128, 16], strides = [1, 1]} : vector<128x128xbf16> to vector<128x16xbf16>
    %cst_54 = arith.constant dense<0.000000e+00> : vector<128x128xf32>
    %174 = tpu.matmul %172, %173, %cst_54 {dimension_numbers = #tpu.dot_dimension_numbers<[1], [1], [0], [0], [0, 0, 1, 0], [], []>} : vector<128x16xbf16>, vector<128x16xbf16>, vector<128x128xf32> -> vector<128x128xf32>
    %175 = arith.addf %174, %22 : vector<128x128xf32>
    %cst_55 = arith.constant dense<0xFF800000> : vector<128xf32>
    %176 = vector.multi_reduction <maximumf>, %175, %cst_55 [1] : vector<128x128xf32> to vector<128xf32>
    %177 = vector.shape_cast %176 : vector<128xf32> to vector<128x1xf32>
    %178 = vector.broadcast %177 : vector<128x1xf32> to vector<128x128xf32>
    %179 = arith.subf %175, %178 : vector<128x128xf32>
    %180 = math.exp %179 : vector<128x128xf32>
    %cst_56 = arith.constant dense<0.000000e+00> : vector<128xf32>
    %181 = vector.multi_reduction <add>, %180, %cst_56 [1] : vector<128x128xf32> to vector<128xf32>
    %182 = vector.shape_cast %181 : vector<128xf32> to vector<128x1xf32>
    %183 = tpu.reciprocal %182 {approx = true} : vector<128x1xf32> -> vector<128x1xf32>
    %184 = vector.broadcast %183 : vector<128x1xf32> to vector<128x128xf32>
    %185 = arith.mulf %180, %184 : vector<128x128xf32>
    %186 = arith.truncf %185 : vector<128x128xf32> to vector<128x128xbf16>
    %187 = vector.extract_strided_slice %19 {offsets = [0, 112], sizes = [128, 16], strides = [1, 1]} : vector<128x128xbf16> to vector<128x16xbf16>
    %cst_57 = arith.constant dense<0.000000e+00> : vector<128x16xf32>
    %188 = tpu.matmul %186, %187, %cst_57 {dimension_numbers = #tpu.dot_dimension_numbers<[1], [0], [0], [1], [0, 0, 1, 1], [], []>} : vector<128x128xbf16>, vector<128x16xbf16>, vector<128x16xf32> -> vector<128x16xf32>
    %189 = arith.truncf %188 : vector<128x16xf32> to vector<128x16xbf16>
    %190 = vector.extract_strided_slice %23 {offsets = [112, 0], sizes = [16, 128], strides = [1, 1]} : vector<128x128xbf16> to vector<16x128xbf16>
    %cst_58 = arith.constant dense<0.000000e+00> : vector<128x128xf32>
    %191 = tpu.matmul %189, %190, %cst_58 {dimension_numbers = #tpu.dot_dimension_numbers<[1], [0], [0], [1], [0, 0, 1, 1], [], []>} : vector<128x16xbf16>, vector<16x128xbf16>, vector<128x128xf32> -> vector<128x128xf32>
    %192 = arith.addf %171, %191 : vector<128x128xf32>
    %c0_59 = arith.constant 0 : index
    %c0_60 = arith.constant 0 : index
    %193 = vector.load %arg9[%c0_59, %c0_60] : memref<1x128xf32, #tpu.memory_space<vmem>>, vector<1x128xf32>
    %194 = vector.broadcast %193 : vector<1x128xf32> to vector<128x128xf32>
    %195 = arith.addf %192, %194 : vector<128x128xf32>
    %c0_61 = arith.constant 0 : index
    %c0_62 = arith.constant 0 : index
    %196 = vector.load %arg10[%c0_61, %c0_62] : memref<128x128xf32, #tpu.memory_space<vmem>>, vector<128x128xf32>
    tpu.vector_store %arg10[%c0_61, %c0_62], %195 {strides = array<i32>} : memref<128x128xf32, #tpu.memory_space<vmem>>, vector<128x128xf32>,
    return
  }
  func.func @transform_0(%arg0: i32) -> (i32, i32) {
    %c0_i32 = arith.constant 0 : i32
    %c0_i32_0 = arith.constant 0 : i32
    return %arg0, %c0_i32 : i32, i32
  }
  func.func @transform_1(%arg0: i32) -> (i32, i32) {
    %c0_i32 = arith.constant 0 : i32
    %c0_i32_0 = arith.constant 0 : i32
    return %arg0, %c0_i32 : i32, i32
  }
  func.func @transform_2(%arg0: i32) -> (i32, i32, i32) {
    %c0_i32 = arith.constant 0 : i32
    %c0_i32_0 = arith.constant 0 : i32
    %c0_i32_1 = arith.constant 0 : i32
    return %arg0, %c0_i32, %c0_i32_0 : i32, i32, i32
  }
  func.func @transform_3(%arg0: i32) -> (i32, i32) {
    %c0_i32 = arith.constant 0 : i32
    %c0_i32_0 = arith.constant 0 : i32
    %c0_i32_1 = arith.constant 0 : i32
    return %c0_i32, %c0_i32_0 : i32, i32
  }
  func.func @transform_4(%arg0: i32) -> (i32, i32) {
    %c0_i32 = arith.constant 0 : i32
    %c0_i32_0 = arith.constant 0 : i32
    %c0_i32_1 = arith.constant 0 : i32
    return %c0_i32, %c0_i32_0 : i32, i32
  }
  func.func @transform_5(%arg0: i32) -> (i32, i32) {
    %c0_i32 = arith.constant 0 : i32
    %c0_i32_0 = arith.constant 0 : i32
    %c0_i32_1 = arith.constant 0 : i32
    return %c0_i32, %c0_i32_0 : i32, i32
  }
  func.func @transform_6(%arg0: i32) -> (i32, i32) {
    %c0_i32 = arith.constant 0 : i32
    %c0_i32_0 = arith.constant 0 : i32
    %c0_i32_1 = arith.constant 0 : i32
    return %c0_i32, %c0_i32_0 : i32, i32
  }
  func.func @transform_7(%arg0: i32) -> (i32, i32) {
    %c0_i32 = arith.constant 0 : i32
    %c0_i32_0 = arith.constant 0 : i32
    %c0_i32_1 = arith.constant 0 : i32
    return %c0_i32, %c0_i32_0 : i32, i32
  }
  func.func @transform_8(%arg0: i32) -> (i32, i32) {
    %c0_i32 = arith.constant 0 : i32
    %c0_i32_0 = arith.constant 0 : i32
    %c0_i32_1 = arith.constant 0 : i32
    return %c0_i32, %c0_i32_0 : i32, i32
  }
  func.func @transform_9(%arg0: i32) -> (i32, i32) {
    %c0_i32 = arith.constant 0 : i32
    %c0_i32_0 = arith.constant 0 : i32
    return %arg0, %c0_i32 : i32, i32
  }
}

</mosaic_0001>

<llo_original>
// kernel: window_attention_pallas.1
$region0: #{window_attention_pallas.1}
  #allocation0 [shape = 'u32[]', space=smem, size = 0x4, offset = 0x4, fixed_abs, tag = 'smem constant byte address 0x4 - core index']
  #allocation1 [shape = 'u32[144,128]{1,0:T(1,128)}', space=vmem, size = 0x12000, scoped, tag = 'internal scratch']
  %s0 = inlined_call_operand.vmem [shape: bf16[384,128], index: 0, kind: input, shape index: {}]
  %s1 = inlined_call_operand.vmem [shape: bf16[384,128], index: 1, kind: input, shape index: {}]
  %s2 = inlined_call_operand.vmem [shape: bf16[3,128,128], index: 2, kind: input, shape index: {}]
  %s3 = inlined_call_operand.vmem [shape: bf16[128,256], index: 3, kind: input, shape index: {}]
  %s4 = inlined_call_operand.vmem [shape: bf16[128,128], index: 4, kind: input, shape index: {}]
  %s5 = inlined_call_operand.vmem [shape: bf16[128,128], index: 5, kind: input, shape index: {}]
  %s6 = inlined_call_operand.vmem [shape: f32[1,256], index: 6, kind: input, shape index: {}]
  %s7 = inlined_call_operand.vmem [shape: f32[1,128], index: 7, kind: input, shape index: {}]
  %s8 = inlined_call_operand.vmem [shape: f32[1,128], index: 8, kind: input, shape index: {}]
  %s9 = inlined_call_operand.vmem [shape: f32[384,128], index: 9, kind: output, shape index: {}]
  %s10 = sld [smem:[#allocation0]]
  $region69: #{window_attention_pallas.1} parent=0
    _
  %s12 = ssub.s32 1, %s10
  %s13 = scalar_select 0, %s12, %s10
  loop: start=0, step=1, limit=5
  $region2: #{window_attention_pallas.1} parent=0 // loop_pre_header
    _
  $region3: #{window_attention_pallas.1} parent=0 // loop_header
    %s15 = sphi 0, %s19
    %p16 = scmp.ge.s32.totalorder %s15, 5
    %s25 = sphi 0, %s27
    %s28 = sphi 0, %s25
    %s29 = sphi 0, %s28
    %s45 = sphi 0, %s29
    %s51 = sphi 0, %s53
    %s54 = sphi 0, %s51
    %s55 = sphi 0, %s54
    %s71 = sphi 0, %s55
    %s77 = sphi 0, %s79
    %s80 = sphi 0, %s77
    %s81 = sphi 0, %s80
    %s97 = sphi 0, %s81
    %s101 = sphi 0, %s101
    %s103 = sphi 0, %s101
    %s104 = sphi 0, %s103
    %s118 = sphi 0, %s104
    %s122 = sphi 0, %s122
    %s124 = sphi 0, %s122
    %s125 = sphi 0, %s124
    %s139 = sphi 0, %s125
    %s143 = sphi 0, %s143
    %s145 = sphi 0, %s143
    %s146 = sphi 0, %s145
    %s160 = sphi 0, %s146
    %s164 = sphi 0, %s164
    %s166 = sphi 0, %s164
    %s167 = sphi 0, %s166
    %s181 = sphi 0, %s167
    %s185 = sphi 0, %s185
    %s187 = sphi 0, %s185
    %s188 = sphi 0, %s187
    %s202 = sphi 0, %s188
    %s206 = sphi 0, %s206
    %s208 = sphi 0, %s206
    %s209 = sphi 0, %s208
    %s223 = sphi 0, %s209
    %s229 = sphi 0, %s231
    %s232 = sphi 0, %s229
    %s233 = sphi 0, %s232
    %s249 = sphi 0, %s233
  $region4: #{window_attention_pallas.1} parent=0 // loop_header_branch
    %18 = sbr.rel (%p16) target = $region8
  $region5: #{window_attention_pallas.1} parent=0 // loop_body
    %s20 = ssub.s32 %s15, 1
    %s21 = ssub.s32 %s15, 2
    %s22 = sadd.s32 %s15, 1
    %s23 = ssub.s32 %s15, %s22
    %p24 = scmp.eq.s32.totalorder %s23, 0
    %s26 = sadd.s32 %s25, 1
    %s27 = scalar_select %p24, %s25, %s26
    %p30 = pneg %p24
    %p31 = scmp.eq.s32.totalorder %s15, 2
    %p32 = por %p30, %p31
    %p33 = scmp.ne.s32.totalorder %s25, %s28
    %p34 = scmp.eq.s32.totalorder %s15, 0
    %p35 = por %p33, %p34
    %p36 = scmp.ne.s32.totalorder %s25, %s28
    %p37 = scmp.eq.s32.totalorder %s20, 2
    %p38 = por %p36, %p37
    %p39 = scmp.ne.s32.totalorder %s28, %s29
    %p40 = scmp.eq.s32.totalorder %s20, 0
    %p41 = por %p39, %p40
    %p42 = scmp.ne.s32.totalorder %s28, %s29
    %p43 = scmp.eq.s32.totalorder %s21, 2
    %p44 = por %p42, %p43
    %p46 = scmp.ne.s32.totalorder %s29, %s45
    %p47 = scmp.eq.s32.totalorder %s21, 0
    %p48 = por %p46, %p47
    %s49 = ssub.s32 %s15, %s22
    %p50 = scmp.eq.s32.totalorder %s49, 0
    %s52 = sadd.s32 %s51, 1
    %s53 = scalar_select %p50, %s51, %s52
    %p56 = pneg %p50
    %p57 = scmp.eq.s32.totalorder %s15, 2
    %p58 = por %p56, %p57
    %p59 = scmp.ne.s32.totalorder %s51, %s54
    %p60 = scmp.eq.s32.totalorder %s15, 0
    %p61 = por %p59, %p60
    %p62 = scmp.ne.s32.totalorder %s51, %s54
    %p63 = scmp.eq.s32.totalorder %s20, 2
    %p64 = por %p62, %p63
    %p65 = scmp.ne.s32.totalorder %s54, %s55
    %p66 = scmp.eq.s32.totalorder %s20, 0
    %p67 = por %p65, %p66
    %p68 = scmp.ne.s32.totalorder %s54, %s55
    %p69 = scmp.eq.s32.totalorder %s21, 2
    %p70 = por %p68, %p69
    %p72 = scmp.ne.s32.totalorder %s55, %s71
    %p73 = scmp.eq.s32.totalorder %s21, 0
    %p74 = por %p72, %p73
    %s75 = ssub.s32 %s15, %s22
    %p76 = scmp.eq.s32.totalorder %s75, 0
    %s78 = sadd.s32 %s77, 1
    %s79 = scalar_select %p76, %s77, %s78
    %p82 = pneg %p76
    %p83 = scmp.eq.s32.totalorder %s15, 2
    %p84 = por %p82, %p83
    %p85 = scmp.ne.s32.totalorder %s77, %s80
    %p86 = scmp.eq.s32.totalorder %s15, 0
    %p87 = por %p85, %p86
    %p88 = scmp.ne.s32.totalorder %s77, %s80
    %p89 = scmp.eq.s32.totalorder %s20, 2
    %p90 = por %p88, %p89
    %p91 = scmp.ne.s32.totalorder %s80, %s81
    %p92 = scmp.eq.s32.totalorder %s20, 0
    %p93 = por %p91, %p92
    %p94 = scmp.ne.s32.totalorder %s80, %s81
    %p95 = scmp.eq.s32.totalorder %s21, 2
    %p96 = por %p94, %p95
    %p98 = scmp.ne.s32.totalorder %s81, %s97
    %p99 = scmp.eq.s32.totalorder %s21, 0
    %p100 = por %p98, %p99
    %s102 = sadd.s32 %s101, 1
    %p105 = scmp.eq.s32.totalorder %s15, 2
    %p106 = scmp.ne.s32.totalorder %s101, %s103
    %p107 = scmp.eq.s32.totalorder %s15, 0
    %p108 = por %p106, %p107
    %p109 = scmp.ne.s32.totalorder %s101, %s103
    %p110 = scmp.eq.s32.totalorder %s20, 2
    %p111 = por %p109, %p110
    %p112 = scmp.ne.s32.totalorder %s103, %s104
    %p113 = scmp.eq.s32.totalorder %s20, 0
    %p114 = por %p112, %p113
    %p115 = scmp.ne.s32.totalorder %s103, %s104
    %p116 = scmp.eq.s32.totalorder %s21, 2
    %p117 = por %p115, %p116
    %p119 = scmp.ne.s32.totalorder %s104, %s118
    %p120 = scmp.eq.s32.totalorder %s21, 0
    %p121 = por %p119, %p120
    %s123 = sadd.s32 %s122, 1
    %p126 = scmp.eq.s32.totalorder %s15, 2
    %p127 = scmp.ne.s32.totalorder %s122, %s124
    %p128 = scmp.eq.s32.totalorder %s15, 0
    %p129 = por %p127, %p128
    %p130 = scmp.ne.s32.totalorder %s122, %s124
    %p131 = scmp.eq.s32.totalorder %s20, 2
    %p132 = por %p130, %p131
    %p133 = scmp.ne.s32.totalorder %s124, %s125
    %p134 = scmp.eq.s32.totalorder %s20, 0
    %p135 = por %p133, %p134
    %p136 = scmp.ne.s32.totalorder %s124, %s125
    %p137 = scmp.eq.s32.totalorder %s21, 2
    %p138 = por %p136, %p137
    %p140 = scmp.ne.s32.totalorder %s125, %s139
    %p141 = scmp.eq.s32.totalorder %s21, 0
    %p142 = por %p140, %p141
    %s144 = sadd.s32 %s143, 1
    %p147 = scmp.eq.s32.totalorder %s15, 2
    %p148 = scmp.ne.s32.totalorder %s143, %s145
    %p149 = scmp.eq.s32.totalorder %s15, 0
    %p150 = por %p148, %p149
    %p151 = scmp.ne.s32.totalorder %s143, %s145
    %p152 = scmp.eq.s32.totalorder %s20, 2
    %p153 = por %p151, %p152
    %p154 = scmp.ne.s32.totalorder %s145, %s146
    %p155 = scmp.eq.s32.totalorder %s20, 0
    %p156 = por %p154, %p155
    %p157 = scmp.ne.s32.totalorder %s145, %s146
    %p158 = scmp.eq.s32.totalorder %s21, 2
    %p159 = por %p157, %p158
    %p161 = scmp.ne.s32.totalorder %s146, %s160
    %p162 = scmp.eq.s32.totalorder %s21, 0
    %p163 = por %p161, %p162
    %s165 = sadd.s32 %s164, 1
    %p168 = scmp.eq.s32.totalorder %s15, 2
    %p169 = scmp.ne.s32.totalorder %s164, %s166
    %p170 = scmp.eq.s32.totalorder %s15, 0
    %p171 = por %p169, %p170
    %p172 = scmp.ne.s32.totalorder %s164, %s166
    %p173 = scmp.eq.s32.totalorder %s20, 2
    %p174 = por %p172, %p173
    %p175 = scmp.ne.s32.totalorder %s166, %s167
    %p176 = scmp.eq.s32.totalorder %s20, 0
    %p177 = por %p175, %p176
    %p178 = scmp.ne.s32.totalorder %s166, %s167
    %p179 = scmp.eq.s32.totalorder %s21, 2
    %p180 = por %p178, %p179
    %p182 = scmp.ne.s32.totalorder %s167, %s181
    %p183 = scmp.eq.s32.totalorder %s21, 0
    %p184 = por %p182, %p183
    %s186 = sadd.s32 %s185, 1
    %p189 = scmp.eq.s32.totalorder %s15, 2
    %p190 = scmp.ne.s32.totalorder %s185, %s187
    %p191 = scmp.eq.s32.totalorder %s15, 0
    %p192 = por %p190, %p191
    %p193 = scmp.ne.s32.totalorder %s185, %s187
    %p194 = scmp.eq.s32.totalorder %s20, 2
    %p195 = por %p193, %p194
    %p196 = scmp.ne.s32.totalorder %s187, %s188
    %p197 = scmp.eq.s32.totalorder %s20, 0
    %p198 = por %p196, %p197
    %p199 = scmp.ne.s32.totalorder %s187, %s188
    %p200 = scmp.eq.s32.totalorder %s21, 2
    %p201 = por %p199, %p200
    %p203 = scmp.ne.s32.totalorder %s188, %s202
    %p204 = scmp.eq.s32.totalorder %s21, 0
    %p205 = por %p203, %p204
    %s207 = sadd.s32 %s206, 1
    %p210 = scmp.eq.s32.totalorder %s15, 2
    %p211 = scmp.ne.s32.totalorder %s206, %s208
    %p212 = scmp.eq.s32.totalorder %s15, 0
    %p213 = por %p211, %p212
    %p214 = scmp.ne.s32.totalorder %s206, %s208
    %p215 = scmp.eq.s32.totalorder %s20, 2
    %p216 = por %p214, %p215
    %p217 = scmp.ne.s32.totalorder %s208, %s209
    %p218 = scmp.eq.s32.totalorder %s20, 0
    %p219 = por %p217, %p218
    %p220 = scmp.ne.s32.totalorder %s208, %s209
    %p221 = scmp.eq.s32.totalorder %s21, 2
    %p222 = por %p220, %p221
    %p224 = scmp.ne.s32.totalorder %s209, %s223
    %p225 = scmp.eq.s32.totalorder %s21, 0
    %p226 = por %p224, %p225
    %s227 = ssub.s32 %s15, %s22
    %p228 = scmp.eq.s32.totalorder %s227, 0
    %s230 = sadd.s32 %s229, 1
    %s231 = scalar_select %p228, %s229, %s230
    %p234 = pneg %p228
    %p235 = scmp.eq.s32.totalorder %s15, 2
    %p236 = por %p234, %p235
    %p237 = scmp.ne.s32.totalorder %s229, %s232
    %p238 = scmp.eq.s32.totalorder %s15, 0
    %p239 = por %p237, %p238
    %p240 = scmp.ne.s32.totalorder %s229, %s232
    %p241 = scmp.eq.s32.totalorder %s20, 2
    %p242 = por %p240, %p241
    %p243 = scmp.ne.s32.totalorder %s232, %s233
    %p244 = scmp.eq.s32.totalorder %s20, 0
    %p245 = por %p243, %p244
    %p246 = scmp.ne.s32.totalorder %s232, %s233
    %p247 = scmp.eq.s32.totalorder %s21, 2
    %p248 = por %p246, %p247
    %p250 = scmp.ne.s32.totalorder %s233, %s249
    %p251 = scmp.eq.s32.totalorder %s21, 0
    %p252 = por %p250, %p251
    %p253 = scmp.le.s32.totalorder 1, %s15
    %p254 = scmp.lt.s32.totalorder %s15, 4
    %p255 = pnand %p253, %p254
    %p256 = pneg %p255
    // Predicated region
    $region9: #{window_attention_pallas.1} parent=5 // pred_check
      _
    $region10: #{window_attention_pallas.1} parent=5 // pred_check_branch
      %258 = sbr.rel (%p255) target = $region12
    $region11: #{window_attention_pallas.1} parent=5 // pred_region
      %s259 = ssub.s32 %s15, 1
      // Predicated region
      $region13: #{window_attention_pallas.1} parent=11 // pred_check
        %p260 = pneg %p114
      $region14: #{window_attention_pallas.1} parent=11 // pred_check_branch
        %262 = sbr.rel (%p260) target = $region16
      $region15: #{window_attention_pallas.1} parent=11 // pred_region
        _
      $region16: #{window_attention_pallas.1} parent=11 // pred_fallthru
        _
      // Predicated region
      $region17: #{window_attention_pallas.1} parent=11 // pred_check
        %p263 = pneg %p135
      $region18: #{window_attention_pallas.1} parent=11 // pred_check_branch
        %265 = sbr.rel (%p263) target = $region20
      $region19: #{window_attention_pallas.1} parent=11 // pred_region
        _
      $region20: #{window_attention_pallas.1} parent=11 // pred_fallthru
        _
      // Predicated region
      $region21: #{window_attention_pallas.1} parent=11 // pred_check
        %p266 = pneg %p156
      $region22: #{window_attention_pallas.1} parent=11 // pred_check_branch
        %268 = sbr.rel (%p266) target = $region24
      $region23: #{window_attention_pallas.1} parent=11 // pred_region
        _
      $region24: #{window_attention_pallas.1} parent=11 // pred_fallthru
        _
      // Predicated region
      $region25: #{window_attention_pallas.1} parent=11 // pred_check
        %p269 = pneg %p177
      $region26: #{window_attention_pallas.1} parent=11 // pred_check_branch
        %271 = sbr.rel (%p269) target = $region28
      $region27: #{window_attention_pallas.1} parent=11 // pred_region
        _
      $region28: #{window_attention_pallas.1} parent=11 // pred_fallthru
        _
      // Predicated region
      $region29: #{window_attention_pallas.1} parent=11 // pred_check
        %p272 = pneg %p198
      $region30: #{window_attention_pallas.1} parent=11 // pred_check_branch
        %274 = sbr.rel (%p272) target = $region32
      $region31: #{window_attention_pallas.1} parent=11 // pred_region
        _
      $region32: #{window_attention_pallas.1} parent=11 // pred_fallthru
        _
      // Predicated region
      $region33: #{window_attention_pallas.1} parent=11 // pred_check
        %p275 = pneg %p219
      $region34: #{window_attention_pallas.1} parent=11 // pred_check_branch
        %277 = sbr.rel (%p275) target = $region36
      $region35: #{window_attention_pallas.1} parent=11 // pred_region
        _
      $region36: #{window_attention_pallas.1} parent=11 // pred_fallthru
        _
    $region12: #{window_attention_pallas.1} parent=5 // pred_fallthru
      _
    %p278 = scmp.lt.s32.totalorder %s15, 3
    // Predicated region
    $region37: #{window_attention_pallas.1} parent=5 // pred_check
      %p279 = pneg %p278
    $region38: #{window_attention_pallas.1} parent=5 // pred_check_branch
      %281 = sbr.rel (%p279) target = $region40
    $region39: #{window_attention_pallas.1} parent=5 // pred_region
      // Predicated region
      $region41: #{window_attention_pallas.1} parent=39 // pred_check
        %p282 = pneg %p35
      $region42: #{window_attention_pallas.1} parent=39 // pred_check_branch
        %284 = sbr.rel (%p282) target = $region44
      $region43: #{window_attention_pallas.1} parent=39 // pred_region
        %s285 = smul.u32 16, %s15
        %p286 = scmp.lt.s32.totalorder %s285, 47
        %s287 = scalar_select %p286, %s285, 47
        %s288 = smul.addr %s287, 4
        %s289 = scalar_lea.vmem %s0, %s288
        %s290 = smul.u32 16, %s15
      $region44: #{window_attention_pallas.1} parent=39 // pred_fallthru
        _
      // Predicated region
      $region45: #{window_attention_pallas.1} parent=39 // pred_check
        %p291 = pneg %p61
      $region46: #{window_attention_pallas.1} parent=39 // pred_check_branch
        %293 = sbr.rel (%p291) target = $region48
      $region47: #{window_attention_pallas.1} parent=39 // pred_region
        %s294 = smul.u32 16, %s15
        %p295 = scmp.lt.s32.totalorder %s294, 47
        %s296 = scalar_select %p295, %s294, 47
        %s297 = smul.addr %s296, 4
        %s298 = scalar_lea.vmem %s1, %s297
        %s299 = smul.u32 16, %s15
      $region48: #{window_attention_pallas.1} parent=39 // pred_fallthru
        _
      // Predicated region
      $region49: #{window_attention_pallas.1} parent=39 // pred_check
        %p300 = pneg %p87
      $region50: #{window_attention_pallas.1} parent=39 // pred_check_branch
        %302 = sbr.rel (%p300) target = $region52
      $region51: #{window_attention_pallas.1} parent=39 // pred_region
        %p303 = scmp.lt.s32.totalorder %s15, 2
        %s304 = scalar_select %p303, %s15, 2
        %s305 = smul.addr %s304, 16
        %s306 = smul.addr %s305, 4
        %s307 = scalar_lea.vmem %s2, %s306
      $region52: #{window_attention_pallas.1} parent=39 // pred_fallthru
        _
    $region40: #{window_attention_pallas.1} parent=5 // pred_fallthru
      _
    %p308 = scmp.le.s32.totalorder 1, %s15
    %p309 = scmp.lt.s32.totalorder %s15, 4
    %p310 = pnand %p308, %p309
    %p311 = pneg %p310
    // Predicated region
    $region53: #{window_attention_pallas.1} parent=5 // pred_check
      _
    $region54: #{window_attention_pallas.1} parent=5 // pred_check_branch
      %313 = sbr.rel (%p310) target = $region56
    $region55: #{window_attention_pallas.1} parent=5 // pred_region
      %s314 = ssub.s32 %s15, 1
      %s315 = smul.u32 16, %s20
      %p316 = scmp.lt.s32.totalorder %s315, 47
      %s317 = scalar_select %p316, %s315, 47
      %s318 = smul.addr %s317, 4
      %s319 = scalar_lea.vmem %s0, %s318
      %p320 = pneg %p41
      %p321 = pneg %p38
      %s322 = smul.u32 16, %s20
      %p323 = scmp.lt.s32.totalorder %s322, 47
      %s324 = scalar_select %p323, %s322, 47
      %s325 = smul.addr %s324, 4
      %s326 = scalar_lea.vmem %s1, %s325
      %p327 = pneg %p67
      %p328 = pneg %p64
      %p329 = scmp.lt.s32.totalorder %s20, 2
      %s330 = scalar_select %p329, %s20, 2
      %s331 = smul.addr %s330, 16
      %s332 = smul.addr %s331, 4
      %s333 = scalar_lea.vmem %s2, %s332
      %p334 = pneg %p93
      %p335 = pneg %p90
      %p336 = pneg %p114
      %p337 = pneg %p111
      %p338 = pneg %p135
      %p339 = pneg %p132
      %p340 = pneg %p156
      %p341 = pneg %p153
      %p342 = pneg %p177
      %p343 = pneg %p174
      %p344 = pneg %p198
      %p345 = pneg %p195
      %p346 = pneg %p219
      %p347 = pneg %p216
      %p348 = pneg %p245
      %p349 = pneg %p242
      %s350 = smul.u32 16, %s20
      %p351 = scmp.lt.s32.totalorder %s350, 47
      %s352 = scalar_select %p351, %s350, 47
      %s353 = smul.addr %s352, 8
      %s354 = scalar_lea.vmem %s9, %s353
      %s355 = smul.u32 16, %s20
      %p356 = scmp.lt.s32.totalorder %s355, 47
      %s357 = scalar_select %p356, %s355, 47
      %s358 = smul.addr %s357, 4
      %s359 = scalar_lea.vmem %s0, %s358
      %s360 = smul.u32 16, %s20
      %s361 = smul.u32 16, %s20
      %p362 = scmp.lt.s32.totalorder %s361, 47
      %s363 = scalar_select %p362, %s361, 47
      %s364 = smul.addr %s363, 4
      %s365 = scalar_lea.vmem %s1, %s364
      %s366 = smul.u32 16, %s20
      %p367 = scmp.lt.s32.totalorder %s20, 2
      %s368 = scalar_select %p367, %s20, 2
      %s369 = smul.addr %s368, 16
      %s370 = smul.addr %s369, 4
      %s371 = scalar_lea.vmem %s2, %s370
      %s372 = smul.u32 16, %s20
      %p373 = scmp.lt.s32.totalorder %s372, 47
      %s374 = scalar_select %p373, %s372, 47
      %s375 = smul.addr %s374, 8
      %s376 = scalar_lea.vmem %s9, %s375
      %s377 = smul.u32 16, %s20
      %v379 = vld [vmem:[%s359] sm:$0xf]
      %v380 = vld [vmem:[%s359 + $0x4] sm:$0xf]
      %v381 = vld [vmem:[%s359 + $0x8] sm:$0xf]
      %v382 = vld [vmem:[%s359 + $0xc] sm:$0xf]
      %v383 = vld [vmem:[%s359 + $0x10] sm:$0xf]
      %v384 = vld [vmem:[%s359 + $0x14] sm:$0xf]
      %v385 = vld [vmem:[%s359 + $0x18] sm:$0xf]
      %v386 = vld [vmem:[%s359 + $0x1c] sm:$0xf]
      %v387 = vld [vmem:[%s359 + $0x20] sm:$0xf]
      %v388 = vld [vmem:[%s359 + $0x24] sm:$0xf]
      %v389 = vld [vmem:[%s359 + $0x28] sm:$0xf]
      %v390 = vld [vmem:[%s359 + $0x2c] sm:$0xf]
      %v391 = vld [vmem:[%s359 + $0x30] sm:$0xf]
      %v392 = vld [vmem:[%s359 + $0x34] sm:$0xf]
      %v393 = vld [vmem:[%s359 + $0x38] sm:$0xf]
      %v394 = vld [vmem:[%s359 + $0x3c] sm:$0xf]
      %v395 = vld [vmem:[%s365] sm:$0xf]
      %v396 = vld [vmem:[%s365 + $0x4] sm:$0xf]
      %v397 = vld [vmem:[%s365 + $0x8] sm:$0xf]
      %v398 = vld [vmem:[%s365 + $0xc] sm:$0xf]
      %v399 = vld [vmem:[%s365 + $0x10] sm:$0xf]
      %v400 = vld [vmem:[%s365 + $0x14] sm:$0xf]
      %v401 = vld [vmem:[%s365 + $0x18] sm:$0xf]
      %v402 = vld [vmem:[%s365 + $0x1c] sm:$0xf]
      %v403 = vld [vmem:[%s365 + $0x20] sm:$0xf]
      %v404 = vld [vmem:[%s365 + $0x24] sm:$0xf]
      %v405 = vld [vmem:[%s365 + $0x28] sm:$0xf]
      %v406 = vld [vmem:[%s365 + $0x2c] sm:$0xf]
      %v407 = vld [vmem:[%s365 + $0x30] sm:$0xf]
      %v408 = vld [vmem:[%s365 + $0x34] sm:$0xf]
      %v409 = vld [vmem:[%s365 + $0x38] sm:$0xf]
      %v410 = vld [vmem:[%s365 + $0x3c] sm:$0xf]
      %v411 = vadd.bf16 %v379, %v395
      %v412 = vadd.bf16 %v380, %v396
      %v413 = vadd.bf16 %v381, %v397
      %v414 = vadd.bf16 %v382, %v398
      %v415 = vadd.bf16 %v383, %v399
      %v416 = vadd.bf16 %v384, %v400
      %v417 = vadd.bf16 %v385, %v401
      %v418 = vadd.bf16 %v386, %v402
      %v419 = vadd.bf16 %v387, %v403
      %v420 = vadd.bf16 %v388, %v404
      %v421 = vadd.bf16 %v389, %v405
      %v422 = vadd.bf16 %v390, %v406
      %v423 = vadd.bf16 %v391, %v407
      %v424 = vadd.bf16 %v392, %v408
      %v425 = vadd.bf16 %v393, %v409
      %v426 = vadd.bf16 %v394, %v410
      %v427 = vld [vmem:[%s3] sm:$0xff]
      %v428 = vld [vmem:[%s3 + $0x8] sm:$0xff]
      %v429 = vld [vmem:[%s3 + $0x10] sm:$0xff]
      %v430 = vld [vmem:[%s3 + $0x18] sm:$0xff]
      %v431 = vld [vmem:[%s3 + $0x20] sm:$0xff]
      %v432 = vld [vmem:[%s3 + $0x28] sm:$0xff]
      %v433 = vld [vmem:[%s3 + $0x30] sm:$0xff]
      %v434 = vld [vmem:[%s3 + $0x38] sm:$0xff]
      %v435 = vld [vmem:[%s3 + $0x40] sm:$0xff]
      %v436 = vld [vmem:[%s3 + $0x48] sm:$0xff]
      %v437 = vld [vmem:[%s3 + $0x50] sm:$0xff]
      %v438 = vld [vmem:[%s3 + $0x58] sm:$0xff]
      %v439 = vld [vmem:[%s3 + $0x60] sm:$0xff]
      %v440 = vld [vmem:[%s3 + $0x68] sm:$0xff]
      %v441 = vld [vmem:[%s3 + $0x70] sm:$0xff]
      %v442 = vld [vmem:[%s3 + $0x78] sm:$0xff]
      %v443 = vld [vmem:[%s6] sm:$0x3]
      %v445 = vlaneseq
      %v446 = vshrl.u32 %v445, 7
      %v447 = vsub.s32 0, %v446
      %v448 = vrot.slane %v443, %v447
      %v449 = vlaneseq
      %v450 = vshrl.u32 %v449, 7
      %v451 = vsub.s32 1, %v450
      %v452 = vrot.slane %v443, %v451
      %v471 = vunpack.c.l.b16 %v411
      %v472 = vunpack.c.l.b16 %v412
      %v473 = vunpack.c.l.b16 %v413
      %v474 = vunpack.c.l.b16 %v414
      %v475 = vunpack.c.l.b16 %v415
      %v476 = vunpack.c.l.b16 %v416
      %v477 = vunpack.c.l.b16 %v417
      %v478 = vunpack.c.l.b16 %v418
      %v479 = vunpack.c.l.b16 %v419
      %v480 = vunpack.c.l.b16 %v420
      %v481 = vunpack.c.l.b16 %v421
      %v482 = vunpack.c.l.b16 %v422
      %v483 = vunpack.c.l.b16 %v423
      %v484 = vunpack.c.l.b16 %v424
      %v485 = vunpack.c.l.b16 %v425
      %v486 = vunpack.c.l.b16 %v426
      %v487 = vpack.c.b16 %v472, %v471
      %v488 = vpack.c.b16 %v474, %v473
      %v489 = vpack.c.b16 %v476, %v475
      %v490 = vpack.c.b16 %v478, %v477
      %v491 = vpack.c.b16 %v480, %v479
      %v492 = vpack.c.b16 %v482, %v481
      %v493 = vpack.c.b16 %v484, %v483
      %v494 = vpack.c.b16 %v486, %v485
      %v519 = vunpack.c.l.b16 %v427
      %v520 = vunpack.c.h.b16 %v427
      %v521 = vunpack.c.l.b16 %v428
      %v522 = vunpack.c.h.b16 %v428
      %v523 = vunpack.c.l.b16 %v429
      %v524 = vunpack.c.h.b16 %v429
      %v525 = vunpack.c.l.b16 %v430
      %v526 = vunpack.c.h.b16 %v430
      %v527 = vunpack.c.l.b16 %v431
      %v528 = vunpack.c.h.b16 %v431
      %v529 = vunpack.c.l.b16 %v432
      %v530 = vunpack.c.h.b16 %v432
      %v531 = vunpack.c.l.b16 %v433
      %v532 = vunpack.c.h.b16 %v433
      %v533 = vunpack.c.l.b16 %v434
      %v534 = vunpack.c.h.b16 %v434
      %v535 = vunpack.c.l.b16 %v435
      %v536 = vunpack.c.h.b16 %v435
      %v537 = vunpack.c.l.b16 %v436
      %v538 = vunpack.c.h.b16 %v436
      %v539 = vunpack.c.l.b16 %v437
      %v540 = vunpack.c.h.b16 %v437
      %v541 = vunpack.c.l.b16 %v438
      %v542 = vunpack.c.h.b16 %v438
      %v543 = vunpack.c.l.b16 %v439
      %v544 = vunpack.c.h.b16 %v439
      %v545 = vunpack.c.l.b16 %v440
      %v546 = vunpack.c.h.b16 %v440
      %v547 = vunpack.c.l.b16 %v441
      %v548 = vunpack.c.h.b16 %v441
      %v549 = vunpack.c.l.b16 %v442
      %v550 = vunpack.c.h.b16 %v442
      %v551 = vpack.c.b16 %v521, %v519
      %v552 = vpack.c.b16 %v522, %v520
      %v553 = vpack.c.b16 %v525, %v523
      %v554 = vpack.c.b16 %v526, %v524
      %v555 = vpack.c.b16 %v529, %v527
      %v556 = vpack.c.b16 %v530, %v528
      %v557 = vpack.c.b16 %v533, %v531
      %v558 = vpack.c.b16 %v534, %v532
      %v559 = vpack.c.b16 %v537, %v535
      %v560 = vpack.c.b16 %v538, %v536
      %v561 = vpack.c.b16 %v541, %v539
      %v562 = vpack.c.b16 %v542, %v540
      %v563 = vpack.c.b16 %v545, %v543
      %v564 = vpack.c.b16 %v546, %v544
      %v565 = vpack.c.b16 %v549, %v547
      %v566 = vpack.c.b16 %v550, %v548
      %583 = vmatprep.subr.bf16.mxu0 %v552
      %584 = vmatpush1.bf16.msra.mxu0 %v551
      %585 = vmatprep.subr.bf16.mxu0 %v554
      %586 = vmatpush1.bf16.msra.mxu0 %v553
      %587 = vmatprep.subr.bf16.mxu0 %v556
      %588 = vmatpush1.bf16.msra.mxu0 %v555
      %589 = vmatprep.subr.bf16.mxu0 %v558
      %590 = vmatpush1.bf16.msra.mxu0 %v557
      %591 = vmatprep.subr.bf16.mxu0 %v560
      %592 = vmatpush1.bf16.msra.mxu0 %v559
      %593 = vmatprep.subr.bf16.mxu0 %v562
      %594 = vmatpush1.bf16.msra.mxu0 %v561
      %595 = vmatprep.subr.bf16.mxu0 %v564
      %596 = vmatpush1.bf16.msra.mxu0 %v563
      %597 = vmatprep.subr.bf16.mxu0 %v566
      %598 = vmatpush1.bf16.msra.mxu0 %v565
      %599 = vmatprep.subr.bf16.mxu0 0
      %600 = vmatpush1.bf16.msra.mxu0 0
      %601 = vmatprep.subr.bf16.mxu0 0
      %602 = vmatpush1.bf16.msra.mxu0 0
      %603 = vmatprep.subr.bf16.mxu0 0
      %604 = vmatpush1.bf16.msra.mxu0 0
      %605 = vmatprep.subr.bf16.mxu0 0
      %606 = vmatpush1.bf16.msra.mxu0 0
      %607 = vmatprep.subr.bf16.mxu0 0
      %608 = vmatpush1.bf16.msra.mxu0 0
      %609 = vmatprep.subr.bf16.mxu0 0
      %610 = vmatpush1.bf16.msra.mxu0 0
      %611 = vmatprep.subr.bf16.mxu0 0
      %612 = vmatpush1.bf16.msra.mxu0 0
      %613 = vmatprep.subr.bf16.mxu0 0
      %614 = vmatpush1.bf16.msra.mxu0 0
      %615 = vmatprep.mubr.bf16.mxu0 0
      %616 = vmatmul.mubr.bf16.gmra.mrb[0].mxu0 %v487
      %v617 = vpop.f32.mrb[0].mxu0
      %v618 = vadd.f32 %v448, %v617
      %v619 = vpop.f32.mrb[0].mxu0
      %v620 = vadd.f32 %v452, %v619
      %v621 = vpop.f32.mrb[0].mxu0
      %v622 = vadd.f32 %v448, %v621
      %v623 = vpop.f32.mrb[0].mxu0
      %v624 = vadd.f32 %v452, %v623
      %625 = vmatprep.mubr.bf16.mxu0 0
      %626 = vmatmul.mubr.bf16.gmra.mrb[0].mxu0 %v488
      %v627 = vpop.f32.mrb[0].mxu0
      %v628 = vadd.f32 %v448, %v627
      %v629 = vpop.f32.mrb[0].mxu0
      %v630 = vadd.f32 %v452, %v629
      %v631 = vpop.f32.mrb[0].mxu0
      %v632 = vadd.f32 %v448, %v631
      %v633 = vpop.f32.mrb[0].mxu0
      %v634 = vadd.f32 %v452, %v633
      %635 = vmatprep.mubr.bf16.mxu0 0
      %636 = vmatmul.mubr.bf16.gmra.mrb[0].mxu0 %v489
      %v637 = vpop.f32.mrb[0].mxu0
      %v638 = vadd.f32 %v448, %v637
      %v639 = vpop.f32.mrb[0].mxu0
      %v640 = vadd.f32 %v452, %v639
      %v641 = vpop.f32.mrb[0].mxu0
      %v642 = vadd.f32 %v448, %v641
      %v643 = vpop.f32.mrb[0].mxu0
      %v644 = vadd.f32 %v452, %v643
      %645 = vmatprep.mubr.bf16.mxu0 0
      %646 = vmatmul.mubr.bf16.gmra.mrb[0].mxu0 %v490
      %v647 = vpop.f32.mrb[0].mxu0
      %v648 = vadd.f32 %v448, %v647
      %v649 = vpop.f32.mrb[0].mxu0
      %v650 = vadd.f32 %v452, %v649
      %v651 = vpop.f32.mrb[0].mxu0
      %v652 = vadd.f32 %v448, %v651
      %v653 = vpop.f32.mrb[0].mxu0
      %v654 = vadd.f32 %v452, %v653
      %655 = vmatprep.mubr.bf16.mxu0 0
      %656 = vmatmul.mubr.bf16.gmra.mrb[0].mxu0 %v491
      %v657 = vpop.f32.mrb[0].mxu0
      %v658 = vadd.f32 %v448, %v657
      %v659 = vpop.f32.mrb[0].mxu0
      %v660 = vadd.f32 %v452, %v659
      %v661 = vpop.f32.mrb[0].mxu0
      %v662 = vadd.f32 %v448, %v661
      %v663 = vpop.f32.mrb[0].mxu0
      %v664 = vadd.f32 %v452, %v663
      %665 = vmatprep.mubr.bf16.mxu0 0
      %666 = vmatmul.mubr.bf16.gmra.mrb[0].mxu0 %v492
      %v667 = vpop.f32.mrb[0].mxu0
      %v668 = vadd.f32 %v448, %v667
      %v669 = vpop.f32.mrb[0].mxu0
      %v670 = vadd.f32 %v452, %v669
      %v671 = vpop.f32.mrb[0].mxu0
      %v672 = vadd.f32 %v448, %v671
      %v673 = vpop.f32.mrb[0].mxu0
      %v674 = vadd.f32 %v452, %v673
      %675 = vmatprep.mubr.bf16.mxu0 0
      %676 = vmatmul.mubr.bf16.gmra.mrb[0].mxu0 %v493
      %v677 = vpop.f32.mrb[0].mxu0
      %v678 = vadd.f32 %v448, %v677
      %v679 = vpop.f32.mrb[0].mxu0
      %v680 = vadd.f32 %v452, %v679
      %v681 = vpop.f32.mrb[0].mxu0
      %v682 = vadd.f32 %v448, %v681
      %v683 = vpop.f32.mrb[0].mxu0
      %v684 = vadd.f32 %v452, %v683
      %685 = vmatprep.mubr.bf16.mxu0 0
      %686 = vmatmul.mubr.bf16.gmra.mrb[0].mxu0 %v494
      %v687 = vpop.f32.mrb[0].mxu0
      %v688 = vadd.f32 %v448, %v687
      %v689 = vpop.f32.mrb[0].mxu0
      %v690 = vadd.f32 %v452, %v689
      %v691 = vpop.f32.mrb[0].mxu0
      %v692 = vadd.f32 %v448, %v691
      %v693 = vpop.f32.mrb[0].mxu0
      %v694 = vadd.f32 %v452, %v693
      %695 = vdwg.mxu0
      %v696 = vmul.f32 %v618, 0.25
      %v697 = vmul.f32 %v622, 0.25
      %v698 = vmul.f32 %v628, 0.25
      %v699 = vmul.f32 %v632, 0.25
      %v700 = vmul.f32 %v638, 0.25
      %v701 = vmul.f32 %v642, 0.25
      %v702 = vmul.f32 %v648, 0.25
      %v703 = vmul.f32 %v652, 0.25
      %v704 = vmul.f32 %v658, 0.25
      %v705 = vmul.f32 %v662, 0.25
      %v706 = vmul.f32 %v668, 0.25
      %v707 = vmul.f32 %v672, 0.25
      %v708 = vmul.f32 %v678, 0.25
      %v709 = vmul.f32 %v682, 0.25
      %v710 = vmul.f32 %v688, 0.25
      %v711 = vmul.f32 %v692, 0.25
      %v712 = vpack.c.bf16 %v697, %v696
      %v713 = vpack.c.bf16 %v699, %v698
      %v714 = vpack.c.bf16 %v701, %v700
      %v715 = vpack.c.bf16 %v703, %v702
      %v716 = vpack.c.bf16 %v705, %v704
      %v717 = vpack.c.bf16 %v707, %v706
      %v718 = vpack.c.bf16 %v709, %v708
      %v719 = vpack.c.bf16 %v711, %v710
      %v720 = vpack.c.bf16 %v624, %v620
      %v721 = vpack.c.bf16 %v634, %v630
      %v722 = vpack.c.bf16 %v644, %v640
      %v723 = vpack.c.bf16 %v654, %v650
      %v724 = vpack.c.bf16 %v664, %v660
      %v725 = vpack.c.bf16 %v674, %v670
      %v726 = vpack.c.bf16 %v684, %v680
      %v727 = vpack.c.bf16 %v694, %v690
      %v728 = vld [vmem:[%s4] sm:$0xf]
      %v729 = vld [vmem:[%s4 + $0x4] sm:$0xf]
      %v730 = vld [vmem:[%s4 + $0x8] sm:$0xf]
      %v731 = vld [vmem:[%s4 + $0xc] sm:$0xf]
      %v732 = vld [vmem:[%s4 + $0x10] sm:$0xf]
      %v733 = vld [vmem:[%s4 + $0x14] sm:$0xf]
      %v734 = vld [vmem:[%s4 + $0x18] sm:$0xf]
      %v735 = vld [vmem:[%s4 + $0x1c] sm:$0xf]
      %v736 = vld [vmem:[%s4 + $0x20] sm:$0xf]
      %v737 = vld [vmem:[%s4 + $0x24] sm:$0xf]
      %v738 = vld [vmem:[%s4 + $0x28] sm:$0xf]
      %v739 = vld [vmem:[%s4 + $0x2c] sm:$0xf]
      %v740 = vld [vmem:[%s4 + $0x30] sm:$0xf]
      %v741 = vld [vmem:[%s4 + $0x34] sm:$0xf]
      %v742 = vld [vmem:[%s4 + $0x38] sm:$0xf]
      %v743 = vld [vmem:[%s4 + $0x3c] sm:$0xf]
      %v744 = vld [vmem:[%s7] sm:$0x1]
      %v746 = vlaneseq
      %v747 = vshrl.u32 %v746, 7
      %v748 = vsub.s32 0, %v747
      %v749 = vrot.slane %v744, %v748
      %v767 = vunpack.c.l.b16 %v379
      %v768 = vunpack.c.l.b16 %v380
      %v769 = vunpack.c.l.b16 %v381
      %v770 = vunpack.c.l.b16 %v382
      %v771 = vunpack.c.l.b16 %v383
      %v772 = vunpack.c.l.b16 %v384
      %v773 = vunpack.c.l.b16 %v385
      %v774 = vunpack.c.l.b16 %v386
      %v775 = vunpack.c.l.b16 %v387
      %v776 = vunpack.c.l.b16 %v388
      %v777 = vunpack.c.l.b16 %v389
      %v778 = vunpack.c.l.b16 %v390
      %v779 = vunpack.c.l.b16 %v391
      %v780 = vunpack.c.l.b16 %v392
      %v781 = vunpack.c.l.b16 %v393
      %v782 = vunpack.c.l.b16 %v394
      %v783 = vpack.c.b16 %v768, %v767
      %v784 = vpack.c.b16 %v770, %v769
      %v785 = vpack.c.b16 %v772, %v771
      %v786 = vpack.c.b16 %v774, %v773
      %v787 = vpack.c.b16 %v776, %v775
      %v788 = vpack.c.b16 %v778, %v777
      %v789 = vpack.c.b16 %v780, %v779
      %v790 = vpack.c.b16 %v782, %v781
      %v815 = vunpack.c.l.b16 %v728
      %v816 = vunpack.c.l.b16 %v729
      %v817 = vunpack.c.l.b16 %v730
      %v818 = vunpack.c.l.b16 %v731
      %v819 = vunpack.c.l.b16 %v732
      %v820 = vunpack.c.l.b16 %v733
      %v821 = vunpack.c.l.b16 %v734
      %v822 = vunpack.c.l.b16 %v735
      %v823 = vunpack.c.l.b16 %v736
      %v824 = vunpack.c.l.b16 %v737
      %v825 = vunpack.c.l.b16 %v738
      %v826 = vunpack.c.l.b16 %v739
      %v827 = vunpack.c.l.b16 %v740
      %v828 = vunpack.c.l.b16 %v741
      %v829 = vunpack.c.l.b16 %v742
      %v830 = vunpack.c.l.b16 %v743
      %v831 = vpack.c.b16 %v816, %v815
      %v832 = vpack.c.b16 %v818, %v817
      %v833 = vpack.c.b16 %v820, %v819
      %v834 = vpack.c.b16 %v822, %v821
      %v835 = vpack.c.b16 %v824, %v823
      %v836 = vpack.c.b16 %v826, %v825
      %v837 = vpack.c.b16 %v828, %v827
      %v838 = vpack.c.b16 %v830, %v829
      %847 = vmatprep.subr.bf16.mxu0 0
      %848 = vmatpush1.bf16.msra.mxu0 %v831
      %849 = vmatprep.subr.bf16.mxu0 0
      %850 = vmatpush1.bf16.msra.mxu0 %v832
      %851 = vmatprep.subr.bf16.mxu0 0
      %852 = vmatpush1.bf16.msra.mxu0 %v833
      %853 = vmatprep.subr.bf16.mxu0 0
      %854 = vmatpush1.bf16.msra.mxu0 %v834
      %855 = vmatprep.subr.bf16.mxu0 0
      %856 = vmatpush1.bf16.msra.mxu0 %v835
      %857 = vmatprep.subr.bf16.mxu0 0
      %858 = vmatpush1.bf16.msra.mxu0 %v836
      %859 = vmatprep.subr.bf16.mxu0 0
      %860 = vmatpush1.bf16.msra.mxu0 %v837
      %861 = vmatprep.subr.bf16.mxu0 0
      %862 = vmatpush1.bf16.msra.mxu0 %v838
      %863 = vmatprep.subr.bf16.mxu0 0
      %864 = vmatpush1.bf16.msra.mxu0 0
      %865 = vmatprep.subr.bf16.mxu0 0
      %866 = vmatpush1.bf16.msra.mxu0 0
      %867 = vmatprep.subr.bf16.mxu0 0
      %868 = vmatpush1.bf16.msra.mxu0 0
      %869 = vmatprep.subr.bf16.mxu0 0
      %870 = vmatpush1.bf16.msra.mxu0 0
      %871 = vmatprep.subr.bf16.mxu0 0
      %872 = vmatpush1.bf16.msra.mxu0 0
      %873 = vmatprep.subr.bf16.mxu0 0
      %874 = vmatpush1.bf16.msra.mxu0 0
      %875 = vmatprep.subr.bf16.mxu0 0
      %876 = vmatpush1.bf16.msra.mxu0 0
      %877 = vmatprep.subr.bf16.mxu0 0
      %878 = vmatpush1.bf16.msra.mxu0 0
      %879 = vmatprep.mubr.bf16.mxu0 0
      %880 = vmatmul.mubr.bf16.gmra.mrb[0].mxu0 %v783
      %v881 = vpop.f32.mrb[0].mxu0
      %v882 = vadd.f32 %v749, %v881
      %v883 = vpop.f32.mrb[0].mxu0
      %v884 = vpop.f32.mrb[0].mxu0
      %v885 = vadd.f32 %v749, %v884
      %v886 = vpop.f32.mrb[0].mxu0
      %887 = vmatprep.mubr.bf16.mxu0 0
      %888 = vmatmul.mubr.bf16.gmra.mrb[0].mxu0 %v784
      %v889 = vpop.f32.mrb[0].mxu0
      %v890 = vadd.f32 %v749, %v889
      %v891 = vpop.f32.mrb[0].mxu0
      %v892 = vpop.f32.mrb[0].mxu0
      %v893 = vadd.f32 %v749, %v892
      %v894 = vpop.f32.mrb[0].mxu0
      %895 = vmatprep.mubr.bf16.mxu0 0
      %896 = vmatmul.mubr.bf16.gmra.mrb[0].mxu0 %v785
      %v897 = vpop.f32.mrb[0].mxu0
      %v898 = vadd.f32 %v749, %v897
      %v899 = vpop.f32.mrb[0].mxu0
      %v900 = vpop.f32.mrb[0].mxu0
      %v901 = vadd.f32 %v749, %v900
      %v902 = vpop.f32.mrb[0].mxu0
      %903 = vmatprep.mubr.bf16.mxu0 0
      %904 = vmatmul.mubr.bf16.gmra.mrb[0].mxu0 %v786
      %v905 = vpop.f32.mrb[0].mxu0
      %v906 = vadd.f32 %v749, %v905
      %v907 = vpop.f32.mrb[0].mxu0
      %v908 = vpop.f32.mrb[0].mxu0
      %v909 = vadd.f32 %v749, %v908
      %v910 = vpop.f32.mrb[0].mxu0
      %911 = vmatprep.mubr.bf16.mxu0 0
      %912 = vmatmul.mubr.bf16.gmra.mrb[0].mxu0 %v787
      %v913 = vpop.f32.mrb[0].mxu0
      %v914 = vadd.f32 %v749, %v913
      %v915 = vpop.f32.mrb[0].mxu0
      %v916 = vpop.f32.mrb[0].mxu0
      %v917 = vadd.f32 %v749, %v916
      %v918 = vpop.f32.mrb[0].mxu0
      %919 = vmatprep.mubr.bf16.mxu0 0
      %920 = vmatmul.mubr.bf16.gmra.mrb[0].mxu0 %v788
      %v921 = vpop.f32.mrb[0].mxu0
      %v922 = vadd.f32 %v749, %v921
      %v923 = vpop.f32.mrb[0].mxu0
      %v924 = vpop.f32.mrb[0].mxu0
      %v925 = vadd.f32 %v749, %v924
      %v926 = vpop.f32.mrb[0].mxu0
      %927 = vmatprep.mubr.bf16.mxu0 0
      %928 = vmatmul.mubr.bf16.gmra.mrb[0].mxu0 %v789
      %v929 = vpop.f32.mrb[0].mxu0
      %v930 = vadd.f32 %v749, %v929
      %v931 = vpop.f32.mrb[0].mxu0
      %v932 = vpop.f32.mrb[0].mxu0
      %v933 = vadd.f32 %v749, %v932
      %v934 = vpop.f32.mrb[0].mxu0
      %935 = vmatprep.mubr.bf16.mxu0 0
      %936 = vmatmul.mubr.bf16.gmra.mrb[0].mxu0 %v790
      %v937 = vpop.f32.mrb[0].mxu0
      %v938 = vadd.f32 %v749, %v937
      %v939 = vpop.f32.mrb[0].mxu0
      %v940 = vpop.f32.mrb[0].mxu0
      %v941 = vadd.f32 %v749, %v940
      %v942 = vpop.f32.mrb[0].mxu0
      %943 = vdwg.mxu0
      %v944 = vpack.c.bf16 %v885, %v882
      %v945 = vpack.c.bf16 %v893, %v890
      %v946 = vpack.c.bf16 %v901, %v898
      %v947 = vpack.c.bf16 %v909, %v906
      %v948 = vpack.c.bf16 %v917, %v914
      %v949 = vpack.c.bf16 %v925, %v922
      %v950 = vpack.c.bf16 %v933, %v930
      %v951 = vpack.c.bf16 %v941, %v938
      %v952 = vld [vmem:[%s371] sm:$0xf]
      %v953 = vld [vmem:[%s371 + $0x4] sm:$0xf]
      %v954 = vld [vmem:[%s371 + $0x8] sm:$0xf]
      %v955 = vld [vmem:[%s371 + $0xc] sm:$0xf]
      %v956 = vld [vmem:[%s371 + $0x10] sm:$0xf]
      %v957 = vld [vmem:[%s371 + $0x14] sm:$0xf]
      %v958 = vld [vmem:[%s371 + $0x18] sm:$0xf]
      %v959 = vld [vmem:[%s371 + $0x1c] sm:$0xf]
      %v960 = vld [vmem:[%s371 + $0x20] sm:$0xf]
      %v961 = vld [vmem:[%s371 + $0x24] sm:$0xf]
      %v962 = vld [vmem:[%s371 + $0x28] sm:$0xf]
      %v963 = vld [vmem:[%s371 + $0x2c] sm:$0xf]
      %v964 = vld [vmem:[%s371 + $0x30] sm:$0xf]
      %v965 = vld [vmem:[%s371 + $0x34] sm:$0xf]
      %v966 = vld [vmem:[%s371 + $0x38] sm:$0xf]
      %v967 = vld [vmem:[%s371 + $0x3c] sm:$0xf]
      %v968 = vunpack.c.l.bf16 %v952
      %v969 = vunpack.c.l.bf16 %v953
      %v970 = vunpack.c.l.bf16 %v954
      %v971 = vunpack.c.l.bf16 %v955
      %v972 = vunpack.c.l.bf16 %v956
      %v973 = vunpack.c.l.bf16 %v957
      %v974 = vunpack.c.l.bf16 %v958
      %v975 = vunpack.c.l.bf16 %v959
      %v976 = vunpack.c.l.bf16 %v960
      %v977 = vunpack.c.l.bf16 %v961
      %v978 = vunpack.c.l.bf16 %v962
      %v979 = vunpack.c.l.bf16 %v963
      %v980 = vunpack.c.l.bf16 %v964
      %v981 = vunpack.c.l.bf16 %v965
      %v982 = vunpack.c.l.bf16 %v966
      %v983 = vunpack.c.l.bf16 %v967
      %v984 = vld [vmem:[%s5] sm:$0xf]
      %v985 = vld [vmem:[%s5 + $0x4] sm:$0xf]
      %v986 = vld [vmem:[%s5 + $0x8] sm:$0xf]
      %v987 = vld [vmem:[%s5 + $0xc] sm:$0xf]
      %v988 = vld [vmem:[%s5 + $0x10] sm:$0xf]
      %v989 = vld [vmem:[%s5 + $0x14] sm:$0xf]
      %v990 = vld [vmem:[%s5 + $0x18] sm:$0xf]
      %v991 = vld [vmem:[%s5 + $0x1c] sm:$0xf]
      %v992 = vld [vmem:[%s5 + $0x20] sm:$0xf]
      %v993 = vld [vmem:[%s5 + $0x24] sm:$0xf]
      %v994 = vld [vmem:[%s5 + $0x28] sm:$0xf]
      %v995 = vld [vmem:[%s5 + $0x2c] sm:$0xf]
      %v996 = vld [vmem:[%s5 + $0x30] sm:$0xf]
      %v997 = vld [vmem:[%s5 + $0x34] sm:$0xf]
      %v998 = vld [vmem:[%s5 + $0x38] sm:$0xf]
      %v999 = vld [vmem:[%s5 + $0x3c] sm:$0xf]
      %vm1000 = vcmask 130048
      %v1002 = vsel %vm1000, %v712, 0
      %v1005 = vsel %vm1000, %v713, 0
      %v1008 = vsel %vm1000, %v714, 0
      %v1011 = vsel %vm1000, %v715, 0
      %v1014 = vsel %vm1000, %v716, 0
      %v1017 = vsel %vm1000, %v717, 0
      %v1020 = vsel %vm1000, %v718, 0
      %v1023 = vsel %vm1000, %v719, 0
      %v1026 = vsel %vm1000, %v720, 0
      %v1029 = vsel %vm1000, %v721, 0
      %v1032 = vsel %vm1000, %v722, 0
      %v1035 = vsel %vm1000, %v723, 0
      %v1038 = vsel %vm1000, %v724, 0
      %v1041 = vsel %vm1000, %v725, 0
      %v1044 = vsel %vm1000, %v726, 0
      %v1047 = vsel %vm1000, %v727, 0
      %1049 = vmatprep.subr.bf16.mxu0 0
      %1050 = vmatpush1.bf16.xpose.msra.mxu0 %v1026
      %1051 = vmatprep.subr.bf16.mxu0 0
      %1052 = vmatpush1.bf16.xpose.msra.mxu0 %v1029
      %1053 = vmatprep.subr.bf16.mxu0 0
      %1054 = vmatpush1.bf16.xpose.msra.mxu0 %v1032
      %1055 = vmatprep.subr.bf16.mxu0 0
      %1056 = vmatpush1.bf16.xpose.msra.mxu0 %v1035
      %1057 = vmatprep.subr.bf16.mxu0 0
      %1058 = vmatpush1.bf16.xpose.msra.mxu0 %v1038
      %1059 = vmatprep.subr.bf16.mxu0 0
      %1060 = vmatpush1.bf16.xpose.msra.mxu0 %v1041
      %1061 = vmatprep.subr.bf16.mxu0 0
      %1062 = vmatpush1.bf16.xpose.msra.mxu0 %v1044
      %1063 = vmatprep.subr.bf16.mxu0 0
      %1064 = vmatpush1.bf16.xpose.msra.mxu0 %v1047
      %1065 = vmatprep.subr.bf16.mxu0 0
      %1066 = vmatpush1.bf16.xpose.msra.mxu0 0
      %1067 = vmatprep.subr.bf16.mxu0 0
      %1068 = vmatpush1.bf16.xpose.msra.mxu0 0
      %1069 = vmatprep.subr.bf16.mxu0 0
      %1070 = vmatpush1.bf16.xpose.msra.mxu0 0
      %1071 = vmatprep.subr.bf16.mxu0 0
      %1072 = vmatpush1.bf16.xpose.msra.mxu0 0
      %1073 = vmatprep.subr.bf16.mxu0 0
      %1074 = vmatpush1.bf16.xpose.msra.mxu0 0
      %1075 = vmatprep.subr.bf16.mxu0 0
      %1076 = vmatpush1.bf16.xpose.msra.mxu0 0
      %1077 = vmatprep.subr.bf16.mxu0 0
      %1078 = vmatpush1.bf16.xpose.msra.mxu0 0
      %1079 = vmatprep.subr.bf16.mxu0 0
      %1080 = vmatpush1.bf16.xpose.msra.mxu0 0
      %1081 = vmatprep.mubr.bf16.mxu0 0
      %1082 = vmatmul.mubr.bf16.gmra.mrb[0].mxu0 %v1002
      %v1083 = vpop.f32.mrb[0].mxu0
      %v1084 = vadd.f32 %v968, %v1083
      %v1085 = vpop.f32.mrb[0].mxu0
      %v1086 = vpop.f32.mrb[0].mxu0
      %v1087 = vadd.f32 %v969, %v1086
      %v1088 = vpop.f32.mrb[0].mxu0
      %1089 = vmatprep.mubr.bf16.mxu0 0
      %1090 = vmatmul.mubr.bf16.gmra.mrb[0].mxu0 %v1005
      %v1091 = vpop.f32.mrb[0].mxu0
      %v1092 = vadd.f32 %v970, %v1091
      %v1093 = vpop.f32.mrb[0].mxu0
      %v1094 = vpop.f32.mrb[0].mxu0
      %v1095 = vadd.f32 %v971, %v1094
      %v1096 = vpop.f32.mrb[0].mxu0
      %1097 = vmatprep.mubr.bf16.mxu0 0
      %1098 = vmatmul.mubr.bf16.gmra.mrb[0].mxu0 %v1008
      %v1099 = vpop.f32.mrb[0].mxu0
      %v1100 = vadd.f32 %v972, %v1099
      %v1101 = vpop.f32.mrb[0].mxu0
      %v1102 = vpop.f32.mrb[0].mxu0
      %v1103 = vadd.f32 %v973, %v1102
      %v1104 = vpop.f32.mrb[0].mxu0
      %1105 = vmatprep.mubr.bf16.mxu0 0
      %1106 = vmatmul.mubr.bf16.gmra.mrb[0].mxu0 %v1011
      %v1107 = vpop.f32.mrb[0].mxu0
      %v1108 = vadd.f32 %v974, %v1107
      %v1109 = vpop.f32.mrb[0].mxu0
      %v1110 = vpop.f32.mrb[0].mxu0
      %v1111 = vadd.f32 %v975, %v1110
      %v1112 = vpop.f32.mrb[0].mxu0
      %1113 = vmatprep.mubr.bf16.mxu0 0
      %1114 = vmatmul.mubr.bf16.gmra.mrb[0].mxu0 %v1014
      %v1115 = vpop.f32.mrb[0].mxu0
      %v1116 = vadd.f32 %v976, %v1115
      %v1117 = vpop.f32.mrb[0].mxu0
      %v1118 = vpop.f32.mrb[0].mxu0
      %v1119 = vadd.f32 %v977, %v1118
      %v1120 = vpop.f32.mrb[0].mxu0
      %1121 = vmatprep.mubr.bf16.mxu0 0
      %1122 = vmatmul.mubr.bf16.gmra.mrb[0].mxu0 %v1017
      %v1123 = vpop.f32.mrb[0].mxu0
      %v1124 = vadd.f32 %v978, %v1123
      %v1125 = vpop.f32.mrb[0].mxu0
      %v1126 = vpop.f32.mrb[0].mxu0
      %v1127 = vadd.f32 %v979, %v1126
      %v1128 = vpop.f32.mrb[0].mxu0
      %1129 = vmatprep.mubr.bf16.mxu0 0
      %1130 = vmatmul.mubr.bf16.gmra.mrb[0].mxu0 %v1020
      %v1131 = vpop.f32.mrb[0].mxu0
      %v1132 = vadd.f32 %v980, %v1131
      %v1133 = vpop.f32.mrb[0].mxu0
      %v1134 = vpop.f32.mrb[0].mxu0
      %v1135 = vadd.f32 %v981, %v1134
      %v1136 = vpop.f32.mrb[0].mxu0
      %1137 = vmatprep.mubr.bf16.mxu0 0
      %1138 = vmatmul.mubr.bf16.gmra.mrb[0].mxu0 %v1023
      %v1139 = vpop.f32.mrb[0].mxu0
      %v1140 = vadd.f32 %v982, %v1139
      %v1141 = vpop.f32.mrb[0].mxu0
      %v1142 = vpop.f32.mrb[0].mxu0
      %v1143 = vadd.f32 %v983, %v1142
      %v1144 = vpop.f32.mrb[0].mxu0
      %1145 = vdwg.mxu0
      %1146 = vmax.xlane.f32.xlu0 %v1084
      %v1147 = vpop.xlane.xlu0 %1146
      %1148 = vmax.xlane.f32.xlu0 %v1087
      %v1149 = vpop.xlane.xlu0 %1148
      %1150 = vmax.xlane.f32.xlu0 %v1092
      %v1151 = vpop.xlane.xlu0 %1150
      %1152 = vmax.xlane.f32.xlu0 %v1095
      %v1153 = vpop.xlane.xlu0 %1152
      %1154 = vmax.xlane.f32.xlu0 %v1100
      %v1155 = vpop.xlane.xlu0 %1154
      %1156 = vmax.xlane.f32.xlu0 %v1103
      %v1157 = vpop.xlane.xlu0 %1156
      %1158 = vmax.xlane.f32.xlu0 %v1108
      %v1159 = vpop.xlane.xlu0 %1158
      %1160 = vmax.xlane.f32.xlu0 %v1111
      %v1161 = vpop.xlane.xlu0 %1160
      %1162 = vmax.xlane.f32.xlu0 %v1116
      %v1163 = vpop.xlane.xlu0 %1162
      %1164 = vmax.xlane.f32.xlu0 %v1119
      %v1165 = vpop.xlane.xlu0 %1164
      %1166 = vmax.xlane.f32.xlu0 %v1124
      %v1167 = vpop.xlane.xlu0 %1166
      %1168 = vmax.xlane.f32.xlu0 %v1127
      %v1169 = vpop.xlane.xlu0 %1168
      %1170 = vmax.xlane.f32.xlu0 %v1132
      %v1171 = vpop.xlane.xlu0 %1170
      %1172 = vmax.xlane.f32.xlu0 %v1135
      %v1173 = vpop.xlane.xlu0 %1172
      %1174 = vmax.xlane.f32.xlu0 %v1140
      %v1175 = vpop.xlane.xlu0 %1174
      %1176 = vmax.xlane.f32.xlu0 %v1143
      %v1177 = vpop.xlane.xlu0 %1176
      %v1178 = vsub.f32 %v1084, %v1147
      %v1179 = vsub.f32 %v1087, %v1149
      %v1180 = vsub.f32 %v1092, %v1151
      %v1181 = vsub.f32 %v1095, %v1153
      %v1182 = vsub.f32 %v1100, %v1155
      %v1183 = vsub.f32 %v1103, %v1157
      %v1184 = vsub.f32 %v1108, %v1159
      %v1185 = vsub.f32 %v1111, %v1161
      %v1186 = vsub.f32 %v1116, %v1163
      %v1187 = vsub.f32 %v1119, %v1165
      %v1188 = vsub.f32 %v1124, %v1167
      %v1189 = vsub.f32 %v1127, %v1169
      %v1190 = vsub.f32 %v1132, %v1171
      %v1191 = vsub.f32 %v1135, %v1173
      %v1192 = vsub.f32 %v1140, %v1175
      %v1193 = vsub.f32 %v1143, %v1177
      %v1194 = vmul.f32 %v1178, 1.442695
      %v1195 = vpow.pop %v1194
      %v1196 = vmul.f32 %v1179, 1.442695
      %v1197 = vpow.pop %v1196
      %v1198 = vmul.f32 %v1180, 1.442695
      %v1199 = vpow.pop %v1198
      %v1200 = vmul.f32 %v1181, 1.442695
      %v1201 = vpow.pop %v1200
      %v1202 = vmul.f32 %v1182, 1.442695
      %v1203 = vpow.pop %v1202
      %v1204 = vmul.f32 %v1183, 1.442695
      %v1205 = vpow.pop %v1204
      %v1206 = vmul.f32 %v1184, 1.442695
      %v1207 = vpow.pop %v1206
      %v1208 = vmul.f32 %v1185, 1.442695
      %v1209 = vpow.pop %v1208
      %v1210 = vmul.f32 %v1186, 1.442695
      %v1211 = vpow.pop %v1210
      %v1212 = vmul.f32 %v1187, 1.442695
      %v1213 = vpow.pop %v1212
      %v1214 = vmul.f32 %v1188, 1.442695
      %v1215 = vpow.pop %v1214
      %v1216 = vmul.f32 %v1189, 1.442695
      %v1217 = vpow.pop %v1216
      %v1218 = vmul.f32 %v1190, 1.442695
      %v1219 = vpow.pop %v1218
      %v1220 = vmul.f32 %v1191, 1.442695
      %v1221 = vpow.pop %v1220
      %v1222 = vmul.f32 %v1192, 1.442695
      %v1223 = vpow.pop %v1222
      %v1224 = vmul.f32 %v1193, 1.442695
      %v1225 = vpow.pop %v1224
      %1226 = vadd.xlane.f32.xlu0 %v1195
      %v1227 = vpop.xlane.xlu0 %1226
      %1228 = vadd.xlane.f32.xlu0 %v1197
      %v1229 = vpop.xlane.xlu0 %1228
      %1230 = vadd.xlane.f32.xlu0 %v1199
      %v1231 = vpop.xlane.xlu0 %1230
      %1232 = vadd.xlane.f32.xlu0 %v1201
      %v1233 = vpop.xlane.xlu0 %1232
      %1234 = vadd.xlane.f32.xlu0 %v1203
      %v1235 = vpop.xlane.xlu0 %1234
      %1236 = vadd.xlane.f32.xlu0 %v1205
      %v1237 = vpop.xlane.xlu0 %1236
      %1238 = vadd.xlane.f32.xlu0 %v1207
      %v1239 = vpop.xlane.xlu0 %1238
      %1240 = vadd.xlane.f32.xlu0 %v1209
      %v1241 = vpop.xlane.xlu0 %1240
      %1242 = vadd.xlane.f32.xlu0 %v1211
      %v1243 = vpop.xlane.xlu0 %1242
      %1244 = vadd.xlane.f32.xlu0 %v1213
      %v1245 = vpop.xlane.xlu0 %1244
      %1246 = vadd.xlane.f32.xlu0 %v1215
      %v1247 = vpop.xlane.xlu0 %1246
      %1248 = vadd.xlane.f32.xlu0 %v1217
      %v1249 = vpop.xlane.xlu0 %1248
      %1250 = vadd.xlane.f32.xlu0 %v1219
      %v1251 = vpop.xlane.xlu0 %1250
      %1252 = vadd.xlane.f32.xlu0 %v1221
      %v1253 = vpop.xlane.xlu0 %1252
      %1254 = vadd.xlane.f32.xlu0 %v1223
      %v1255 = vpop.xlane.xlu0 %1254
      %1256 = vadd.xlane.f32.xlu0 %v1225
      %v1257 = vpop.xlane.xlu0 %1256
      %v1258 = vrcp.pop %v1227
      %v1259 = vrcp.pop %v1229
      %v1260 = vrcp.pop %v1231
      %v1261 = vrcp.pop %v1233
      %v1262 = vrcp.pop %v1235
      %v1263 = vrcp.pop %v1237
      %v1264 = vrcp.pop %v1239
      %v1265 = vrcp.pop %v1241
      %v1266 = vrcp.pop %v1243
      %v1267 = vrcp.pop %v1245
      %v1268 = vrcp.pop %v1247
      %v1269 = vrcp.pop %v1249
      %v1270 = vrcp.pop %v1251
      %v1271 = vrcp.pop %v1253
      %v1272 = vrcp.pop %v1255
      %v1273 = vrcp.pop %v1257
      %v1274 = vmul.f32 %v1195, %v1258
      %v1275 = vmul.f32 %v1197, %v1259
      %v1276 = vmul.f32 %v1199, %v1260
      %v1277 = vmul.f32 %v1201, %v1261
      %v1278 = vmul.f32 %v1203, %v1262
      %v1279 = vmul.f32 %v1205, %v1263
      %v1280 = vmul.f32 %v1207, %v1264
      %v1281 = vmul.f32 %v1209, %v1265
      %v1282 = vmul.f32 %v1211, %v1266
      %v1283 = vmul.f32 %v1213, %v1267
      %v1284 = vmul.f32 %v1215, %v1268
      %v1285 = vmul.f32 %v1217, %v1269
      %v1286 = vmul.f32 %v1219, %v1270
      %v1287 = vmul.f32 %v1221, %v1271
      %v1288 = vmul.f32 %v1223, %v1272
      %v1289 = vmul.f32 %v1225, %v1273
      %v1290 = vpack.c.bf16 %v1275, %v1274
      %v1291 = vpack.c.bf16 %v1277, %v1276
      %v1292 = vpack.c.bf16 %v1279, %v1278
      %v1293 = vpack.c.bf16 %v1281, %v1280
      %v1294 = vpack.c.bf16 %v1283, %v1282
      %v1295 = vpack.c.bf16 %v1285, %v1284
      %v1296 = vpack.c.bf16 %v1287, %v1286
      %v1297 = vpack.c.bf16 %v1289, %v1288
      %1298 = vmatprep.subr.bf16.mxu0 0
      %1299 = vmatpush1.bf16.msra.mxu0 %v944
      %1300 = vmatprep.subr.bf16.mxu0 0
      %1301 = vmatpush1.bf16.msra.mxu0 %v945
      %1302 = vmatprep.subr.bf16.mxu0 0
      %1303 = vmatpush1.bf16.msra.mxu0 %v946
      %1304 = vmatprep.subr.bf16.mxu0 0
      %1305 = vmatpush1.bf16.msra.mxu0 %v947
      %1306 = vmatprep.subr.bf16.mxu0 0
      %1307 = vmatpush1.bf16.msra.mxu0 %v948
      %1308 = vmatprep.subr.bf16.mxu0 0
      %1309 = vmatpush1.bf16.msra.mxu0 %v949
      %1310 = vmatprep.subr.bf16.mxu0 0
      %1311 = vmatpush1.bf16.msra.mxu0 %v950
      %1312 = vmatprep.subr.bf16.mxu0 0
      %1313 = vmatpush1.bf16.msra.mxu0 %v951
      %1314 = vmatprep.subr.bf16.mxu0 0
      %1315 = vmatpush1.bf16.msra.mxu0 0
      %1316 = vmatprep.subr.bf16.mxu0 0
      %1317 = vmatpush1.bf16.msra.mxu0 0
      %1318 = vmatprep.subr.bf16.mxu0 0
      %1319 = vmatpush1.bf16.msra.mxu0 0
      %1320 = vmatprep.subr.bf16.mxu0 0
      %1321 = vmatpush1.bf16.msra.mxu0 0
      %1322 = vmatprep.subr.bf16.mxu0 0
      %1323 = vmatpush1.bf16.msra.mxu0 0
      %1324 = vmatprep.subr.bf16.mxu0 0
      %1325 = vmatpush1.bf16.msra.mxu0 0
      %1326 = vmatprep.subr.bf16.mxu0 0
      %1327 = vmatpush1.bf16.msra.mxu0 0
      %1328 = vmatprep.subr.bf16.mxu0 0
      %1329 = vmatpush1.bf16.msra.mxu0 0
      %1330 = vmatprep.mubr.bf16.mxu0 0
      %1331 = vmatmul.mubr.bf16.gmra.mrb[0].mxu0 %v1290
      %v1332 = vpop.f32.mrb[0].mxu0
      %v1333 = vadd.f32 0.0, %v1332
      %v1334 = vpop.f32.mrb[0].mxu0
      %v1335 = vpop.f32.mrb[0].mxu0
      %v1336 = vadd.f32 0.0, %v1335
      %v1337 = vpop.f32.mrb[0].mxu0
      %1338 = vmatprep.mubr.bf16.mxu0 0
      %1339 = vmatmul.mubr.bf16.gmra.mrb[0].mxu0 %v1291
      %v1340 = vpop.f32.mrb[0].mxu0
      %v1341 = vadd.f32 0.0, %v1340
      %v1342 = vpop.f32.mrb[0].mxu0
      %v1343 = vpop.f32.mrb[0].mxu0
      %v1344 = vadd.f32 0.0, %v1343
      %v1345 = vpop.f32.mrb[0].mxu0
      %1346 = vmatprep.mubr.bf16.mxu0 0
      %1347 = vmatmul.mubr.bf16.gmra.mrb[0].mxu0 %v1292
      %v1348 = vpop.f32.mrb[0].mxu0
      %v1349 = vadd.f32 0.0, %v1348
      %v1350 = vpop.f32.mrb[0].mxu0
      %v1351 = vpop.f32.mrb[0].mxu0
      %v1352 = vadd.f32 0.0, %v1351
      %v1353 = vpop.f32.mrb[0].mxu0
      %1354 = vmatprep.mubr.bf16.mxu0 0
      %1355 = vmatmul.mubr.bf16.gmra.mrb[0].mxu0 %v1293
      %v1356 = vpop.f32.mrb[0].mxu0
      %v1357 = vadd.f32 0.0, %v1356
      %v1358 = vpop.f32.mrb[0].mxu0
      %v1359 = vpop.f32.mrb[0].mxu0
      %v1360 = vadd.f32 0.0, %v1359
      %v1361 = vpop.f32.mrb[0].mxu0
      %1362 = vmatprep.mubr.bf16.mxu0 0
      %1363 = vmatmul.mubr.bf16.gmra.mrb[0].mxu0 %v1294
      %v1364 = vpop.f32.mrb[0].mxu0
      %v1365 = vadd.f32 0.0, %v1364
      %v1366 = vpop.f32.mrb[0].mxu0
      %v1367 = vpop.f32.mrb[0].mxu0
      %v1368 = vadd.f32 0.0, %v1367
      %v1369 = vpop.f32.mrb[0].mxu0
      %1370 = vmatprep.mubr.bf16.mxu0 0
      %1371 = vmatmul.mubr.bf16.gmra.mrb[0].mxu0 %v1295
      %v1372 = vpop.f32.mrb[0].mxu0
      %v1373 = vadd.f32 0.0, %v1372
      %v1374 = vpop.f32.mrb[0].mxu0
      %v1375 = vpop.f32.mrb[0].mxu0
      %v1376 = vadd.f32 0.0, %v1375
      %v1377 = vpop.f32.mrb[0].mxu0
      %1378 = vmatprep.mubr.bf16.mxu0 0
      %1379 = vmatmul.mubr.bf16.gmra.mrb[0].mxu0 %v1296
      %v1380 = vpop.f32.mrb[0].mxu0
      %v1381 = vadd.f32 0.0, %v1380
      %v1382 = vpop.f32.mrb[0].mxu0
      %v1383 = vpop.f32.mrb[0].mxu0
      %v1384 = vadd.f32 0.0, %v1383
      %v1385 = vpop.f32.mrb[0].mxu0
      %1386 = vmatprep.mubr.bf16.mxu0 0
      %1387 = vmatmul.mubr.bf16.gmra.mrb[0].mxu0 %v1297
      %v1388 = vpop.f32.mrb[0].mxu0
      %v1389 = vadd.f32 0.0, %v1388
      %v1390 = vpop.f32.mrb[0].mxu0
      %v1391 = vpop.f32.mrb[0].mxu0
      %v1392 = vadd.f32 0.0, %v1391
      %v1393 = vpop.f32.mrb[0].mxu0
      %1394 = vdwg.mxu0
      %v1395 = vpack.c.bf16 %v1336, %v1333
      %v1396 = vpack.c.bf16 %v1344, %v1341
      %v1397 = vpack.c.bf16 %v1352, %v1349
      %v1398 = vpack.c.bf16 %v1360, %v1357
      %v1399 = vpack.c.bf16 %v1368, %v1365
      %v1400 = vpack.c.bf16 %v1376, %v1373
      %v1401 = vpack.c.bf16 %v1384, %v1381
      %v1402 = vpack.c.bf16 %v1392, %v1389
      %1411 = vrot.lane.b32.xlu0 %v712, 112
      %v1412 = vpop.permute.xlu0 %1411
      %1413 = vrot.lane.b32.xlu0 %v713, 112
      %v1414 = vpop.permute.xlu0 %1413
      %1415 = vrot.lane.b32.xlu0 %v714, 112
      %v1416 = vpop.permute.xlu0 %1415
      %1417 = vrot.lane.b32.xlu0 %v715, 112
      %v1418 = vpop.permute.xlu0 %1417
      %1419 = vrot.lane.b32.xlu0 %v716, 112
      %v1420 = vpop.permute.xlu0 %1419
      %1421 = vrot.lane.b32.xlu0 %v717, 112
      %v1422 = vpop.permute.xlu0 %1421
      %1423 = vrot.lane.b32.xlu0 %v718, 112
      %v1424 = vpop.permute.xlu0 %1423
      %1425 = vrot.lane.b32.xlu0 %v719, 112
      %v1426 = vpop.permute.xlu0 %1425
      %1435 = vrot.lane.b32.xlu0 %v720, 112
      %v1436 = vpop.permute.xlu0 %1435
      %1437 = vrot.lane.b32.xlu0 %v721, 112
      %v1438 = vpop.permute.xlu0 %1437
      %1439 = vrot.lane.b32.xlu0 %v722, 112
      %v1440 = vpop.permute.xlu0 %1439
      %1441 = vrot.lane.b32.xlu0 %v723, 112
      %v1442 = vpop.permute.xlu0 %1441
      %1443 = vrot.lane.b32.xlu0 %v724, 112
      %v1444 = vpop.permute.xlu0 %1443
      %1445 = vrot.lane.b32.xlu0 %v725, 112
      %v1446 = vpop.permute.xlu0 %1445
      %1447 = vrot.lane.b32.xlu0 %v726, 112
      %v1448 = vpop.permute.xlu0 %1447
      %1449 = vrot.lane.b32.xlu0 %v727, 112
      %v1450 = vpop.permute.xlu0 %1449
      %v1452 = vsel %vm1000, %v1412, 0
      %v1455 = vsel %vm1000, %v1414, 0
      %v1458 = vsel %vm1000, %v1416, 0
      %v1461 = vsel %vm1000, %v1418, 0
      %v1464 = vsel %vm1000, %v1420, 0
      %v1467 = vsel %vm1000, %v1422, 0
      %v1470 = vsel %vm1000, %v1424, 0
      %v1473 = vsel %vm1000, %v1426, 0
      %v1476 = vsel %vm1000, %v1436, 0
      %v1479 = vsel %vm1000, %v1438, 0
      %v1482 = vsel %vm1000, %v1440, 0
      %v1485 = vsel %vm1000, %v1442, 0
      %v1488 = vsel %vm1000, %v1444, 0
      %v1491 = vsel %vm1000, %v1446, 0
      %v1494 = vsel %vm1000, %v1448, 0
      %v1497 = vsel %vm1000, %v1450, 0
      %1499 = vmatprep.subr.bf16.mxu0 0
      %1500 = vmatpush1.bf16.xpose.msra.mxu0 %v1476
      %1501 = vmatprep.subr.bf16.mxu0 0
      %1502 = vmatpush1.bf16.xpose.msra.mxu0 %v1479
      %1503 = vmatprep.subr.bf16.mxu0 0
      %1504 = vmatpush1.bf16.xpose.msra.mxu0 %v1482
      %1505 = vmatprep.subr.bf16.mxu0 0
      %1506 = vmatpush1.bf16.xpose.msra.mxu0 %v1485
      %1507 = vmatprep.subr.bf16.mxu0 0
      %1508 = vmatpush1.bf16.xpose.msra.mxu0 %v1488
      %1509 = vmatprep.subr.bf16.mxu0 0
      %1510 = vmatpush1.bf16.xpose.msra.mxu0 %v1491
      %1511 = vmatprep.subr.bf16.mxu0 0
      %1512 = vmatpush1.bf16.xpose.msra.mxu0 %v1494
      %1513 = vmatprep.subr.bf16.mxu0 0
      %1514 = vmatpush1.bf16.xpose.msra.mxu0 %v1497
      %1515 = vmatprep.subr.bf16.mxu0 0
      %1516 = vmatpush1.bf16.xpose.msra.mxu0 0
      %1517 = vmatprep.subr.bf16.mxu0 0
      %1518 = vmatpush1.bf16.xpose.msra.mxu0 0
      %1519 = vmatprep.subr.bf16.mxu0 0
      %1520 = vmatpush1.bf16.xpose.msra.mxu0 0
      %1521 = vmatprep.subr.bf16.mxu0 0
      %1522 = vmatpush1.bf16.xpose.msra.mxu0 0
      %1523 = vmatprep.subr.bf16.mxu0 0
      %1524 = vmatpush1.bf16.xpose.msra.mxu0 0
      %1525 = vmatprep.subr.bf16.mxu0 0
      %1526 = vmatpush1.bf16.xpose.msra.mxu0 0
      %1527 = vmatprep.subr.bf16.mxu0 0
      %1528 = vmatpush1.bf16.xpose.msra.mxu0 0
      %1529 = vmatprep.subr.bf16.mxu0 0
      %1530 = vmatpush1.bf16.xpose.msra.mxu0 0
      %1531 = vmatprep.mubr.bf16.mxu0 0
      %1532 = vmatmul.mubr.bf16.gmra.mrb[0].mxu0 %v1452
      %v1533 = vpop.f32.mrb[0].mxu0
      %v1534 = vadd.f32 %v968, %v1533
      %v1535 = vpop.f32.mrb[0].mxu0
      %v1536 = vpop.f32.mrb[0].mxu0
      %v1537 = vadd.f32 %v969, %v1536
      %v1538 = vpop.f32.mrb[0].mxu0
      %1539 = vmatprep.mubr.bf16.mxu0 0
      %1540 = vmatmul.mubr.bf16.gmra.mrb[0].mxu0 %v1455
      %v1541 = vpop.f32.mrb[0].mxu0
      %v1542 = vadd.f32 %v970, %v1541
      %v1543 = vpop.f32.mrb[0].mxu0
      %v1544 = vpop.f32.mrb[0].mxu0
      %v1545 = vadd.f32 %v971, %v1544
      %v1546 = vpop.f32.mrb[0].mxu0
      %1547 = vmatprep.mubr.bf16.mxu0 0
      %1548 = vmatmul.mubr.bf16.gmra.mrb[0].mxu0 %v1458
      %v1549 = vpop.f32.mrb[0].mxu0
      %v1550 = vadd.f32 %v972, %v1549
      %v1551 = vpop.f32.mrb[0].mxu0
      %v1552 = vpop.f32.mrb[0].mxu0
      %v1553 = vadd.f32 %v973, %v1552
      %v1554 = vpop.f32.mrb[0].mxu0
      %1555 = vmatprep.mubr.bf16.mxu0 0
      %1556 = vmatmul.mubr.bf16.gmra.mrb[0].mxu0 %v1461
      %v1557 = vpop.f32.mrb[0].mxu0
      %v1558 = vadd.f32 %v974, %v1557
      %v1559 = vpop.f32.mrb[0].mxu0
      %v1560 = vpop.f32.mrb[0].mxu0
      %v1561 = vadd.f32 %v975, %v1560
      %v1562 = vpop.f32.mrb[0].mxu0
      %1563 = vmatprep.mubr.bf16.mxu0 0
      %1564 = vmatmul.mubr.bf16.gmra.mrb[0].mxu0 %v1464
      %v1565 = vpop.f32.mrb[0].mxu0
      %v1566 = vadd.f32 %v976, %v1565
      %v1567 = vpop.f32.mrb[0].mxu0
      %v1568 = vpop.f32.mrb[0].mxu0
      %v1569 = vadd.f32 %v977, %v1568
      %v1570 = vpop.f32.mrb[0].mxu0
      %1571 = vmatprep.mubr.bf16.mxu0 0
      %1572 = vmatmul.mubr.bf16.gmra.mrb[0].mxu0 %v1467
      %v1573 = vpop.f32.mrb[0].mxu0
      %v1574 = vadd.f32 %v978, %v1573
      %v1575 = vpop.f32.mrb[0].mxu0
      %v1576 = vpop.f32.mrb[0].mxu0
      %v1577 = vadd.f32 %v979, %v1576
      %v1578 = vpop.f32.mrb[0].mxu0
      %1579 = vmatprep.mubr.bf16.mxu0 0
      %1580 = vmatmul.mubr.bf16.gmra.mrb[0].mxu0 %v1470
      %v1581 = vpop.f32.mrb[0].mxu0
      %v1582 = vadd.f32 %v980, %v1581
      %v1583 = vpop.f32.mrb[0].mxu0
      %v1584 = vpop.f32.mrb[0].mxu0
      %v1585 = vadd.f32 %v981, %v1584
      %v1586 = vpop.f32.mrb[0].mxu0
      %1587 = vmatprep.mubr.bf16.mxu0 0
      %1588 = vmatmul.mubr.bf16.gmra.mrb[0].mxu0 %v1473
      %v1589 = vpop.f32.mrb[0].mxu0
      %v1590 = vadd.f32 %v982, %v1589
      %v1591 = vpop.f32.mrb[0].mxu0
      %v1592 = vpop.f32.mrb[0].mxu0
      %v1593 = vadd.f32 %v983, %v1592
      %v1594 = vpop.f32.mrb[0].mxu0
      %1595 = vdwg.mxu0
      %1596 = vmax.xlane.f32.xlu0 %v1534
      %v1597 = vpop.xlane.xlu0 %1596
      %1598 = vmax.xlane.f32.xlu0 %v1537
      %v1599 = vpop.xlane.xlu0 %1598
      %1600 = vmax.xlane.f32.xlu0 %v1542
      %v1601 = vpop.xlane.xlu0 %1600
      %1602 = vmax.xlane.f32.xlu0 %v1545
      %v1603 = vpop.xlane.xlu0 %1602
      %1604 = vmax.xlane.f32.xlu0 %v1550
      %v1605 = vpop.xlane.xlu0 %1604
      %1606 = vmax.xlane.f32.xlu0 %v1553
      %v1607 = vpop.xlane.xlu0 %1606
      %1608 = vmax.xlane.f32.xlu0 %v1558
      %v1609 = vpop.xlane.xlu0 %1608
      %1610 = vmax.xlane.f32.xlu0 %v1561
      %v1611 = vpop.xlane.xlu0 %1610
      %1612 = vmax.xlane.f32.xlu0 %v1566
      %v1613 = vpop.xlane.xlu0 %1612
      %1614 = vmax.xlane.f32.xlu0 %v1569
      %v1615 = vpop.xlane.xlu0 %1614
      %1616 = vmax.xlane.f32.xlu0 %v1574
      %v1617 = vpop.xlane.xlu0 %1616
      %1618 = vmax.xlane.f32.xlu0 %v1577
      %v1619 = vpop.xlane.xlu0 %1618
      %1620 = vmax.xlane.f32.xlu0 %v1582
      %v1621 = vpop.xlane.xlu0 %1620
      %1622 = vmax.xlane.f32.xlu0 %v1585
      %v1623 = vpop.xlane.xlu0 %1622
      %1624 = vmax.xlane.f32.xlu0 %v1590
      %v1625 = vpop.xlane.xlu0 %1624
      %1626 = vmax.xlane.f32.xlu0 %v1593
      %v1627 = vpop.xlane.xlu0 %1626
      %v1628 = vsub.f32 %v1534, %v1597
      %v1629 = vsub.f32 %v1537, %v1599
      %v1630 = vsub.f32 %v1542, %v1601
      %v1631 = vsub.f32 %v1545, %v1603
      %v1632 = vsub.f32 %v1550, %v1605
      %v1633 = vsub.f32 %v1553, %v1607
      %v1634 = vsub.f32 %v1558, %v1609
      %v1635 = vsub.f32 %v1561, %v1611
      %v1636 = vsub.f32 %v1566, %v1613
      %v1637 = vsub.f32 %v1569, %v1615
      %v1638 = vsub.f32 %v1574, %v1617
      %v1639 = vsub.f32 %v1577, %v1619
      %v1640 = vsub.f32 %v1582, %v1621
      %v1641 = vsub.f32 %v1585, %v1623
      %v1642 = vsub.f32 %v1590, %v1625
      %v1643 = vsub.f32 %v1593, %v1627
      %v1644 = vmul.f32 %v1628, 1.442695
      %v1645 = vpow.pop %v1644
      %v1646 = vmul.f32 %v1629, 1.442695
      %v1647 = vpow.pop %v1646
      %v1648 = vmul.f32 %v1630, 1.442695
      %v1649 = vpow.pop %v1648
      %v1650 = vmul.f32 %v1631, 1.442695
      %v1651 = vpow.pop %v1650
      %v1652 = vmul.f32 %v1632, 1.442695
      %v1653 = vpow.pop %v1652
      %v1654 = vmul.f32 %v1633, 1.442695
      %v1655 = vpow.pop %v1654
      %v1656 = vmul.f32 %v1634, 1.442695
      %v1657 = vpow.pop %v1656
      %v1658 = vmul.f32 %v1635, 1.442695
      %v1659 = vpow.pop %v1658
      %v1660 = vmul.f32 %v1636, 1.442695
      %v1661 = vpow.pop %v1660
      %v1662 = vmul.f32 %v1637, 1.442695
      %v1663 = vpow.pop %v1662
      %v1664 = vmul.f32 %v1638, 1.442695
      %v1665 = vpow.pop %v1664
      %v1666 = vmul.f32 %v1639, 1.442695
      %v1667 = vpow.pop %v1666
      %v1668 = vmul.f32 %v1640, 1.442695
      %v1669 = vpow.pop %v1668
      %v1670 = vmul.f32 %v1641, 1.442695
      %v1671 = vpow.pop %v1670
      %v1672 = vmul.f32 %v1642, 1.442695
      %v1673 = vpow.pop %v1672
      %v1674 = vmul.f32 %v1643, 1.442695
      %v1675 = vpow.pop %v1674
      %1676 = vadd.xlane.f32.xlu0 %v1645
      %v1677 = vpop.xlane.xlu0 %1676
      %1678 = vadd.xlane.f32.xlu0 %v1647
      %v1679 = vpop.xlane.xlu0 %1678
      %1680 = vadd.xlane.f32.xlu0 %v1649
      %v1681 = vpop.xlane.xlu0 %1680
      %1682 = vadd.xlane.f32.xlu0 %v1651
      %v1683 = vpop.xlane.xlu0 %1682
      %1684 = vadd.xlane.f32.xlu0 %v1653
      %v1685 = vpop.xlane.xlu0 %1684
      %1686 = vadd.xlane.f32.xlu0 %v1655
      %v1687 = vpop.xlane.xlu0 %1686
      %1688 = vadd.xlane.f32.xlu0 %v1657
      %v1689 = vpop.xlane.xlu0 %1688
      %1690 = vadd.xlane.f32.xlu0 %v1659
      %v1691 = vpop.xlane.xlu0 %1690
      %1692 = vadd.xlane.f32.xlu0 %v1661
      %v1693 = vpop.xlane.xlu0 %1692
      %1694 = vadd.xlane.f32.xlu0 %v1663
      %v1695 = vpop.xlane.xlu0 %1694
      %1696 = vadd.xlane.f32.xlu0 %v1665
      %v1697 = vpop.xlane.xlu0 %1696
      %1698 = vadd.xlane.f32.xlu0 %v1667
      %v1699 = vpop.xlane.xlu0 %1698
      %1700 = vadd.xlane.f32.xlu0 %v1669
      %v1701 = vpop.xlane.xlu0 %1700
      %1702 = vadd.xlane.f32.xlu0 %v1671
      %v1703 = vpop.xlane.xlu0 %1702
      %1704 = vadd.xlane.f32.xlu0 %v1673
      %v1705 = vpop.xlane.xlu0 %1704
      %1706 = vadd.xlane.f32.xlu0 %v1675
      %v1707 = vpop.xlane.xlu0 %1706
      %v1708 = vrcp.pop %v1677
      %v1709 = vrcp.pop %v1679
      %v1710 = vrcp.pop %v1681
      %v1711 = vrcp.pop %v1683
      %v1712 = vrcp.pop %v1685
      %v1713 = vrcp.pop %v1687
      %v1714 = vrcp.pop %v1689
      %v1715 = vrcp.pop %v1691
      %v1716 = vrcp.pop %v1693
      %v1717 = vrcp.pop %v1695
      %v1718 = vrcp.pop %v1697
      %v1719 = vrcp.pop %v1699
      %v1720 = vrcp.pop %v1701
      %v1721 = vrcp.pop %v1703
      %v1722 = vrcp.pop %v1705
      %v1723 = vrcp.pop %v1707
      %v1724 = vmul.f32 %v1645, %v1708
      %v1725 = vmul.f32 %v1647, %v1709
      %v1726 = vmul.f32 %v1649, %v1710
      %v1727 = vmul.f32 %v1651, %v1711
      %v1728 = vmul.f32 %v1653, %v1712
      %v1729 = vmul.f32 %v1655, %v1713
      %v1730 = vmul.f32 %v1657, %v1714
      %v1731 = vmul.f32 %v1659, %v1715
      %v1732 = vmul.f32 %v1661, %v1716
      %v1733 = vmul.f32 %v1663, %v1717
      %v1734 = vmul.f32 %v1665, %v1718
      %v1735 = vmul.f32 %v1667, %v1719
      %v1736 = vmul.f32 %v1669, %v1720
      %v1737 = vmul.f32 %v1671, %v1721
      %v1738 = vmul.f32 %v1673, %v1722
      %v1739 = vmul.f32 %v1675, %v1723
      %v1740 = vpack.c.bf16 %v1725, %v1724
      %v1741 = vpack.c.bf16 %v1727, %v1726
      %v1742 = vpack.c.bf16 %v1729, %v1728
      %v1743 = vpack.c.bf16 %v1731, %v1730
      %v1744 = vpack.c.bf16 %v1733, %v1732
      %v1745 = vpack.c.bf16 %v1735, %v1734
      %v1746 = vpack.c.bf16 %v1737, %v1736
      %v1747 = vpack.c.bf16 %v1739, %v1738
      %1756 = vrot.lane.b32.xlu0 %v944, 112
      %v1757 = vpop.permute.xlu0 %1756
      %1758 = vrot.lane.b32.xlu0 %v945, 112
      %v1759 = vpop.permute.xlu0 %1758
      %1760 = vrot.lane.b32.xlu0 %v946, 112
      %v1761 = vpop.permute.xlu0 %1760
      %1762 = vrot.lane.b32.xlu0 %v947, 112
      %v1763 = vpop.permute.xlu0 %1762
      %1764 = vrot.lane.b32.xlu0 %v948, 112
      %v1765 = vpop.permute.xlu0 %1764
      %1766 = vrot.lane.b32.xlu0 %v949, 112
      %v1767 = vpop.permute.xlu0 %1766
      %1768 = vrot.lane.b32.xlu0 %v950, 112
      %v1769 = vpop.permute.xlu0 %1768
      %1770 = vrot.lane.b32.xlu0 %v951, 112
      %v1771 = vpop.permute.xlu0 %1770
      %1780 = vmatprep.subr.bf16.mxu0 0
      %1781 = vmatpush1.bf16.msra.mxu0 %v1757
      %1782 = vmatprep.subr.bf16.mxu0 0
      %1783 = vmatpush1.bf16.msra.mxu0 %v1759
      %1784 = vmatprep.subr.bf16.mxu0 0
      %1785 = vmatpush1.bf16.msra.mxu0 %v1761
      %1786 = vmatprep.subr.bf16.mxu0 0
      %1787 = vmatpush1.bf16.msra.mxu0 %v1763
      %1788 = vmatprep.subr.bf16.mxu0 0
      %1789 = vmatpush1.bf16.msra.mxu0 %v1765
      %1790 = vmatprep.subr.bf16.mxu0 0
      %1791 = vmatpush1.bf16.msra.mxu0 %v1767
      %1792 = vmatprep.subr.bf16.mxu0 0
      %1793 = vmatpush1.bf16.msra.mxu0 %v1769
      %1794 = vmatprep.subr.bf16.mxu0 0
      %1795 = vmatpush1.bf16.msra.mxu0 %v1771
      %1796 = vmatprep.subr.bf16.mxu0 0
      %1797 = vmatpush1.bf16.msra.mxu0 0
      %1798 = vmatprep.subr.bf16.mxu0 0
      %1799 = vmatpush1.bf16.msra.mxu0 0
      %1800 = vmatprep.subr.bf16.mxu0 0
      %1801 = vmatpush1.bf16.msra.mxu0 0
      %1802 = vmatprep.subr.bf16.mxu0 0
      %1803 = vmatpush1.bf16.msra.mxu0 0
      %1804 = vmatprep.subr.bf16.mxu0 0
      %1805 = vmatpush1.bf16.msra.mxu0 0
      %1806 = vmatprep.subr.bf16.mxu0 0
      %1807 = vmatpush1.bf16.msra.mxu0 0
      %1808 = vmatprep.subr.bf16.mxu0 0
      %1809 = vmatpush1.bf16.msra.mxu0 0
      %1810 = vmatprep.subr.bf16.mxu0 0
      %1811 = vmatpush1.bf16.msra.mxu0 0
      %1812 = vmatprep.mubr.bf16.mxu0 0
      %1813 = vmatmul.mubr.bf16.gmra.mrb[0].mxu0 %v1740
      %v1814 = vpop.f32.mrb[0].mxu0
      %v1815 = vadd.f32 0.0, %v1814
      %v1816 = vpop.f32.mrb[0].mxu0
      %v1817 = vpop.f32.mrb[0].mxu0
      %v1818 = vadd.f32 0.0, %v1817
      %v1819 = vpop.f32.mrb[0].mxu0
      %1820 = vmatprep.mubr.bf16.mxu0 0
      %1821 = vmatmul.mubr.bf16.gmra.mrb[0].mxu0 %v1741
      %v1822 = vpop.f32.mrb[0].mxu0
      %v1823 = vadd.f32 0.0, %v1822
      %v1824 = vpop.f32.mrb[0].mxu0
      %v1825 = vpop.f32.mrb[0].mxu0
      %v1826 = vadd.f32 0.0, %v1825
      %v1827 = vpop.f32.mrb[0].mxu0
      %1828 = vmatprep.mubr.bf16.mxu0 0
      %1829 = vmatmul.mubr.bf16.gmra.mrb[0].mxu0 %v1742
      %v1830 = vpop.f32.mrb[0].mxu0
      %v1831 = vadd.f32 0.0, %v1830
      %v1832 = vpop.f32.mrb[0].mxu0
      %v1833 = vpop.f32.mrb[0].mxu0
      %v1834 = vadd.f32 0.0, %v1833
      %v1835 = vpop.f32.mrb[0].mxu0
      %1836 = vmatprep.mubr.bf16.mxu0 0
      %1837 = vmatmul.mubr.bf16.gmra.mrb[0].mxu0 %v1743
      %v1838 = vpop.f32.mrb[0].mxu0
      %v1839 = vadd.f32 0.0, %v1838
      %v1840 = vpop.f32.mrb[0].mxu0
      %v1841 = vpop.f32.mrb[0].mxu0
      %v1842 = vadd.f32 0.0, %v1841
      %v1843 = vpop.f32.mrb[0].mxu0
      %1844 = vmatprep.mubr.bf16.mxu0 0
      %1845 = vmatmul.mubr.bf16.gmra.mrb[0].mxu0 %v1744
      %v1846 = vpop.f32.mrb[0].mxu0
      %v1847 = vadd.f32 0.0, %v1846
      %v1848 = vpop.f32.mrb[0].mxu0
      %v1849 = vpop.f32.mrb[0].mxu0
      %v1850 = vadd.f32 0.0, %v1849
      %v1851 = vpop.f32.mrb[0].mxu0
      %1852 = vmatprep.mubr.bf16.mxu0 0
      %1853 = vmatmul.mubr.bf16.gmra.mrb[0].mxu0 %v1745
      %v1854 = vpop.f32.mrb[0].mxu0
      %v1855 = vadd.f32 0.0, %v1854
      %v1856 = vpop.f32.mrb[0].mxu0
      %v1857 = vpop.f32.mrb[0].mxu0
      %v1858 = vadd.f32 0.0, %v1857
      %v1859 = vpop.f32.mrb[0].mxu0
      %1860 = vmatprep.mubr.bf16.mxu0 0
      %1861 = vmatmul.mubr.bf16.gmra.mrb[0].mxu0 %v1746
      %v1862 = vpop.f32.mrb[0].mxu0
      %v1863 = vadd.f32 0.0, %v1862
      %v1864 = vpop.f32.mrb[0].mxu0
      %v1865 = vpop.f32.mrb[0].mxu0
      %v1866 = vadd.f32 0.0, %v1865
      %v1867 = vpop.f32.mrb[0].mxu0
      %1868 = vmatprep.mubr.bf16.mxu0 0
      %1869 = vmatmul.mubr.bf16.gmra.mrb[0].mxu0 %v1747
      %v1870 = vpop.f32.mrb[0].mxu0
      %v1871 = vadd.f32 0.0, %v1870
      %v1872 = vpop.f32.mrb[0].mxu0
      %v1873 = vpop.f32.mrb[0].mxu0
      %v1874 = vadd.f32 0.0, %v1873
      %v1875 = vpop.f32.mrb[0].mxu0
      %1876 = vdwg.mxu0
      %v1877 = vpack.c.bf16 %v1818, %v1815
      %v1878 = vpack.c.bf16 %v1826, %v1823
      %v1879 = vpack.c.bf16 %v1834, %v1831
      %v1880 = vpack.c.bf16 %v1842, %v1839
      %v1881 = vpack.c.bf16 %v1850, %v1847
      %v1882 = vpack.c.bf16 %v1858, %v1855
      %v1883 = vpack.c.bf16 %v1866, %v1863
      %v1884 = vpack.c.bf16 %v1874, %v1871
      %v1887 = vunpack.c.l.b16 %v986
      %v1888 = vunpack.c.l.b16 %v987
      %v1889 = vpack.c.b16 %v1888, %v1887
      %v1892 = vsel %vm1000, %v1877, 0
      %v1895 = vsel %vm1000, %v1878, 0
      %v1898 = vsel %vm1000, %v1879, 0
      %v1901 = vsel %vm1000, %v1880, 0
      %v1904 = vsel %vm1000, %v1881, 0
      %v1907 = vsel %vm1000, %v1882, 0
      %v1910 = vsel %vm1000, %v1883, 0
      %v1913 = vsel %vm1000, %v1884, 0
      %1915 = vmatprep.subr.bf16.mxu0 0
      %1916 = vmatpush1.bf16.msra.mxu0 %v1889
      %1917 = vmatprep.subr.bf16.mxu0 0
      %1918 = vmatpush1.bf16.msra.mxu0 0
      %1919 = vmatprep.subr.bf16.mxu0 0
      %1920 = vmatpush1.bf16.msra.mxu0 0
      %1921 = vmatprep.subr.bf16.mxu0 0
      %1922 = vmatpush1.bf16.msra.mxu0 0
      %1923 = vmatprep.subr.bf16.mxu0 0
      %1924 = vmatpush1.bf16.msra.mxu0 0
      %1925 = vmatprep.subr.bf16.mxu0 0
      %1926 = vmatpush1.bf16.msra.mxu0 0
      %1927 = vmatprep.subr.bf16.mxu0 0
      %1928 = vmatpush1.bf16.msra.mxu0 0
      %1929 = vmatprep.subr.bf16.mxu0 0
      %1930 = vmatpush1.bf16.msra.mxu0 0
      %1931 = vmatprep.subr.bf16.mxu0 0
      %1932 = vmatpush1.bf16.msra.mxu0 0
      %1933 = vmatprep.subr.bf16.mxu0 0
      %1934 = vmatpush1.bf16.msra.mxu0 0
      %1935 = vmatprep.subr.bf16.mxu0 0
      %1936 = vmatpush1.bf16.msra.mxu0 0
      %1937 = vmatprep.subr.bf16.mxu0 0
      %1938 = vmatpush1.bf16.msra.mxu0 0
      %1939 = vmatprep.subr.bf16.mxu0 0
      %1940 = vmatpush1.bf16.msra.mxu0 0
      %1941 = vmatprep.subr.bf16.mxu0 0
      %1942 = vmatpush1.bf16.msra.mxu0 0
      %1943 = vmatprep.subr.bf16.mxu0 0
      %1944 = vmatpush1.bf16.msra.mxu0 0
      %1945 = vmatprep.subr.bf16.mxu0 0
      %1946 = vmatpush1.bf16.msra.mxu0 0
      %1947 = vmatprep.mubr.bf16.mxu0 0
      %1948 = vmatmul.mubr.bf16.gmra.mrb[0].mxu0 %v1892
      %v1949 = vpop.f32.mrb[0].mxu0
      %v1950 = vadd.f32 0.0, %v1949
      %v1951 = vpop.f32.mrb[0].mxu0
      %v1952 = vpop.f32.mrb[0].mxu0
      %v1953 = vadd.f32 0.0, %v1952
      %v1954 = vpop.f32.mrb[0].mxu0
      %1955 = vmatprep.mubr.bf16.mxu0 0
      %1956 = vmatmul.mubr.bf16.gmra.mrb[0].mxu0 %v1895
      %v1957 = vpop.f32.mrb[0].mxu0
      %v1958 = vadd.f32 0.0, %v1957
      %v1959 = vpop.f32.mrb[0].mxu0
      %v1960 = vpop.f32.mrb[0].mxu0
      %v1961 = vadd.f32 0.0, %v1960
      %v1962 = vpop.f32.mrb[0].mxu0
      %1963 = vmatprep.mubr.bf16.mxu0 0
      %1964 = vmatmul.mubr.bf16.gmra.mrb[0].mxu0 %v1898
      %v1965 = vpop.f32.mrb[0].mxu0
      %v1966 = vadd.f32 0.0, %v1965
      %v1967 = vpop.f32.mrb[0].mxu0
      %v1968 = vpop.f32.mrb[0].mxu0
      %v1969 = vadd.f32 0.0, %v1968
      %v1970 = vpop.f32.mrb[0].mxu0
      %1971 = vmatprep.mubr.bf16.mxu0 0
      %1972 = vmatmul.mubr.bf16.gmra.mrb[0].mxu0 %v1901
      %v1973 = vpop.f32.mrb[0].mxu0
      %v1974 = vadd.f32 0.0, %v1973
      %v1975 = vpop.f32.mrb[0].mxu0
      %v1976 = vpop.f32.mrb[0].mxu0
      %v1977 = vadd.f32 0.0, %v1976
      %v1978 = vpop.f32.mrb[0].mxu0
      %1979 = vmatprep.mubr.bf16.mxu0 0
      %1980 = vmatmul.mubr.bf16.gmra.mrb[0].mxu0 %v1904
      %v1981 = vpop.f32.mrb[0].mxu0
      %v1982 = vadd.f32 0.0, %v1981
      %v1983 = vpop.f32.mrb[0].mxu0
      %v1984 = vpop.f32.mrb[0].mxu0
      %v1985 = vadd.f32 0.0, %v1984
      %v1986 = vpop.f32.mrb[0].mxu0
      %1987 = vmatprep.mubr.bf16.mxu0 0
      %1988 = vmatmul.mubr.bf16.gmra.mrb[0].mxu0 %v1907
      %v1989 = vpop.f32.mrb[0].mxu0
      %v1990 = vadd.f32 0.0, %v1989
      %v1991 = vpop.f32.mrb[0].mxu0
      %v1992 = vpop.f32.mrb[0].mxu0
      %v1993 = vadd.f32 0.0, %v1992
      %v1994 = vpop.f32.mrb[0].mxu0
      %1995 = vmatprep.mubr.bf16.mxu0 0
      %1996 = vmatmul.mubr.bf16.gmra.mrb[0].mxu0 %v1910
      %v1997 = vpop.f32.mrb[0].mxu0
      %v1998 = vadd.f32 0.0, %v1997
      %v1999 = vpop.f32.mrb[0].mxu0
      %v2000 = vpop.f32.mrb[0].mxu0
      %v2001 = vadd.f32 0.0, %v2000
      %v2002 = vpop.f32.mrb[0].mxu0
      %2003 = vmatprep.mubr.bf16.mxu0 0
      %2004 = vmatmul.mubr.bf16.gmra.mrb[0].mxu0 %v1913
      %v2005 = vpop.f32.mrb[0].mxu0
      %v2006 = vadd.f32 0.0, %v2005
      %v2007 = vpop.f32.mrb[0].mxu0
      %v2008 = vpop.f32.mrb[0].mxu0
      %v2009 = vadd.f32 0.0, %v2008
      %v2010 = vpop.f32.mrb[0].mxu0
      %2011 = vdwg.mxu0
      %v2014 = vunpack.c.l.b16 %v984
      %v2015 = vunpack.c.l.b16 %v985
      %v2016 = vpack.c.b16 %v2015, %v2014
      %v2019 = vsel %vm1000, %v1395, 0
      %v2022 = vsel %vm1000, %v1396, 0
      %v2025 = vsel %vm1000, %v1397, 0
      %v2028 = vsel %vm1000, %v1398, 0
      %v2031 = vsel %vm1000, %v1399, 0
      %v2034 = vsel %vm1000, %v1400, 0
      %v2037 = vsel %vm1000, %v1401, 0
      %v2040 = vsel %vm1000, %v1402, 0
      %2042 = vmatprep.subr.bf16.mxu0 0
      %2043 = vmatpush1.bf16.msra.mxu0 %v2016
      %2044 = vmatprep.subr.bf16.mxu0 0
      %2045 = vmatpush1.bf16.msra.mxu0 0
      %2046 = vmatprep.subr.bf16.mxu0 0
      %2047 = vmatpush1.bf16.msra.mxu0 0
      %2048 = vmatprep.subr.bf16.mxu0 0
      %2049 = vmatpush1.bf16.msra.mxu0 0
      %2050 = vmatprep.subr.bf16.mxu0 0
      %2051 = vmatpush1.bf16.msra.mxu0 0
      %2052 = vmatprep.subr.bf16.mxu0 0
      %2053 = vmatpush1.bf16.msra.mxu0 0
      %2054 = vmatprep.subr.bf16.mxu0 0
      %2055 = vmatpush1.bf16.msra.mxu0 0
      %2056 = vmatprep.subr.bf16.mxu0 0
      %2057 = vmatpush1.bf16.msra.mxu0 0
      %2058 = vmatprep.subr.bf16.mxu0 0
      %2059 = vmatpush1.bf16.msra.mxu0 0
      %2060 = vmatprep.subr.bf16.mxu0 0
      %2061 = vmatpush1.bf16.msra.mxu0 0
      %2062 = vmatprep.subr.bf16.mxu0 0
      %2063 = vmatpush1.bf16.msra.mxu0 0
      %2064 = vmatprep.subr.bf16.mxu0 0
      %2065 = vmatpush1.bf16.msra.mxu0 0
      %2066 = vmatprep.subr.bf16.mxu0 0
      %2067 = vmatpush1.bf16.msra.mxu0 0
      %2068 = vmatprep.subr.bf16.mxu0 0
      %2069 = vmatpush1.bf16.msra.mxu0 0
      %2070 = vmatprep.subr.bf16.mxu0 0
      %2071 = vmatpush1.bf16.msra.mxu0 0
      %2072 = vmatprep.subr.bf16.mxu0 0
      %2073 = vmatpush1.bf16.msra.mxu0 0
      %2074 = vmatprep.mubr.bf16.mxu0 0
      %2075 = vmatmul.mubr.bf16.gmra.mrb[0].mxu0 %v2019
      %v2076 = vpop.f32.mrb[0].mxu0
      %v2077 = vadd.f32 %v1950, %v2076
      %v2078 = vpop.f32.mrb[0].mxu0
      %v2079 = vpop.f32.mrb[0].mxu0
      %v2080 = vadd.f32 %v1953, %v2079
      %v2081 = vpop.f32.mrb[0].mxu0
      %2082 = vmatprep.mubr.bf16.mxu0 0
      %2083 = vmatmul.mubr.bf16.gmra.mrb[0].mxu0 %v2022
      %v2084 = vpop.f32.mrb[0].mxu0
      %v2085 = vadd.f32 %v1958, %v2084
      %v2086 = vpop.f32.mrb[0].mxu0
      %v2087 = vpop.f32.mrb[0].mxu0
      %v2088 = vadd.f32 %v1961, %v2087
      %v2089 = vpop.f32.mrb[0].mxu0
      %2090 = vmatprep.mubr.bf16.mxu0 0
      %2091 = vmatmul.mubr.bf16.gmra.mrb[0].mxu0 %v2025
      %v2092 = vpop.f32.mrb[0].mxu0
      %v2093 = vadd.f32 %v1966, %v2092
      %v2094 = vpop.f32.mrb[0].mxu0
      %v2095 = vpop.f32.mrb[0].mxu0
      %v2096 = vadd.f32 %v1969, %v2095
      %v2097 = vpop.f32.mrb[0].mxu0
      %2098 = vmatprep.mubr.bf16.mxu0 0
      %2099 = vmatmul.mubr.bf16.gmra.mrb[0].mxu0 %v2028
      %v2100 = vpop.f32.mrb[0].mxu0
      %v2101 = vadd.f32 %v1974, %v2100
      %v2102 = vpop.f32.mrb[0].mxu0
      %v2103 = vpop.f32.mrb[0].mxu0
      %v2104 = vadd.f32 %v1977, %v2103
      %v2105 = vpop.f32.mrb[0].mxu0
      %2106 = vmatprep.mubr.bf16.mxu0 0
      %2107 = vmatmul.mubr.bf16.gmra.mrb[0].mxu0 %v2031
      %v2108 = vpop.f32.mrb[0].mxu0
      %v2109 = vadd.f32 %v1982, %v2108
      %v2110 = vpop.f32.mrb[0].mxu0
      %v2111 = vpop.f32.mrb[0].mxu0
      %v2112 = vadd.f32 %v1985, %v2111
      %v2113 = vpop.f32.mrb[0].mxu0
      %2114 = vmatprep.mubr.bf16.mxu0 0
      %2115 = vmatmul.mubr.bf16.gmra.mrb[0].mxu0 %v2034
      %v2116 = vpop.f32.mrb[0].mxu0
      %v2117 = vadd.f32 %v1990, %v2116
      %v2118 = vpop.f32.mrb[0].mxu0
      %v2119 = vpop.f32.mrb[0].mxu0
      %v2120 = vadd.f32 %v1993, %v2119
      %v2121 = vpop.f32.mrb[0].mxu0
      %2122 = vmatprep.mubr.bf16.mxu0 0
      %2123 = vmatmul.mubr.bf16.gmra.mrb[0].mxu0 %v2037
      %v2124 = vpop.f32.mrb[0].mxu0
      %v2125 = vadd.f32 %v1998, %v2124
      %v2126 = vpop.f32.mrb[0].mxu0
      %v2127 = vpop.f32.mrb[0].mxu0
      %v2128 = vadd.f32 %v2001, %v2127
      %v2129 = vpop.f32.mrb[0].mxu0
      %2130 = vmatprep.mubr.bf16.mxu0 0
      %2131 = vmatmul.mubr.bf16.gmra.mrb[0].mxu0 %v2040
      %v2132 = vpop.f32.mrb[0].mxu0
      %v2133 = vadd.f32 %v2006, %v2132
      %v2134 = vpop.f32.mrb[0].mxu0
      %v2135 = vpop.f32.mrb[0].mxu0
      %v2136 = vadd.f32 %v2009, %v2135
      %v2137 = vpop.f32.mrb[0].mxu0
      %2138 = vdwg.mxu0
      %2139 = vrot.lane.b32.xlu0 %v712, 96
      %v2140 = vpop.permute.xlu0 %2139
      %2141 = vrot.lane.b32.xlu0 %v713, 96
      %v2142 = vpop.permute.xlu0 %2141
      %2143 = vrot.lane.b32.xlu0 %v714, 96
      %v2144 = vpop.permute.xlu0 %2143
      %2145 = vrot.lane.b32.xlu0 %v715, 96
      %v2146 = vpop.permute.xlu0 %2145
      %2147 = vrot.lane.b32.xlu0 %v716, 96
      %v2148 = vpop.permute.xlu0 %2147
      %2149 = vrot.lane.b32.xlu0 %v717, 96
      %v2150 = vpop.permute.xlu0 %2149
      %2151 = vrot.lane.b32.xlu0 %v718, 96
      %v2152 = vpop.permute.xlu0 %2151
      %2153 = vrot.lane.b32.xlu0 %v719, 96
      %v2154 = vpop.permute.xlu0 %2153
      %2155 = vrot.lane.b32.xlu0 %v720, 96
      %v2156 = vpop.permute.xlu0 %2155
      %2157 = vrot.lane.b32.xlu0 %v721, 96
      %v2158 = vpop.permute.xlu0 %2157
      %2159 = vrot.lane.b32.xlu0 %v722, 96
      %v2160 = vpop.permute.xlu0 %2159
      %2161 = vrot.lane.b32.xlu0 %v723, 96
      %v2162 = vpop.permute.xlu0 %2161
      %2163 = vrot.lane.b32.xlu0 %v724, 96
      %v2164 = vpop.permute.xlu0 %2163
      %2165 = vrot.lane.b32.xlu0 %v725, 96
      %v2166 = vpop.permute.xlu0 %2165
      %2167 = vrot.lane.b32.xlu0 %v726, 96
      %v2168 = vpop.permute.xlu0 %2167
      %2169 = vrot.lane.b32.xlu0 %v727, 96
      %v2170 = vpop.permute.xlu0 %2169
      %v2172 = vsel %vm1000, %v2140, 0
      %v2175 = vsel %vm1000, %v2142, 0
      %v2178 = vsel %vm1000, %v2144, 0
      %v2181 = vsel %vm1000, %v2146, 0
      %v2184 = vsel %vm1000, %v2148, 0
      %v2187 = vsel %vm1000, %v2150, 0
      %v2190 = vsel %vm1000, %v2152, 0
      %v2193 = vsel %vm1000, %v2154, 0
      %v2196 = vsel %vm1000, %v2156, 0
      %v2199 = vsel %vm1000, %v2158, 0
      %v2202 = vsel %vm1000, %v2160, 0
      %v2205 = vsel %vm1000, %v2162, 0
      %v2208 = vsel %vm1000, %v2164, 0
      %v2211 = vsel %vm1000, %v2166, 0
      %v2214 = vsel %vm1000, %v2168, 0
      %v2217 = vsel %vm1000, %v2170, 0
      %2219 = vmatprep.subr.bf16.mxu0 0
      %2220 = vmatpush1.bf16.xpose.msra.mxu0 %v2196
      %2221 = vmatprep.subr.bf16.mxu0 0
      %2222 = vmatpush1.bf16.xpose.msra.mxu0 %v2199
      %2223 = vmatprep.subr.bf16.mxu0 0
      %2224 = vmatpush1.bf16.xpose.msra.mxu0 %v2202
      %2225 = vmatprep.subr.bf16.mxu0 0
      %2226 = vmatpush1.bf16.xpose.msra.mxu0 %v2205
      %2227 = vmatprep.subr.bf16.mxu0 0
      %2228 = vmatpush1.bf16.xpose.msra.mxu0 %v2208
      %2229 = vmatprep.subr.bf16.mxu0 0
      %2230 = vmatpush1.bf16.xpose.msra.mxu0 %v2211
      %2231 = vmatprep.subr.bf16.mxu0 0
      %2232 = vmatpush1.bf16.xpose.msra.mxu0 %v2214
      %2233 = vmatprep.subr.bf16.mxu0 0
      %2234 = vmatpush1.bf16.xpose.msra.mxu0 %v2217
      %2235 = vmatprep.subr.bf16.mxu0 0
      %2236 = vmatpush1.bf16.xpose.msra.mxu0 0
      %2237 = vmatprep.subr.bf16.mxu0 0
      %2238 = vmatpush1.bf16.xpose.msra.mxu0 0
      %2239 = vmatprep.subr.bf16.mxu0 0
      %2240 = vmatpush1.bf16.xpose.msra.mxu0 0
      %2241 = vmatprep.subr.bf16.mxu0 0
      %2242 = vmatpush1.bf16.xpose.msra.mxu0 0
      %2243 = vmatprep.subr.bf16.mxu0 0
      %2244 = vmatpush1.bf16.xpose.msra.mxu0 0
      %2245 = vmatprep.subr.bf16.mxu0 0
      %2246 = vmatpush1.bf16.xpose.msra.mxu0 0
      %2247 = vmatprep.subr.bf16.mxu0 0
      %2248 = vmatpush1.bf16.xpose.msra.mxu0 0
      %2249 = vmatprep.subr.bf16.mxu0 0
      %2250 = vmatpush1.bf16.xpose.msra.mxu0 0
      %2251 = vmatprep.mubr.bf16.mxu0 0
      %2252 = vmatmul.mubr.bf16.gmra.mrb[0].mxu0 %v2172
      %v2253 = vpop.f32.mrb[0].mxu0
      %v2254 = vadd.f32 %v968, %v2253
      %v2255 = vpop.f32.mrb[0].mxu0
      %v2256 = vpop.f32.mrb[0].mxu0
      %v2257 = vadd.f32 %v969, %v2256
      %v2258 = vpop.f32.mrb[0].mxu0
      %2259 = vmatprep.mubr.bf16.mxu0 0
      %2260 = vmatmul.mubr.bf16.gmra.mrb[0].mxu0 %v2175
      %v2261 = vpop.f32.mrb[0].mxu0
      %v2262 = vadd.f32 %v970, %v2261
      %v2263 = vpop.f32.mrb[0].mxu0
      %v2264 = vpop.f32.mrb[0].mxu0
      %v2265 = vadd.f32 %v971, %v2264
      %v2266 = vpop.f32.mrb[0].mxu0
      %2267 = vmatprep.mubr.bf16.mxu0 0
      %2268 = vmatmul.mubr.bf16.gmra.mrb[0].mxu0 %v2178
      %v2269 = vpop.f32.mrb[0].mxu0
      %v2270 = vadd.f32 %v972, %v2269
      %v2271 = vpop.f32.mrb[0].mxu0
      %v2272 = vpop.f32.mrb[0].mxu0
      %v2273 = vadd.f32 %v973, %v2272
      %v2274 = vpop.f32.mrb[0].mxu0
      %2275 = vmatprep.mubr.bf16.mxu0 0
      %2276 = vmatmul.mubr.bf16.gmra.mrb[0].mxu0 %v2181
      %v2277 = vpop.f32.mrb[0].mxu0
      %v2278 = vadd.f32 %v974, %v2277
      %v2279 = vpop.f32.mrb[0].mxu0
      %v2280 = vpop.f32.mrb[0].mxu0
      %v2281 = vadd.f32 %v975, %v2280
      %v2282 = vpop.f32.mrb[0].mxu0
      %2283 = vmatprep.mubr.bf16.mxu0 0
      %2284 = vmatmul.mubr.bf16.gmra.mrb[0].mxu0 %v2184
      %v2285 = vpop.f32.mrb[0].mxu0
      %v2286 = vadd.f32 %v976, %v2285
      %v2287 = vpop.f32.mrb[0].mxu0
      %v2288 = vpop.f32.mrb[0].mxu0
      %v2289 = vadd.f32 %v977, %v2288
      %v2290 = vpop.f32.mrb[0].mxu0
      %2291 = vmatprep.mubr.bf16.mxu0 0
      %2292 = vmatmul.mubr.bf16.gmra.mrb[0].mxu0 %v2187
      %v2293 = vpop.f32.mrb[0].mxu0
      %v2294 = vadd.f32 %v978, %v2293
      %v2295 = vpop.f32.mrb[0].mxu0
      %v2296 = vpop.f32.mrb[0].mxu0
      %v2297 = vadd.f32 %v979, %v2296
      %v2298 = vpop.f32.mrb[0].mxu0
      %2299 = vmatprep.mubr.bf16.mxu0 0
      %2300 = vmatmul.mubr.bf16.gmra.mrb[0].mxu0 %v2190
      %v2301 = vpop.f32.mrb[0].mxu0
      %v2302 = vadd.f32 %v980, %v2301
      %v2303 = vpop.f32.mrb[0].mxu0
      %v2304 = vpop.f32.mrb[0].mxu0
      %v2305 = vadd.f32 %v981, %v2304
      %v2306 = vpop.f32.mrb[0].mxu0
      %2307 = vmatprep.mubr.bf16.mxu0 0
      %2308 = vmatmul.mubr.bf16.gmra.mrb[0].mxu0 %v2193
      %v2309 = vpop.f32.mrb[0].mxu0
      %v2310 = vadd.f32 %v982, %v2309
      %v2311 = vpop.f32.mrb[0].mxu0
      %v2312 = vpop.f32.mrb[0].mxu0
      %v2313 = vadd.f32 %v983, %v2312
      %v2314 = vpop.f32.mrb[0].mxu0
      %2315 = vdwg.mxu0
      %2316 = vmax.xlane.f32.xlu0 %v2254
      %v2317 = vpop.xlane.xlu0 %2316
      %2318 = vmax.xlane.f32.xlu0 %v2257
      %v2319 = vpop.xlane.xlu0 %2318
      %2320 = vmax.xlane.f32.xlu0 %v2262
      %v2321 = vpop.xlane.xlu0 %2320
      %2322 = vmax.xlane.f32.xlu0 %v2265
      %v2323 = vpop.xlane.xlu0 %2322
      %2324 = vmax.xlane.f32.xlu0 %v2270
      %v2325 = vpop.xlane.xlu0 %2324
      %2326 = vmax.xlane.f32.xlu0 %v2273
      %v2327 = vpop.xlane.xlu0 %2326
      %2328 = vmax.xlane.f32.xlu0 %v2278
      %v2329 = vpop.xlane.xlu0 %2328
      %2330 = vmax.xlane.f32.xlu0 %v2281
      %v2331 = vpop.xlane.xlu0 %2330
      %2332 = vmax.xlane.f32.xlu0 %v2286
      %v2333 = vpop.xlane.xlu0 %2332
      %2334 = vmax.xlane.f32.xlu0 %v2289
      %v2335 = vpop.xlane.xlu0 %2334
      %2336 = vmax.xlane.f32.xlu0 %v2294
      %v2337 = vpop.xlane.xlu0 %2336
      %2338 = vmax.xlane.f32.xlu0 %v2297
      %v2339 = vpop.xlane.xlu0 %2338
      %2340 = vmax.xlane.f32.xlu0 %v2302
      %v2341 = vpop.xlane.xlu0 %2340
      %2342 = vmax.xlane.f32.xlu0 %v2305
      %v2343 = vpop.xlane.xlu0 %2342
      %2344 = vmax.xlane.f32.xlu0 %v2310
      %v2345 = vpop.xlane.xlu0 %2344
      %2346 = vmax.xlane.f32.xlu0 %v2313
      %v2347 = vpop.xlane.xlu0 %2346
      %v2348 = vsub.f32 %v2254, %v2317
      %v2349 = vsub.f32 %v2257, %v2319
      %v2350 = vsub.f32 %v2262, %v2321
      %v2351 = vsub.f32 %v2265, %v2323
      %v2352 = vsub.f32 %v2270, %v2325
      %v2353 = vsub.f32 %v2273, %v2327
      %v2354 = vsub.f32 %v2278, %v2329
      %v2355 = vsub.f32 %v2281, %v2331
      %v2356 = vsub.f32 %v2286, %v2333
      %v2357 = vsub.f32 %v2289, %v2335
      %v2358 = vsub.f32 %v2294, %v2337
      %v2359 = vsub.f32 %v2297, %v2339
      %v2360 = vsub.f32 %v2302, %v2341
      %v2361 = vsub.f32 %v2305, %v2343
      %v2362 = vsub.f32 %v2310, %v2345
      %v2363 = vsub.f32 %v2313, %v2347
      %v2364 = vmul.f32 %v2348, 1.442695
      %v2365 = vpow.pop %v2364
      %v2366 = vmul.f32 %v2349, 1.442695
      %v2367 = vpow.pop %v2366
      %v2368 = vmul.f32 %v2350, 1.442695
      %v2369 = vpow.pop %v2368
      %v2370 = vmul.f32 %v2351, 1.442695
      %v2371 = vpow.pop %v2370
      %v2372 = vmul.f32 %v2352, 1.442695
      %v2373 = vpow.pop %v2372
      %v2374 = vmul.f32 %v2353, 1.442695
      %v2375 = vpow.pop %v2374
      %v2376 = vmul.f32 %v2354, 1.442695
      %v2377 = vpow.pop %v2376
      %v2378 = vmul.f32 %v2355, 1.442695
      %v2379 = vpow.pop %v2378
      %v2380 = vmul.f32 %v2356, 1.442695
      %v2381 = vpow.pop %v2380
      %v2382 = vmul.f32 %v2357, 1.442695
      %v2383 = vpow.pop %v2382
      %v2384 = vmul.f32 %v2358, 1.442695
      %v2385 = vpow.pop %v2384
      %v2386 = vmul.f32 %v2359, 1.442695
      %v2387 = vpow.pop %v2386
      %v2388 = vmul.f32 %v2360, 1.442695
      %v2389 = vpow.pop %v2388
      %v2390 = vmul.f32 %v2361, 1.442695
      %v2391 = vpow.pop %v2390
      %v2392 = vmul.f32 %v2362, 1.442695
      %v2393 = vpow.pop %v2392
      %v2394 = vmul.f32 %v2363, 1.442695
      %v2395 = vpow.pop %v2394
      %2396 = vadd.xlane.f32.xlu0 %v2365
      %v2397 = vpop.xlane.xlu0 %2396
      %2398 = vadd.xlane.f32.xlu0 %v2367
      %v2399 = vpop.xlane.xlu0 %2398
      %2400 = vadd.xlane.f32.xlu0 %v2369
      %v2401 = vpop.xlane.xlu0 %2400
      %2402 = vadd.xlane.f32.xlu0 %v2371
      %v2403 = vpop.xlane.xlu0 %2402
      %2404 = vadd.xlane.f32.xlu0 %v2373
      %v2405 = vpop.xlane.xlu0 %2404
      %2406 = vadd.xlane.f32.xlu0 %v2375
      %v2407 = vpop.xlane.xlu0 %2406
      %2408 = vadd.xlane.f32.xlu0 %v2377
      %v2409 = vpop.xlane.xlu0 %2408
      %2410 = vadd.xlane.f32.xlu0 %v2379
      %v2411 = vpop.xlane.xlu0 %2410
      %2412 = vadd.xlane.f32.xlu0 %v2381
      %v2413 = vpop.xlane.xlu0 %2412
      %2414 = vadd.xlane.f32.xlu0 %v2383
      %v2415 = vpop.xlane.xlu0 %2414
      %2416 = vadd.xlane.f32.xlu0 %v2385
      %v2417 = vpop.xlane.xlu0 %2416
      %2418 = vadd.xlane.f32.xlu0 %v2387
      %v2419 = vpop.xlane.xlu0 %2418
      %2420 = vadd.xlane.f32.xlu0 %v2389
      %v2421 = vpop.xlane.xlu0 %2420
      %2422 = vadd.xlane.f32.xlu0 %v2391
      %v2423 = vpop.xlane.xlu0 %2422
      %2424 = vadd.xlane.f32.xlu0 %v2393
      %v2425 = vpop.xlane.xlu0 %2424
      %2426 = vadd.xlane.f32.xlu0 %v2395
      %v2427 = vpop.xlane.xlu0 %2426
      %v2428 = vrcp.pop %v2397
      %v2429 = vrcp.pop %v2399
      %v2430 = vrcp.pop %v2401
      %v2431 = vrcp.pop %v2403
      %v2432 = vrcp.pop %v2405
      %v2433 = vrcp.pop %v2407
      %v2434 = vrcp.pop %v2409
      %v2435 = vrcp.pop %v2411
      %v2436 = vrcp.pop %v2413
      %v2437 = vrcp.pop %v2415
      %v2438 = vrcp.pop %v2417
      %v2439 = vrcp.pop %v2419
      %v2440 = vrcp.pop %v2421
      %v2441 = vrcp.pop %v2423
      %v2442 = vrcp.pop %v2425
      %v2443 = vrcp.pop %v2427
      %v2444 = vmul.f32 %v2365, %v2428
      %v2445 = vmul.f32 %v2367, %v2429
      %v2446 = vmul.f32 %v2369, %v2430
      %v2447 = vmul.f32 %v2371, %v2431
      %v2448 = vmul.f32 %v2373, %v2432
      %v2449 = vmul.f32 %v2375, %v2433
      %v2450 = vmul.f32 %v2377, %v2434
      %v2451 = vmul.f32 %v2379, %v2435
      %v2452 = vmul.f32 %v2381, %v2436
      %v2453 = vmul.f32 %v2383, %v2437
      %v2454 = vmul.f32 %v2385, %v2438
      %v2455 = vmul.f32 %v2387, %v2439
      %v2456 = vmul.f32 %v2389, %v2440
      %v2457 = vmul.f32 %v2391, %v2441
      %v2458 = vmul.f32 %v2393, %v2442
      %v2459 = vmul.f32 %v2395, %v2443
      %v2460 = vpack.c.bf16 %v2445, %v2444
      %v2461 = vpack.c.bf16 %v2447, %v2446
      %v2462 = vpack.c.bf16 %v2449, %v2448
      %v2463 = vpack.c.bf16 %v2451, %v2450
      %v2464 = vpack.c.bf16 %v2453, %v2452
      %v2465 = vpack.c.bf16 %v2455, %v2454
      %v2466 = vpack.c.bf16 %v2457, %v2456
      %v2467 = vpack.c.bf16 %v2459, %v2458
      %2468 = vrot.lane.b32.xlu0 %v944, 96
      %v2469 = vpop.permute.xlu0 %2468
      %2470 = vrot.lane.b32.xlu0 %v945, 96
      %v2471 = vpop.permute.xlu0 %2470
      %2472 = vrot.lane.b32.xlu0 %v946, 96
      %v2473 = vpop.permute.xlu0 %2472
      %2474 = vrot.lane.b32.xlu0 %v947, 96
      %v2475 = vpop.permute.xlu0 %2474
      %2476 = vrot.lane.b32.xlu0 %v948, 96
      %v2477 = vpop.permute.xlu0 %2476
      %2478 = vrot.lane.b32.xlu0 %v949, 96
      %v2479 = vpop.permute.xlu0 %2478
      %2480 = vrot.lane.b32.xlu0 %v950, 96
      %v2481 = vpop.permute.xlu0 %2480
      %2482 = vrot.lane.b32.xlu0 %v951, 96
      %v2483 = vpop.permute.xlu0 %2482
      %2492 = vmatprep.subr.bf16.mxu0 0
      %2493 = vmatpush1.bf16.msra.mxu0 %v2469
      %2494 = vmatprep.subr.bf16.mxu0 0
      %2495 = vmatpush1.bf16.msra.mxu0 %v2471
      %2496 = vmatprep.subr.bf16.mxu0 0
      %2497 = vmatpush1.bf16.msra.mxu0 %v2473
      %2498 = vmatprep.subr.bf16.mxu0 0
      %2499 = vmatpush1.bf16.msra.mxu0 %v2475
      %2500 = vmatprep.subr.bf16.mxu0 0
      %2501 = vmatpush1.bf16.msra.mxu0 %v2477
      %2502 = vmatprep.subr.bf16.mxu0 0
      %2503 = vmatpush1.bf16.msra.mxu0 %v2479
      %2504 = vmatprep.subr.bf16.mxu0 0
      %2505 = vmatpush1.bf16.msra.mxu0 %v2481
      %2506 = vmatprep.subr.bf16.mxu0 0
      %2507 = vmatpush1.bf16.msra.mxu0 %v2483
      %2508 = vmatprep.subr.bf16.mxu0 0
      %2509 = vmatpush1.bf16.msra.mxu0 0
      %2510 = vmatprep.subr.bf16.mxu0 0
      %2511 = vmatpush1.bf16.msra.mxu0 0
      %2512 = vmatprep.subr.bf16.mxu0 0
      %2513 = vmatpush1.bf16.msra.mxu0 0
      %2514 = vmatprep.subr.bf16.mxu0 0
      %2515 = vmatpush1.bf16.msra.mxu0 0
      %2516 = vmatprep.subr.bf16.mxu0 0
      %2517 = vmatpush1.bf16.msra.mxu0 0
      %2518 = vmatprep.subr.bf16.mxu0 0
      %2519 = vmatpush1.bf16.msra.mxu0 0
      %2520 = vmatprep.subr.bf16.mxu0 0
      %2521 = vmatpush1.bf16.msra.mxu0 0
      %2522 = vmatprep.subr.bf16.mxu0 0
      %2523 = vmatpush1.bf16.msra.mxu0 0
      %2524 = vmatprep.mubr.bf16.mxu0 0
      %2525 = vmatmul.mubr.bf16.gmra.mrb[0].mxu0 %v2460
      %v2526 = vpop.f32.mrb[0].mxu0
      %v2527 = vadd.f32 0.0, %v2526
      %v2528 = vpop.f32.mrb[0].mxu0
      %v2529 = vpop.f32.mrb[0].mxu0
      %v2530 = vadd.f32 0.0, %v2529
      %v2531 = vpop.f32.mrb[0].mxu0
      %2532 = vmatprep.mubr.bf16.mxu0 0
      %2533 = vmatmul.mubr.bf16.gmra.mrb[0].mxu0 %v2461
      %v2534 = vpop.f32.mrb[0].mxu0
      %v2535 = vadd.f32 0.0, %v2534
      %v2536 = vpop.f32.mrb[0].mxu0
      %v2537 = vpop.f32.mrb[0].mxu0
      %v2538 = vadd.f32 0.0, %v2537
      %v2539 = vpop.f32.mrb[0].mxu0
      %2540 = vmatprep.mubr.bf16.mxu0 0
      %2541 = vmatmul.mubr.bf16.gmra.mrb[0].mxu0 %v2462
      %v2542 = vpop.f32.mrb[0].mxu0
      %v2543 = vadd.f32 0.0, %v2542
      %v2544 = vpop.f32.mrb[0].mxu0
      %v2545 = vpop.f32.mrb[0].mxu0
      %v2546 = vadd.f32 0.0, %v2545
      %v2547 = vpop.f32.mrb[0].mxu0
      %2548 = vmatprep.mubr.bf16.mxu0 0
      %2549 = vmatmul.mubr.bf16.gmra.mrb[0].mxu0 %v2463
      %v2550 = vpop.f32.mrb[0].mxu0
      %v2551 = vadd.f32 0.0, %v2550
      %v2552 = vpop.f32.mrb[0].mxu0
      %v2553 = vpop.f32.mrb[0].mxu0
      %v2554 = vadd.f32 0.0, %v2553
      %v2555 = vpop.f32.mrb[0].mxu0
      %2556 = vmatprep.mubr.bf16.mxu0 0
      %2557 = vmatmul.mubr.bf16.gmra.mrb[0].mxu0 %v2464
      %v2558 = vpop.f32.mrb[0].mxu0
      %v2559 = vadd.f32 0.0, %v2558
      %v2560 = vpop.f32.mrb[0].mxu0
      %v2561 = vpop.f32.mrb[0].mxu0
      %v2562 = vadd.f32 0.0, %v2561
      %v2563 = vpop.f32.mrb[0].mxu0
      %2564 = vmatprep.mubr.bf16.mxu0 0
      %2565 = vmatmul.mubr.bf16.gmra.mrb[0].mxu0 %v2465
      %v2566 = vpop.f32.mrb[0].mxu0
      %v2567 = vadd.f32 0.0, %v2566
      %v2568 = vpop.f32.mrb[0].mxu0
      %v2569 = vpop.f32.mrb[0].mxu0
      %v2570 = vadd.f32 0.0, %v2569
      %v2571 = vpop.f32.mrb[0].mxu0
      %2572 = vmatprep.mubr.bf16.mxu0 0
      %2573 = vmatmul.mubr.bf16.gmra.mrb[0].mxu0 %v2466
      %v2574 = vpop.f32.mrb[0].mxu0
      %v2575 = vadd.f32 0.0, %v2574
      %v2576 = vpop.f32.mrb[0].mxu0
      %v2577 = vpop.f32.mrb[0].mxu0
      %v2578 = vadd.f32 0.0, %v2577
      %v2579 = vpop.f32.mrb[0].mxu0
      %2580 = vmatprep.mubr.bf16.mxu0 0
      %2581 = vmatmul.mubr.bf16.gmra.mrb[0].mxu0 %v2467
      %v2582 = vpop.f32.mrb[0].mxu0
      %v2583 = vadd.f32 0.0, %v2582
      %v2584 = vpop.f32.mrb[0].mxu0
      %v2585 = vpop.f32.mrb[0].mxu0
      %v2586 = vadd.f32 0.0, %v2585
      %v2587 = vpop.f32.mrb[0].mxu0
      %2588 = vdwg.mxu0
      %v2589 = vpack.c.bf16 %v2530, %v2527
      %v2590 = vpack.c.bf16 %v2538, %v2535
      %v2591 = vpack.c.bf16 %v2546, %v2543
      %v2592 = vpack.c.bf16 %v2554, %v2551
      %v2593 = vpack.c.bf16 %v2562, %v2559
      %v2594 = vpack.c.bf16 %v2570, %v2567
      %v2595 = vpack.c.bf16 %v2578, %v2575
      %v2596 = vpack.c.bf16 %v2586, %v2583
      %v2599 = vunpack.c.l.b16 %v988
      %v2600 = vunpack.c.l.b16 %v989
      %v2601 = vpack.c.b16 %v2600, %v2599
      %v2604 = vsel %vm1000, %v2589, 0
      %v2607 = vsel %vm1000, %v2590, 0
      %v2610 = vsel %vm1000, %v2591, 0
      %v2613 = vsel %vm1000, %v2592, 0
      %v2616 = vsel %vm1000, %v2593, 0
      %v2619 = vsel %vm1000, %v2594, 0
      %v2622 = vsel %vm1000, %v2595, 0
      %v2625 = vsel %vm1000, %v2596, 0
      %2627 = vmatprep.subr.bf16.mxu0 0
      %2628 = vmatpush1.bf16.msra.mxu0 %v2601
      %2629 = vmatprep.subr.bf16.mxu0 0
      %2630 = vmatpush1.bf16.msra.mxu0 0
      %2631 = vmatprep.subr.bf16.mxu0 0
      %2632 = vmatpush1.bf16.msra.mxu0 0
      %2633 = vmatprep.subr.bf16.mxu0 0
      %2634 = vmatpush1.bf16.msra.mxu0 0
      %2635 = vmatprep.subr.bf16.mxu0 0
      %2636 = vmatpush1.bf16.msra.mxu0 0
      %2637 = vmatprep.subr.bf16.mxu0 0
      %2638 = vmatpush1.bf16.msra.mxu0 0
      %2639 = vmatprep.subr.bf16.mxu0 0
      %2640 = vmatpush1.bf16.msra.mxu0 0
      %2641 = vmatprep.subr.bf16.mxu0 0
      %2642 = vmatpush1.bf16.msra.mxu0 0
      %2643 = vmatprep.subr.bf16.mxu0 0
      %2644 = vmatpush1.bf16.msra.mxu0 0
      %2645 = vmatprep.subr.bf16.mxu0 0
      %2646 = vmatpush1.bf16.msra.mxu0 0
      %2647 = vmatprep.subr.bf16.mxu0 0
      %2648 = vmatpush1.bf16.msra.mxu0 0
      %2649 = vmatprep.subr.bf16.mxu0 0
      %2650 = vmatpush1.bf16.msra.mxu0 0
      %2651 = vmatprep.subr.bf16.mxu0 0
      %2652 = vmatpush1.bf16.msra.mxu0 0
      %2653 = vmatprep.subr.bf16.mxu0 0
      %2654 = vmatpush1.bf16.msra.mxu0 0
      %2655 = vmatprep.subr.bf16.mxu0 0
      %2656 = vmatpush1.bf16.msra.mxu0 0
      %2657 = vmatprep.subr.bf16.mxu0 0
      %2658 = vmatpush1.bf16.msra.mxu0 0
      %2659 = vmatprep.mubr.bf16.mxu0 0
      %2660 = vmatmul.mubr.bf16.gmra.mrb[0].mxu0 %v2604
      %v2661 = vpop.f32.mrb[0].mxu0
      %v2662 = vadd.f32 0.0, %v2661
      %v2663 = vpop.f32.mrb[0].mxu0
      %v2664 = vpop.f32.mrb[0].mxu0
      %v2665 = vadd.f32 0.0, %v2664
      %v2666 = vpop.f32.mrb[0].mxu0
      %2667 = vmatprep.mubr.bf16.mxu0 0
      %2668 = vmatmul.mubr.bf16.gmra.mrb[0].mxu0 %v2607
      %v2669 = vpop.f32.mrb[0].mxu0
      %v2670 = vadd.f32 0.0, %v2669
      %v2671 = vpop.f32.mrb[0].mxu0
      %v2672 = vpop.f32.mrb[0].mxu0
      %v2673 = vadd.f32 0.0, %v2672
      %v2674 = vpop.f32.mrb[0].mxu0
      %2675 = vmatprep.mubr.bf16.mxu0 0
      %2676 = vmatmul.mubr.bf16.gmra.mrb[0].mxu0 %v2610
      %v2677 = vpop.f32.mrb[0].mxu0
      %v2678 = vadd.f32 0.0, %v2677
      %v2679 = vpop.f32.mrb[0].mxu0
      %v2680 = vpop.f32.mrb[0].mxu0
      %v2681 = vadd.f32 0.0, %v2680
      %v2682 = vpop.f32.mrb[0].mxu0
      %2683 = vmatprep.mubr.bf16.mxu0 0
      %2684 = vmatmul.mubr.bf16.gmra.mrb[0].mxu0 %v2613
      %v2685 = vpop.f32.mrb[0].mxu0
      %v2686 = vadd.f32 0.0, %v2685
      %v2687 = vpop.f32.mrb[0].mxu0
      %v2688 = vpop.f32.mrb[0].mxu0
      %v2689 = vadd.f32 0.0, %v2688
      %v2690 = vpop.f32.mrb[0].mxu0
      %2691 = vmatprep.mubr.bf16.mxu0 0
      %2692 = vmatmul.mubr.bf16.gmra.mrb[0].mxu0 %v2616
      %v2693 = vpop.f32.mrb[0].mxu0
      %v2694 = vadd.f32 0.0, %v2693
      %v2695 = vpop.f32.mrb[0].mxu0
      %v2696 = vpop.f32.mrb[0].mxu0
      %v2697 = vadd.f32 0.0, %v2696
      %v2698 = vpop.f32.mrb[0].mxu0
      %2699 = vmatprep.mubr.bf16.mxu0 0
      %2700 = vmatmul.mubr.bf16.gmra.mrb[0].mxu0 %v2619
      %v2701 = vpop.f32.mrb[0].mxu0
      %v2702 = vadd.f32 0.0, %v2701
      %v2703 = vpop.f32.mrb[0].mxu0
      %v2704 = vpop.f32.mrb[0].mxu0
      %v2705 = vadd.f32 0.0, %v2704
      %v2706 = vpop.f32.mrb[0].mxu0
      %2707 = vmatprep.mubr.bf16.mxu0 0
      %2708 = vmatmul.mubr.bf16.gmra.mrb[0].mxu0 %v2622
      %v2709 = vpop.f32.mrb[0].mxu0
      %v2710 = vadd.f32 0.0, %v2709
      %v2711 = vpop.f32.mrb[0].mxu0
      %v2712 = vpop.f32.mrb[0].mxu0
      %v2713 = vadd.f32 0.0, %v2712
      %v2714 = vpop.f32.mrb[0].mxu0
      %2715 = vmatprep.mubr.bf16.mxu0 0
      %2716 = vmatmul.mubr.bf16.gmra.mrb[0].mxu0 %v2625
      %v2717 = vpop.f32.mrb[0].mxu0
      %v2718 = vadd.f32 0.0, %v2717
      %v2719 = vpop.f32.mrb[0].mxu0
      %v2720 = vpop.f32.mrb[0].mxu0
      %v2721 = vadd.f32 0.0, %v2720
      %v2722 = vpop.f32.mrb[0].mxu0
      %2723 = vdwg.mxu0
      %v2724 = vadd.f32 %v2077, %v2662
      %v2725 = vadd.f32 %v2080, %v2665
      %v2726 = vadd.f32 %v2085, %v2670
      %v2727 = vadd.f32 %v2088, %v2673
      %v2728 = vadd.f32 %v2093, %v2678
      %v2729 = vadd.f32 %v2096, %v2681
      %v2730 = vadd.f32 %v2101, %v2686
      %v2731 = vadd.f32 %v2104, %v2689
      %v2732 = vadd.f32 %v2109, %v2694
      %v2733 = vadd.f32 %v2112, %v2697
      %v2734 = vadd.f32 %v2117, %v2702
      %v2735 = vadd.f32 %v2120, %v2705
      %v2736 = vadd.f32 %v2125, %v2710
      %v2737 = vadd.f32 %v2128, %v2713
      %v2738 = vadd.f32 %v2133, %v2718
      %v2739 = vadd.f32 %v2136, %v2721
      %2740 = vrot.lane.b32.xlu0 %v712, 80
      %v2741 = vpop.permute.xlu0 %2740
      %2742 = vrot.lane.b32.xlu0 %v713, 80
      %v2743 = vpop.permute.xlu0 %2742
      %2744 = vrot.lane.b32.xlu0 %v714, 80
      %v2745 = vpop.permute.xlu0 %2744
      %2746 = vrot.lane.b32.xlu0 %v715, 80
      %v2747 = vpop.permute.xlu0 %2746
      %2748 = vrot.lane.b32.xlu0 %v716, 80
      %v2749 = vpop.permute.xlu0 %2748
      %2750 = vrot.lane.b32.xlu0 %v717, 80
      %v2751 = vpop.permute.xlu0 %2750
      %2752 = vrot.lane.b32.xlu0 %v718, 80
      %v2753 = vpop.permute.xlu0 %2752
      %2754 = vrot.lane.b32.xlu0 %v719, 80
      %v2755 = vpop.permute.xlu0 %2754
      %2756 = vrot.lane.b32.xlu0 %v720, 80
      %v2757 = vpop.permute.xlu0 %2756
      %2758 = vrot.lane.b32.xlu0 %v721, 80
      %v2759 = vpop.permute.xlu0 %2758
      %2760 = vrot.lane.b32.xlu0 %v722, 80
      %v2761 = vpop.permute.xlu0 %2760
      %2762 = vrot.lane.b32.xlu0 %v723, 80
      %v2763 = vpop.permute.xlu0 %2762
      %2764 = vrot.lane.b32.xlu0 %v724, 80
      %v2765 = vpop.permute.xlu0 %2764
      %2766 = vrot.lane.b32.xlu0 %v725, 80
      %v2767 = vpop.permute.xlu0 %2766
      %2768 = vrot.lane.b32.xlu0 %v726, 80
      %v2769 = vpop.permute.xlu0 %2768
      %2770 = vrot.lane.b32.xlu0 %v727, 80
      %v2771 = vpop.permute.xlu0 %2770
      %v2773 = vsel %vm1000, %v2741, 0
      %v2776 = vsel %vm1000, %v2743, 0
      %v2779 = vsel %vm1000, %v2745, 0
      %v2782 = vsel %vm1000, %v2747, 0
      %v2785 = vsel %vm1000, %v2749, 0
      %v2788 = vsel %vm1000, %v2751, 0
      %v2791 = vsel %vm1000, %v2753, 0
      %v2794 = vsel %vm1000, %v2755, 0
      %v2797 = vsel %vm1000, %v2757, 0
      %v2800 = vsel %vm1000, %v2759, 0
      %v2803 = vsel %vm1000, %v2761, 0
      %v2806 = vsel %vm1000, %v2763, 0
      %v2809 = vsel %vm1000, %v2765, 0
      %v2812 = vsel %vm1000, %v2767, 0
      %v2815 = vsel %vm1000, %v2769, 0
      %v2818 = vsel %vm1000, %v2771, 0
      %2820 = vmatprep.subr.bf16.mxu0 0
      %2821 = vmatpush1.bf16.xpose.msra.mxu0 %v2797
      %2822 = vmatprep.subr.bf16.mxu0 0
      %2823 = vmatpush1.bf16.xpose.msra.mxu0 %v2800
      %2824 = vmatprep.subr.bf16.mxu0 0
      %2825 = vmatpush1.bf16.xpose.msra.mxu0 %v2803
      %2826 = vmatprep.subr.bf16.mxu0 0
      %2827 = vmatpush1.bf16.xpose.msra.mxu0 %v2806
      %2828 = vmatprep.subr.bf16.mxu0 0
      %2829 = vmatpush1.bf16.xpose.msra.mxu0 %v2809
      %2830 = vmatprep.subr.bf16.mxu0 0
      %2831 = vmatpush1.bf16.xpose.msra.mxu0 %v2812
      %2832 = vmatprep.subr.bf16.mxu0 0
      %2833 = vmatpush1.bf16.xpose.msra.mxu0 %v2815
      %2834 = vmatprep.subr.bf16.mxu0 0
      %2835 = vmatpush1.bf16.xpose.msra.mxu0 %v2818
      %2836 = vmatprep.subr.bf16.mxu0 0
      %2837 = vmatpush1.bf16.xpose.msra.mxu0 0
      %2838 = vmatprep.subr.bf16.mxu0 0
      %2839 = vmatpush1.bf16.xpose.msra.mxu0 0
      %2840 = vmatprep.subr.bf16.mxu0 0
      %2841 = vmatpush1.bf16.xpose.msra.mxu0 0
      %2842 = vmatprep.subr.bf16.mxu0 0
      %2843 = vmatpush1.bf16.xpose.msra.mxu0 0
      %2844 = vmatprep.subr.bf16.mxu0 0
      %2845 = vmatpush1.bf16.xpose.msra.mxu0 0
      %2846 = vmatprep.subr.bf16.mxu0 0
      %2847 = vmatpush1.bf16.xpose.msra.mxu0 0
      %2848 = vmatprep.subr.bf16.mxu0 0
      %2849 = vmatpush1.bf16.xpose.msra.mxu0 0
      %2850 = vmatprep.subr.bf16.mxu0 0
      %2851 = vmatpush1.bf16.xpose.msra.mxu0 0
      %2852 = vmatprep.mubr.bf16.mxu0 0
      %2853 = vmatmul.mubr.bf16.gmra.mrb[0].mxu0 %v2773
      %v2854 = vpop.f32.mrb[0].mxu0
      %v2855 = vadd.f32 %v968, %v2854
      %v2856 = vpop.f32.mrb[0].mxu0
      %v2857 = vpop.f32.mrb[0].mxu0
      %v2858 = vadd.f32 %v969, %v2857
      %v2859 = vpop.f32.mrb[0].mxu0
      %2860 = vmatprep.mubr.bf16.mxu0 0
      %2861 = vmatmul.mubr.bf16.gmra.mrb[0].mxu0 %v2776
      %v2862 = vpop.f32.mrb[0].mxu0
      %v2863 = vadd.f32 %v970, %v2862
      %v2864 = vpop.f32.mrb[0].mxu0
      %v2865 = vpop.f32.mrb[0].mxu0
      %v2866 = vadd.f32 %v971, %v2865
      %v2867 = vpop.f32.mrb[0].mxu0
      %2868 = vmatprep.mubr.bf16.mxu0 0
      %2869 = vmatmul.mubr.bf16.gmra.mrb[0].mxu0 %v2779
      %v2870 = vpop.f32.mrb[0].mxu0
      %v2871 = vadd.f32 %v972, %v2870
      %v2872 = vpop.f32.mrb[0].mxu0
      %v2873 = vpop.f32.mrb[0].mxu0
      %v2874 = vadd.f32 %v973, %v2873
      %v2875 = vpop.f32.mrb[0].mxu0
      %2876 = vmatprep.mubr.bf16.mxu0 0
      %2877 = vmatmul.mubr.bf16.gmra.mrb[0].mxu0 %v2782
      %v2878 = vpop.f32.mrb[0].mxu0
      %v2879 = vadd.f32 %v974, %v2878
      %v2880 = vpop.f32.mrb[0].mxu0
      %v2881 = vpop.f32.mrb[0].mxu0
      %v2882 = vadd.f32 %v975, %v2881
      %v2883 = vpop.f32.mrb[0].mxu0
      %2884 = vmatprep.mubr.bf16.mxu0 0
      %2885 = vmatmul.mubr.bf16.gmra.mrb[0].mxu0 %v2785
      %v2886 = vpop.f32.mrb[0].mxu0
      %v2887 = vadd.f32 %v976, %v2886
      %v2888 = vpop.f32.mrb[0].mxu0
      %v2889 = vpop.f32.mrb[0].mxu0
      %v2890 = vadd.f32 %v977, %v2889
      %v2891 = vpop.f32.mrb[0].mxu0
      %2892 = vmatprep.mubr.bf16.mxu0 0
      %2893 = vmatmul.mubr.bf16.gmra.mrb[0].mxu0 %v2788
      %v2894 = vpop.f32.mrb[0].mxu0
      %v2895 = vadd.f32 %v978, %v2894
      %v2896 = vpop.f32.mrb[0].mxu0
      %v2897 = vpop.f32.mrb[0].mxu0
      %v2898 = vadd.f32 %v979, %v2897
      %v2899 = vpop.f32.mrb[0].mxu0
      %2900 = vmatprep.mubr.bf16.mxu0 0
      %2901 = vmatmul.mubr.bf16.gmra.mrb[0].mxu0 %v2791
      %v2902 = vpop.f32.mrb[0].mxu0
      %v2903 = vadd.f32 %v980, %v2902
      %v2904 = vpop.f32.mrb[0].mxu0
      %v2905 = vpop.f32.mrb[0].mxu0
      %v2906 = vadd.f32 %v981, %v2905
      %v2907 = vpop.f32.mrb[0].mxu0
      %2908 = vmatprep.mubr.bf16.mxu0 0
      %2909 = vmatmul.mubr.bf16.gmra.mrb[0].mxu0 %v2794
      %v2910 = vpop.f32.mrb[0].mxu0
      %v2911 = vadd.f32 %v982, %v2910
      %v2912 = vpop.f32.mrb[0].mxu0
      %v2913 = vpop.f32.mrb[0].mxu0
      %v2914 = vadd.f32 %v983, %v2913
      %v2915 = vpop.f32.mrb[0].mxu0
      %2916 = vdwg.mxu0
      %2917 = vmax.xlane.f32.xlu0 %v2855
      %v2918 = vpop.xlane.xlu0 %2917
      %2919 = vmax.xlane.f32.xlu0 %v2858
      %v2920 = vpop.xlane.xlu0 %2919
      %2921 = vmax.xlane.f32.xlu0 %v2863
      %v2922 = vpop.xlane.xlu0 %2921
      %2923 = vmax.xlane.f32.xlu0 %v2866
      %v2924 = vpop.xlane.xlu0 %2923
      %2925 = vmax.xlane.f32.xlu0 %v2871
      %v2926 = vpop.xlane.xlu0 %2925
      %2927 = vmax.xlane.f32.xlu0 %v2874
      %v2928 = vpop.xlane.xlu0 %2927
      %2929 = vmax.xlane.f32.xlu0 %v2879
      %v2930 = vpop.xlane.xlu0 %2929
      %2931 = vmax.xlane.f32.xlu0 %v2882
      %v2932 = vpop.xlane.xlu0 %2931
      %2933 = vmax.xlane.f32.xlu0 %v2887
      %v2934 = vpop.xlane.xlu0 %2933
      %2935 = vmax.xlane.f32.xlu0 %v2890
      %v2936 = vpop.xlane.xlu0 %2935
      %2937 = vmax.xlane.f32.xlu0 %v2895
      %v2938 = vpop.xlane.xlu0 %2937
      %2939 = vmax.xlane.f32.xlu0 %v2898
      %v2940 = vpop.xlane.xlu0 %2939
      %2941 = vmax.xlane.f32.xlu0 %v2903
      %v2942 = vpop.xlane.xlu0 %2941
      %2943 = vmax.xlane.f32.xlu0 %v2906
      %v2944 = vpop.xlane.xlu0 %2943
      %2945 = vmax.xlane.f32.xlu0 %v2911
      %v2946 = vpop.xlane.xlu0 %2945
      %2947 = vmax.xlane.f32.xlu0 %v2914
      %v2948 = vpop.xlane.xlu0 %2947
      %v2949 = vsub.f32 %v2855, %v2918
      %v2950 = vsub.f32 %v2858, %v2920
      %v2951 = vsub.f32 %v2863, %v2922
      %v2952 = vsub.f32 %v2866, %v2924
      %v2953 = vsub.f32 %v2871, %v2926
      %v2954 = vsub.f32 %v2874, %v2928
      %v2955 = vsub.f32 %v2879, %v2930
      %v2956 = vsub.f32 %v2882, %v2932
      %v2957 = vsub.f32 %v2887, %v2934
      %v2958 = vsub.f32 %v2890, %v2936
      %v2959 = vsub.f32 %v2895, %v2938
      %v2960 = vsub.f32 %v2898, %v2940
      %v2961 = vsub.f32 %v2903, %v2942
      %v2962 = vsub.f32 %v2906, %v2944
      %v2963 = vsub.f32 %v2911, %v2946
      %v2964 = vsub.f32 %v2914, %v2948
      %v2965 = vmul.f32 %v2949, 1.442695
      %v2966 = vpow.pop %v2965
      %v2967 = vmul.f32 %v2950, 1.442695
      %v2968 = vpow.pop %v2967
      %v2969 = vmul.f32 %v2951, 1.442695
      %v2970 = vpow.pop %v2969
      %v2971 = vmul.f32 %v2952, 1.442695
      %v2972 = vpow.pop %v2971
      %v2973 = vmul.f32 %v2953, 1.442695
      %v2974 = vpow.pop %v2973
      %v2975 = vmul.f32 %v2954, 1.442695
      %v2976 = vpow.pop %v2975
      %v2977 = vmul.f32 %v2955, 1.442695
      %v2978 = vpow.pop %v2977
      %v2979 = vmul.f32 %v2956, 1.442695
      %v2980 = vpow.pop %v2979
      %v2981 = vmul.f32 %v2957, 1.442695
      %v2982 = vpow.pop %v2981
      %v2983 = vmul.f32 %v2958, 1.442695
      %v2984 = vpow.pop %v2983
      %v2985 = vmul.f32 %v2959, 1.442695
      %v2986 = vpow.pop %v2985
      %v2987 = vmul.f32 %v2960, 1.442695
      %v2988 = vpow.pop %v2987
      %v2989 = vmul.f32 %v2961, 1.442695
      %v2990 = vpow.pop %v2989
      %v2991 = vmul.f32 %v2962, 1.442695
      %v2992 = vpow.pop %v2991
      %v2993 = vmul.f32 %v2963, 1.442695
      %v2994 = vpow.pop %v2993
      %v2995 = vmul.f32 %v2964, 1.442695
      %v2996 = vpow.pop %v2995
      %2997 = vadd.xlane.f32.xlu0 %v2966
      %v2998 = vpop.xlane.xlu0 %2997
      %2999 = vadd.xlane.f32.xlu0 %v2968
      %v3000 = vpop.xlane.xlu0 %2999
      %3001 = vadd.xlane.f32.xlu0 %v2970
      %v3002 = vpop.xlane.xlu0 %3001
      %3003 = vadd.xlane.f32.xlu0 %v2972
      %v3004 = vpop.xlane.xlu0 %3003
      %3005 = vadd.xlane.f32.xlu0 %v2974
      %v3006 = vpop.xlane.xlu0 %3005
      %3007 = vadd.xlane.f32.xlu0 %v2976
      %v3008 = vpop.xlane.xlu0 %3007
      %3009 = vadd.xlane.f32.xlu0 %v2978
      %v3010 = vpop.xlane.xlu0 %3009
      %3011 = vadd.xlane.f32.xlu0 %v2980
      %v3012 = vpop.xlane.xlu0 %3011
      %3013 = vadd.xlane.f32.xlu0 %v2982
      %v3014 = vpop.xlane.xlu0 %3013
      %3015 = vadd.xlane.f32.xlu0 %v2984
      %v3016 = vpop.xlane.xlu0 %3015
      %3017 = vadd.xlane.f32.xlu0 %v2986
      %v3018 = vpop.xlane.xlu0 %3017
      %3019 = vadd.xlane.f32.xlu0 %v2988
      %v3020 = vpop.xlane.xlu0 %3019
      %3021 = vadd.xlane.f32.xlu0 %v2990
      %v3022 = vpop.xlane.xlu0 %3021
      %3023 = vadd.xlane.f32.xlu0 %v2992
      %v3024 = vpop.xlane.xlu0 %3023
      %3025 = vadd.xlane.f32.xlu0 %v2994
      %v3026 = vpop.xlane.xlu0 %3025
      %3027 = vadd.xlane.f32.xlu0 %v2996
      %v3028 = vpop.xlane.xlu0 %3027
      %v3029 = vrcp.pop %v2998
      %v3030 = vrcp.pop %v3000
      %v3031 = vrcp.pop %v3002
      %v3032 = vrcp.pop %v3004
      %v3033 = vrcp.pop %v3006
      %v3034 = vrcp.pop %v3008
      %v3035 = vrcp.pop %v3010
      %v3036 = vrcp.pop %v3012
      %v3037 = vrcp.pop %v3014
      %v3038 = vrcp.pop %v3016
      %v3039 = vrcp.pop %v3018
      %v3040 = vrcp.pop %v3020
      %v3041 = vrcp.pop %v3022
      %v3042 = vrcp.pop %v3024
      %v3043 = vrcp.pop %v3026
      %v3044 = vrcp.pop %v3028
      %v3045 = vmul.f32 %v2966, %v3029
      %v3046 = vmul.f32 %v2968, %v3030
      %v3047 = vmul.f32 %v2970, %v3031
      %v3048 = vmul.f32 %v2972, %v3032
      %v3049 = vmul.f32 %v2974, %v3033
      %v3050 = vmul.f32 %v2976, %v3034
      %v3051 = vmul.f32 %v2978, %v3035
      %v3052 = vmul.f32 %v2980, %v3036
      %v3053 = vmul.f32 %v2982, %v3037
      %v3054 = vmul.f32 %v2984, %v3038
      %v3055 = vmul.f32 %v2986, %v3039
      %v3056 = vmul.f32 %v2988, %v3040
      %v3057 = vmul.f32 %v2990, %v3041
      %v3058 = vmul.f32 %v2992, %v3042
      %v3059 = vmul.f32 %v2994, %v3043
      %v3060 = vmul.f32 %v2996, %v3044
      %v3061 = vpack.c.bf16 %v3046, %v3045
      %v3062 = vpack.c.bf16 %v3048, %v3047
      %v3063 = vpack.c.bf16 %v3050, %v3049
      %v3064 = vpack.c.bf16 %v3052, %v3051
      %v3065 = vpack.c.bf16 %v3054, %v3053
      %v3066 = vpack.c.bf16 %v3056, %v3055
      %v3067 = vpack.c.bf16 %v3058, %v3057
      %v3068 = vpack.c.bf16 %v3060, %v3059
      %3069 = vrot.lane.b32.xlu0 %v944, 80
      %v3070 = vpop.permute.xlu0 %3069
      %3071 = vrot.lane.b32.xlu0 %v945, 80
      %v3072 = vpop.permute.xlu0 %3071
      %3073 = vrot.lane.b32.xlu0 %v946, 80
      %v3074 = vpop.permute.xlu0 %3073
      %3075 = vrot.lane.b32.xlu0 %v947, 80
      %v3076 = vpop.permute.xlu0 %3075
      %3077 = vrot.lane.b32.xlu0 %v948, 80
      %v3078 = vpop.permute.xlu0 %3077
      %3079 = vrot.lane.b32.xlu0 %v949, 80
      %v3080 = vpop.permute.xlu0 %3079
      %3081 = vrot.lane.b32.xlu0 %v950, 80
      %v3082 = vpop.permute.xlu0 %3081
      %3083 = vrot.lane.b32.xlu0 %v951, 80
      %v3084 = vpop.permute.xlu0 %3083
      %3093 = vmatprep.subr.bf16.mxu0 0
      %3094 = vmatpush1.bf16.msra.mxu0 %v3070
      %3095 = vmatprep.subr.bf16.mxu0 0
      %3096 = vmatpush1.bf16.msra.mxu0 %v3072
      %3097 = vmatprep.subr.bf16.mxu0 0
      %3098 = vmatpush1.bf16.msra.mxu0 %v3074
      %3099 = vmatprep.subr.bf16.mxu0 0
      %3100 = vmatpush1.bf16.msra.mxu0 %v3076
      %3101 = vmatprep.subr.bf16.mxu0 0
      %3102 = vmatpush1.bf16.msra.mxu0 %v3078
      %3103 = vmatprep.subr.bf16.mxu0 0
      %3104 = vmatpush1.bf16.msra.mxu0 %v3080
      %3105 = vmatprep.subr.bf16.mxu0 0
      %3106 = vmatpush1.bf16.msra.mxu0 %v3082
      %3107 = vmatprep.subr.bf16.mxu0 0
      %3108 = vmatpush1.bf16.msra.mxu0 %v3084
      %3109 = vmatprep.subr.bf16.mxu0 0
      %3110 = vmatpush1.bf16.msra.mxu0 0
      %3111 = vmatprep.subr.bf16.mxu0 0
      %3112 = vmatpush1.bf16.msra.mxu0 0
      %3113 = vmatprep.subr.bf16.mxu0 0
      %3114 = vmatpush1.bf16.msra.mxu0 0
      %3115 = vmatprep.subr.bf16.mxu0 0
      %3116 = vmatpush1.bf16.msra.mxu0 0
      %3117 = vmatprep.subr.bf16.mxu0 0
      %3118 = vmatpush1.bf16.msra.mxu0 0
      %3119 = vmatprep.subr.bf16.mxu0 0
      %3120 = vmatpush1.bf16.msra.mxu0 0
      %3121 = vmatprep.subr.bf16.mxu0 0
      %3122 = vmatpush1.bf16.msra.mxu0 0
      %3123 = vmatprep.subr.bf16.mxu0 0
      %3124 = vmatpush1.bf16.msra.mxu0 0
      %3125 = vmatprep.mubr.bf16.mxu0 0
      %3126 = vmatmul.mubr.bf16.gmra.mrb[0].mxu0 %v3061
      %v3127 = vpop.f32.mrb[0].mxu0
      %v3128 = vadd.f32 0.0, %v3127
      %v3129 = vpop.f32.mrb[0].mxu0
      %v3130 = vpop.f32.mrb[0].mxu0
      %v3131 = vadd.f32 0.0, %v3130
      %v3132 = vpop.f32.mrb[0].mxu0
      %3133 = vmatprep.mubr.bf16.mxu0 0
      %3134 = vmatmul.mubr.bf16.gmra.mrb[0].mxu0 %v3062
      %v3135 = vpop.f32.mrb[0].mxu0
      %v3136 = vadd.f32 0.0, %v3135
      %v3137 = vpop.f32.mrb[0].mxu0
      %v3138 = vpop.f32.mrb[0].mxu0
      %v3139 = vadd.f32 0.0, %v3138
      %v3140 = vpop.f32.mrb[0].mxu0
      %3141 = vmatprep.mubr.bf16.mxu0 0
      %3142 = vmatmul.mubr.bf16.gmra.mrb[0].mxu0 %v3063
      %v3143 = vpop.f32.mrb[0].mxu0
      %v3144 = vadd.f32 0.0, %v3143
      %v3145 = vpop.f32.mrb[0].mxu0
      %v3146 = vpop.f32.mrb[0].mxu0
      %v3147 = vadd.f32 0.0, %v3146
      %v3148 = vpop.f32.mrb[0].mxu0
      %3149 = vmatprep.mubr.bf16.mxu0 0
      %3150 = vmatmul.mubr.bf16.gmra.mrb[0].mxu0 %v3064
      %v3151 = vpop.f32.mrb[0].mxu0
      %v3152 = vadd.f32 0.0, %v3151
      %v3153 = vpop.f32.mrb[0].mxu0
      %v3154 = vpop.f32.mrb[0].mxu0
      %v3155 = vadd.f32 0.0, %v3154
      %v3156 = vpop.f32.mrb[0].mxu0
      %3157 = vmatprep.mubr.bf16.mxu0 0
      %3158 = vmatmul.mubr.bf16.gmra.mrb[0].mxu0 %v3065
      %v3159 = vpop.f32.mrb[0].mxu0
      %v3160 = vadd.f32 0.0, %v3159
      %v3161 = vpop.f32.mrb[0].mxu0
      %v3162 = vpop.f32.mrb[0].mxu0
      %v3163 = vadd.f32 0.0, %v3162
      %v3164 = vpop.f32.mrb[0].mxu0
      %3165 = vmatprep.mubr.bf16.mxu0 0
      %3166 = vmatmul.mubr.bf16.gmra.mrb[0].mxu0 %v3066
      %v3167 = vpop.f32.mrb[0].mxu0
      %v3168 = vadd.f32 0.0, %v3167
      %v3169 = vpop.f32.mrb[0].mxu0
      %v3170 = vpop.f32.mrb[0].mxu0
      %v3171 = vadd.f32 0.0, %v3170
      %v3172 = vpop.f32.mrb[0].mxu0
      %3173 = vmatprep.mubr.bf16.mxu0 0
      %3174 = vmatmul.mubr.bf16.gmra.mrb[0].mxu0 %v3067
      %v3175 = vpop.f32.mrb[0].mxu0
      %v3176 = vadd.f32 0.0, %v3175
      %v3177 = vpop.f32.mrb[0].mxu0
      %v3178 = vpop.f32.mrb[0].mxu0
      %v3179 = vadd.f32 0.0, %v3178
      %v3180 = vpop.f32.mrb[0].mxu0
      %3181 = vmatprep.mubr.bf16.mxu0 0
      %3182 = vmatmul.mubr.bf16.gmra.mrb[0].mxu0 %v3068
      %v3183 = vpop.f32.mrb[0].mxu0
      %v3184 = vadd.f32 0.0, %v3183
      %v3185 = vpop.f32.mrb[0].mxu0
      %v3186 = vpop.f32.mrb[0].mxu0
      %v3187 = vadd.f32 0.0, %v3186
      %v3188 = vpop.f32.mrb[0].mxu0
      %3189 = vdwg.mxu0
      %v3190 = vpack.c.bf16 %v3131, %v3128
      %v3191 = vpack.c.bf16 %v3139, %v3136
      %v3192 = vpack.c.bf16 %v3147, %v3144
      %v3193 = vpack.c.bf16 %v3155, %v3152
      %v3194 = vpack.c.bf16 %v3163, %v3160
      %v3195 = vpack.c.bf16 %v3171, %v3168
      %v3196 = vpack.c.bf16 %v3179, %v3176
      %v3197 = vpack.c.bf16 %v3187, %v3184
      %v3200 = vunpack.c.l.b16 %v990
      %v3201 = vunpack.c.l.b16 %v991
      %v3202 = vpack.c.b16 %v3201, %v3200
      %v3205 = vsel %vm1000, %v3190, 0
      %v3208 = vsel %vm1000, %v3191, 0
      %v3211 = vsel %vm1000, %v3192, 0
      %v3214 = vsel %vm1000, %v3193, 0
      %v3217 = vsel %vm1000, %v3194, 0
      %v3220 = vsel %vm1000, %v3195, 0
      %v3223 = vsel %vm1000, %v3196, 0
      %v3226 = vsel %vm1000, %v3197, 0
      %3228 = vmatprep.subr.bf16.mxu0 0
      %3229 = vmatpush1.bf16.msra.mxu0 %v3202
      %3230 = vmatprep.subr.bf16.mxu0 0
      %3231 = vmatpush1.bf16.msra.mxu0 0
      %3232 = vmatprep.subr.bf16.mxu0 0
      %3233 = vmatpush1.bf16.msra.mxu0 0
      %3234 = vmatprep.subr.bf16.mxu0 0
      %3235 = vmatpush1.bf16.msra.mxu0 0
      %3236 = vmatprep.subr.bf16.mxu0 0
      %3237 = vmatpush1.bf16.msra.mxu0 0
      %3238 = vmatprep.subr.bf16.mxu0 0
      %3239 = vmatpush1.bf16.msra.mxu0 0
      %3240 = vmatprep.subr.bf16.mxu0 0
      %3241 = vmatpush1.bf16.msra.mxu0 0
      %3242 = vmatprep.subr.bf16.mxu0 0
      %3243 = vmatpush1.bf16.msra.mxu0 0
      %3244 = vmatprep.subr.bf16.mxu0 0
      %3245 = vmatpush1.bf16.msra.mxu0 0
      %3246 = vmatprep.subr.bf16.mxu0 0
      %3247 = vmatpush1.bf16.msra.mxu0 0
      %3248 = vmatprep.subr.bf16.mxu0 0
      %3249 = vmatpush1.bf16.msra.mxu0 0
      %3250 = vmatprep.subr.bf16.mxu0 0
      %3251 = vmatpush1.bf16.msra.mxu0 0
      %3252 = vmatprep.subr.bf16.mxu0 0
      %3253 = vmatpush1.bf16.msra.mxu0 0
      %3254 = vmatprep.subr.bf16.mxu0 0
      %3255 = vmatpush1.bf16.msra.mxu0 0
      %3256 = vmatprep.subr.bf16.mxu0 0
      %3257 = vmatpush1.bf16.msra.mxu0 0
      %3258 = vmatprep.subr.bf16.mxu0 0
      %3259 = vmatpush1.bf16.msra.mxu0 0
      %3260 = vmatprep.mubr.bf16.mxu0 0
      %3261 = vmatmul.mubr.bf16.gmra.mrb[0].mxu0 %v3205
      %v3262 = vpop.f32.mrb[0].mxu0
      %v3263 = vadd.f32 0.0, %v3262
      %v3264 = vpop.f32.mrb[0].mxu0
      %v3265 = vpop.f32.mrb[0].mxu0
      %v3266 = vadd.f32 0.0, %v3265
      %v3267 = vpop.f32.mrb[0].mxu0
      %3268 = vmatprep.mubr.bf16.mxu0 0
      %3269 = vmatmul.mubr.bf16.gmra.mrb[0].mxu0 %v3208
      %v3270 = vpop.f32.mrb[0].mxu0
      %v3271 = vadd.f32 0.0, %v3270
      %v3272 = vpop.f32.mrb[0].mxu0
      %v3273 = vpop.f32.mrb[0].mxu0
      %v3274 = vadd.f32 0.0, %v3273
      %v3275 = vpop.f32.mrb[0].mxu0
      %3276 = vmatprep.mubr.bf16.mxu0 0
      %3277 = vmatmul.mubr.bf16.gmra.mrb[0].mxu0 %v3211
      %v3278 = vpop.f32.mrb[0].mxu0
      %v3279 = vadd.f32 0.0, %v3278
      %v3280 = vpop.f32.mrb[0].mxu0
      %v3281 = vpop.f32.mrb[0].mxu0
      %v3282 = vadd.f32 0.0, %v3281
      %v3283 = vpop.f32.mrb[0].mxu0
      %3284 = vmatprep.mubr.bf16.mxu0 0
      %3285 = vmatmul.mubr.bf16.gmra.mrb[0].mxu0 %v3214
      %v3286 = vpop.f32.mrb[0].mxu0
      %v3287 = vadd.f32 0.0, %v3286
      %v3288 = vpop.f32.mrb[0].mxu0
      %v3289 = vpop.f32.mrb[0].mxu0
      %v3290 = vadd.f32 0.0, %v3289
      %v3291 = vpop.f32.mrb[0].mxu0
      %3292 = vmatprep.mubr.bf16.mxu0 0
      %3293 = vmatmul.mubr.bf16.gmra.mrb[0].mxu0 %v3217
      %v3294 = vpop.f32.mrb[0].mxu0
      %v3295 = vadd.f32 0.0, %v3294
      %v3296 = vpop.f32.mrb[0].mxu0
      %v3297 = vpop.f32.mrb[0].mxu0
      %v3298 = vadd.f32 0.0, %v3297
      %v3299 = vpop.f32.mrb[0].mxu0
      %3300 = vmatprep.mubr.bf16.mxu0 0
      %3301 = vmatmul.mubr.bf16.gmra.mrb[0].mxu0 %v3220
      %v3302 = vpop.f32.mrb[0].mxu0
      %v3303 = vadd.f32 0.0, %v3302
      %v3304 = vpop.f32.mrb[0].mxu0
      %v3305 = vpop.f32.mrb[0].mxu0
      %v3306 = vadd.f32 0.0, %v3305
      %v3307 = vpop.f32.mrb[0].mxu0
      %3308 = vmatprep.mubr.bf16.mxu0 0
      %3309 = vmatmul.mubr.bf16.gmra.mrb[0].mxu0 %v3223
      %v3310 = vpop.f32.mrb[0].mxu0
      %v3311 = vadd.f32 0.0, %v3310
      %v3312 = vpop.f32.mrb[0].mxu0
      %v3313 = vpop.f32.mrb[0].mxu0
      %v3314 = vadd.f32 0.0, %v3313
      %v3315 = vpop.f32.mrb[0].mxu0
      %3316 = vmatprep.mubr.bf16.mxu0 0
      %3317 = vmatmul.mubr.bf16.gmra.mrb[0].mxu0 %v3226
      %v3318 = vpop.f32.mrb[0].mxu0
      %v3319 = vadd.f32 0.0, %v3318
      %v3320 = vpop.f32.mrb[0].mxu0
      %v3321 = vpop.f32.mrb[0].mxu0
      %v3322 = vadd.f32 0.0, %v3321
      %v3323 = vpop.f32.mrb[0].mxu0
      %3324 = vdwg.mxu0
      %v3325 = vadd.f32 %v2724, %v3263
      %v3326 = vadd.f32 %v2725, %v3266
      %v3327 = vadd.f32 %v2726, %v3271
      %v3328 = vadd.f32 %v2727, %v3274
      %v3329 = vadd.f32 %v2728, %v3279
      %v3330 = vadd.f32 %v2729, %v3282
      %v3331 = vadd.f32 %v2730, %v3287
      %v3332 = vadd.f32 %v2731, %v3290
      %v3333 = vadd.f32 %v2732, %v3295
      %v3334 = vadd.f32 %v2733, %v3298
      %v3335 = vadd.f32 %v2734, %v3303
      %v3336 = vadd.f32 %v2735, %v3306
      %v3337 = vadd.f32 %v2736, %v3311
      %v3338 = vadd.f32 %v2737, %v3314
      %v3339 = vadd.f32 %v2738, %v3319
      %v3340 = vadd.f32 %v2739, %v3322
      %3341 = vrot.lane.b32.xlu0 %v712, 64
      %v3342 = vpop.permute.xlu0 %3341
      %3343 = vrot.lane.b32.xlu0 %v713, 64
      %v3344 = vpop.permute.xlu0 %3343
      %3345 = vrot.lane.b32.xlu0 %v714, 64
      %v3346 = vpop.permute.xlu0 %3345
      %3347 = vrot.lane.b32.xlu0 %v715, 64
      %v3348 = vpop.permute.xlu0 %3347
      %3349 = vrot.lane.b32.xlu0 %v716, 64
      %v3350 = vpop.permute.xlu0 %3349
      %3351 = vrot.lane.b32.xlu0 %v717, 64
      %v3352 = vpop.permute.xlu0 %3351
      %3353 = vrot.lane.b32.xlu0 %v718, 64
      %v3354 = vpop.permute.xlu0 %3353
      %3355 = vrot.lane.b32.xlu0 %v719, 64
      %v3356 = vpop.permute.xlu0 %3355
      %3357 = vrot.lane.b32.xlu0 %v720, 64
      %v3358 = vpop.permute.xlu0 %3357
      %3359 = vrot.lane.b32.xlu0 %v721, 64
      %v3360 = vpop.permute.xlu0 %3359
      %3361 = vrot.lane.b32.xlu0 %v722, 64
      %v3362 = vpop.permute.xlu0 %3361
      %3363 = vrot.lane.b32.xlu0 %v723, 64
      %v3364 = vpop.permute.xlu0 %3363
      %3365 = vrot.lane.b32.xlu0 %v724, 64
      %v3366 = vpop.permute.xlu0 %3365
      %3367 = vrot.lane.b32.xlu0 %v725, 64
      %v3368 = vpop.permute.xlu0 %3367
      %3369 = vrot.lane.b32.xlu0 %v726, 64
      %v3370 = vpop.permute.xlu0 %3369
      %3371 = vrot.lane.b32.xlu0 %v727, 64
      %v3372 = vpop.permute.xlu0 %3371
      %v3374 = vsel %vm1000, %v3342, 0
      %v3377 = vsel %vm1000, %v3344, 0
      %v3380 = vsel %vm1000, %v3346, 0
      %v3383 = vsel %vm1000, %v3348, 0
      %v3386 = vsel %vm1000, %v3350, 0
      %v3389 = vsel %vm1000, %v3352, 0
      %v3392 = vsel %vm1000, %v3354, 0
      %v3395 = vsel %vm1000, %v3356, 0
      %v3398 = vsel %vm1000, %v3358, 0
      %v3401 = vsel %vm1000, %v3360, 0
      %v3404 = vsel %vm1000, %v3362, 0
      %v3407 = vsel %vm1000, %v3364, 0
      %v3410 = vsel %vm1000, %v3366, 0
      %v3413 = vsel %vm1000, %v3368, 0
      %v3416 = vsel %vm1000, %v3370, 0
      %v3419 = vsel %vm1000, %v3372, 0
      %3421 = vmatprep.subr.bf16.mxu0 0
      %3422 = vmatpush1.bf16.xpose.msra.mxu0 %v3398
      %3423 = vmatprep.subr.bf16.mxu0 0
      %3424 = vmatpush1.bf16.xpose.msra.mxu0 %v3401
      %3425 = vmatprep.subr.bf16.mxu0 0
      %3426 = vmatpush1.bf16.xpose.msra.mxu0 %v3404
      %3427 = vmatprep.subr.bf16.mxu0 0
      %3428 = vmatpush1.bf16.xpose.msra.mxu0 %v3407
      %3429 = vmatprep.subr.bf16.mxu0 0
      %3430 = vmatpush1.bf16.xpose.msra.mxu0 %v3410
      %3431 = vmatprep.subr.bf16.mxu0 0
      %3432 = vmatpush1.bf16.xpose.msra.mxu0 %v3413
      %3433 = vmatprep.subr.bf16.mxu0 0
      %3434 = vmatpush1.bf16.xpose.msra.mxu0 %v3416
      %3435 = vmatprep.subr.bf16.mxu0 0
      %3436 = vmatpush1.bf16.xpose.msra.mxu0 %v3419
      %3437 = vmatprep.subr.bf16.mxu0 0
      %3438 = vmatpush1.bf16.xpose.msra.mxu0 0
      %3439 = vmatprep.subr.bf16.mxu0 0
      %3440 = vmatpush1.bf16.xpose.msra.mxu0 0
      %3441 = vmatprep.subr.bf16.mxu0 0
      %3442 = vmatpush1.bf16.xpose.msra.mxu0 0
      %3443 = vmatprep.subr.bf16.mxu0 0
      %3444 = vmatpush1.bf16.xpose.msra.mxu0 0
      %3445 = vmatprep.subr.bf16.mxu0 0
      %3446 = vmatpush1.bf16.xpose.msra.mxu0 0
      %3447 = vmatprep.subr.bf16.mxu0 0
      %3448 = vmatpush1.bf16.xpose.msra.mxu0 0
      %3449 = vmatprep.subr.bf16.mxu0 0
      %3450 = vmatpush1.bf16.xpose.msra.mxu0 0
      %3451 = vmatprep.subr.bf16.mxu0 0
      %3452 = vmatpush1.bf16.xpose.msra.mxu0 0
      %3453 = vmatprep.mubr.bf16.mxu0 0
      %3454 = vmatmul.mubr.bf16.gmra.mrb[0].mxu0 %v3374
      %v3455 = vpop.f32.mrb[0].mxu0
      %v3456 = vadd.f32 %v968, %v3455
      %v3457 = vpop.f32.mrb[0].mxu0
      %v3458 = vpop.f32.mrb[0].mxu0
      %v3459 = vadd.f32 %v969, %v3458
      %v3460 = vpop.f32.mrb[0].mxu0
      %3461 = vmatprep.mubr.bf16.mxu0 0
      %3462 = vmatmul.mubr.bf16.gmra.mrb[0].mxu0 %v3377
      %v3463 = vpop.f32.mrb[0].mxu0
      %v3464 = vadd.f32 %v970, %v3463
      %v3465 = vpop.f32.mrb[0].mxu0
      %v3466 = vpop.f32.mrb[0].mxu0
      %v3467 = vadd.f32 %v971, %v3466
      %v3468 = vpop.f32.mrb[0].mxu0
      %3469 = vmatprep.mubr.bf16.mxu0 0
      %3470 = vmatmul.mubr.bf16.gmra.mrb[0].mxu0 %v3380
      %v3471 = vpop.f32.mrb[0].mxu0
      %v3472 = vadd.f32 %v972, %v3471
      %v3473 = vpop.f32.mrb[0].mxu0
      %v3474 = vpop.f32.mrb[0].mxu0
      %v3475 = vadd.f32 %v973, %v3474
      %v3476 = vpop.f32.mrb[0].mxu0
      %3477 = vmatprep.mubr.bf16.mxu0 0
      %3478 = vmatmul.mubr.bf16.gmra.mrb[0].mxu0 %v3383
      %v3479 = vpop.f32.mrb[0].mxu0
      %v3480 = vadd.f32 %v974, %v3479
      %v3481 = vpop.f32.mrb[0].mxu0
      %v3482 = vpop.f32.mrb[0].mxu0
      %v3483 = vadd.f32 %v975, %v3482
      %v3484 = vpop.f32.mrb[0].mxu0
      %3485 = vmatprep.mubr.bf16.mxu0 0
      %3486 = vmatmul.mubr.bf16.gmra.mrb[0].mxu0 %v3386
      %v3487 = vpop.f32.mrb[0].mxu0
      %v3488 = vadd.f32 %v976, %v3487
      %v3489 = vpop.f32.mrb[0].mxu0
      %v3490 = vpop.f32.mrb[0].mxu0
      %v3491 = vadd.f32 %v977, %v3490
      %v3492 = vpop.f32.mrb[0].mxu0
      %3493 = vmatprep.mubr.bf16.mxu0 0
      %3494 = vmatmul.mubr.bf16.gmra.mrb[0].mxu0 %v3389
      %v3495 = vpop.f32.mrb[0].mxu0
      %v3496 = vadd.f32 %v978, %v3495
      %v3497 = vpop.f32.mrb[0].mxu0
      %v3498 = vpop.f32.mrb[0].mxu0
      %v3499 = vadd.f32 %v979, %v3498
      %v3500 = vpop.f32.mrb[0].mxu0
      %3501 = vmatprep.mubr.bf16.mxu0 0
      %3502 = vmatmul.mubr.bf16.gmra.mrb[0].mxu0 %v3392
      %v3503 = vpop.f32.mrb[0].mxu0
      %v3504 = vadd.f32 %v980, %v3503
      %v3505 = vpop.f32.mrb[0].mxu0
      %v3506 = vpop.f32.mrb[0].mxu0
      %v3507 = vadd.f32 %v981, %v3506
      %v3508 = vpop.f32.mrb[0].mxu0
      %3509 = vmatprep.mubr.bf16.mxu0 0
      %3510 = vmatmul.mubr.bf16.gmra.mrb[0].mxu0 %v3395
      %v3511 = vpop.f32.mrb[0].mxu0
      %v3512 = vadd.f32 %v982, %v3511
      %v3513 = vpop.f32.mrb[0].mxu0
      %v3514 = vpop.f32.mrb[0].mxu0
      %v3515 = vadd.f32 %v983, %v3514
      %v3516 = vpop.f32.mrb[0].mxu0
      %3517 = vdwg.mxu0
      %3518 = vmax.xlane.f32.xlu0 %v3456
      %v3519 = vpop.xlane.xlu0 %3518
      %3520 = vmax.xlane.f32.xlu0 %v3459
      %v3521 = vpop.xlane.xlu0 %3520
      %3522 = vmax.xlane.f32.xlu0 %v3464
      %v3523 = vpop.xlane.xlu0 %3522
      %3524 = vmax.xlane.f32.xlu0 %v3467
      %v3525 = vpop.xlane.xlu0 %3524
      %3526 = vmax.xlane.f32.xlu0 %v3472
      %v3527 = vpop.xlane.xlu0 %3526
      %3528 = vmax.xlane.f32.xlu0 %v3475
      %v3529 = vpop.xlane.xlu0 %3528
      %3530 = vmax.xlane.f32.xlu0 %v3480
      %v3531 = vpop.xlane.xlu0 %3530
      %3532 = vmax.xlane.f32.xlu0 %v3483
      %v3533 = vpop.xlane.xlu0 %3532
      %3534 = vmax.xlane.f32.xlu0 %v3488
      %v3535 = vpop.xlane.xlu0 %3534
      %3536 = vmax.xlane.f32.xlu0 %v3491
      %v3537 = vpop.xlane.xlu0 %3536
      %3538 = vmax.xlane.f32.xlu0 %v3496
      %v3539 = vpop.xlane.xlu0 %3538
      %3540 = vmax.xlane.f32.xlu0 %v3499
      %v3541 = vpop.xlane.xlu0 %3540
      %3542 = vmax.xlane.f32.xlu0 %v3504
      %v3543 = vpop.xlane.xlu0 %3542
      %3544 = vmax.xlane.f32.xlu0 %v3507
      %v3545 = vpop.xlane.xlu0 %3544
      %3546 = vmax.xlane.f32.xlu0 %v3512
      %v3547 = vpop.xlane.xlu0 %3546
      %3548 = vmax.xlane.f32.xlu0 %v3515
      %v3549 = vpop.xlane.xlu0 %3548
      %v3550 = vsub.f32 %v3456, %v3519
      %v3551 = vsub.f32 %v3459, %v3521
      %v3552 = vsub.f32 %v3464, %v3523
      %v3553 = vsub.f32 %v3467, %v3525
      %v3554 = vsub.f32 %v3472, %v3527
      %v3555 = vsub.f32 %v3475, %v3529
      %v3556 = vsub.f32 %v3480, %v3531
      %v3557 = vsub.f32 %v3483, %v3533
      %v3558 = vsub.f32 %v3488, %v3535
      %v3559 = vsub.f32 %v3491, %v3537
      %v3560 = vsub.f32 %v3496, %v3539
      %v3561 = vsub.f32 %v3499, %v3541
      %v3562 = vsub.f32 %v3504, %v3543
      %v3563 = vsub.f32 %v3507, %v3545
      %v3564 = vsub.f32 %v3512, %v3547
      %v3565 = vsub.f32 %v3515, %v3549
      %v3566 = vmul.f32 %v3550, 1.442695
      %v3567 = vpow.pop %v3566
      %v3568 = vmul.f32 %v3551, 1.442695
      %v3569 = vpow.pop %v3568
      %v3570 = vmul.f32 %v3552, 1.442695
      %v3571 = vpow.pop %v3570
      %v3572 = vmul.f32 %v3553, 1.442695
      %v3573 = vpow.pop %v3572
      %v3574 = vmul.f32 %v3554, 1.442695
      %v3575 = vpow.pop %v3574
      %v3576 = vmul.f32 %v3555, 1.442695
      %v3577 = vpow.pop %v3576
      %v3578 = vmul.f32 %v3556, 1.442695
      %v3579 = vpow.pop %v3578
      %v3580 = vmul.f32 %v3557, 1.442695
      %v3581 = vpow.pop %v3580
      %v3582 = vmul.f32 %v3558, 1.442695
      %v3583 = vpow.pop %v3582
      %v3584 = vmul.f32 %v3559, 1.442695
      %v3585 = vpow.pop %v3584
      %v3586 = vmul.f32 %v3560, 1.442695
      %v3587 = vpow.pop %v3586
      %v3588 = vmul.f32 %v3561, 1.442695
      %v3589 = vpow.pop %v3588
      %v3590 = vmul.f32 %v3562, 1.442695
      %v3591 = vpow.pop %v3590
      %v3592 = vmul.f32 %v3563, 1.442695
      %v3593 = vpow.pop %v3592
      %v3594 = vmul.f32 %v3564, 1.442695
      %v3595 = vpow.pop %v3594
      %v3596 = vmul.f32 %v3565, 1.442695
      %v3597 = vpow.pop %v3596
      %3598 = vadd.xlane.f32.xlu0 %v3567
      %v3599 = vpop.xlane.xlu0 %3598
      %3600 = vadd.xlane.f32.xlu0 %v3569
      %v3601 = vpop.xlane.xlu0 %3600
      %3602 = vadd.xlane.f32.xlu0 %v3571
      %v3603 = vpop.xlane.xlu0 %3602
      %3604 = vadd.xlane.f32.xlu0 %v3573
      %v3605 = vpop.xlane.xlu0 %3604
      %3606 = vadd.xlane.f32.xlu0 %v3575
      %v3607 = vpop.xlane.xlu0 %3606
      %3608 = vadd.xlane.f32.xlu0 %v3577
      %v3609 = vpop.xlane.xlu0 %3608
      %3610 = vadd.xlane.f32.xlu0 %v3579
      %v3611 = vpop.xlane.xlu0 %3610
      %3612 = vadd.xlane.f32.xlu0 %v3581
      %v3613 = vpop.xlane.xlu0 %3612
      %3614 = vadd.xlane.f32.xlu0 %v3583
      %v3615 = vpop.xlane.xlu0 %3614
      %3616 = vadd.xlane.f32.xlu0 %v3585
      %v3617 = vpop.xlane.xlu0 %3616
      %3618 = vadd.xlane.f32.xlu0 %v3587
      %v3619 = vpop.xlane.xlu0 %3618
      %3620 = vadd.xlane.f32.xlu0 %v3589
      %v3621 = vpop.xlane.xlu0 %3620
      %3622 = vadd.xlane.f32.xlu0 %v3591
      %v3623 = vpop.xlane.xlu0 %3622
      %3624 = vadd.xlane.f32.xlu0 %v3593
      %v3625 = vpop.xlane.xlu0 %3624
      %3626 = vadd.xlane.f32.xlu0 %v3595
      %v3627 = vpop.xlane.xlu0 %3626
      %3628 = vadd.xlane.f32.xlu0 %v3597
      %v3629 = vpop.xlane.xlu0 %3628
      %v3630 = vrcp.pop %v3599
      %v3631 = vrcp.pop %v3601
      %v3632 = vrcp.pop %v3603
      %v3633 = vrcp.pop %v3605
      %v3634 = vrcp.pop %v3607
      %v3635 = vrcp.pop %v3609
      %v3636 = vrcp.pop %v3611
      %v3637 = vrcp.pop %v3613
      %v3638 = vrcp.pop %v3615
      %v3639 = vrcp.pop %v3617
      %v3640 = vrcp.pop %v3619
      %v3641 = vrcp.pop %v3621
      %v3642 = vrcp.pop %v3623
      %v3643 = vrcp.pop %v3625
      %v3644 = vrcp.pop %v3627
      %v3645 = vrcp.pop %v3629
      %v3646 = vmul.f32 %v3567, %v3630
      %v3647 = vmul.f32 %v3569, %v3631
      %v3648 = vmul.f32 %v3571, %v3632
      %v3649 = vmul.f32 %v3573, %v3633
      %v3650 = vmul.f32 %v3575, %v3634
      %v3651 = vmul.f32 %v3577, %v3635
      %v3652 = vmul.f32 %v3579, %v3636
      %v3653 = vmul.f32 %v3581, %v3637
      %v3654 = vmul.f32 %v3583, %v3638
      %v3655 = vmul.f32 %v3585, %v3639
      %v3656 = vmul.f32 %v3587, %v3640
      %v3657 = vmul.f32 %v3589, %v3641
      %v3658 = vmul.f32 %v3591, %v3642
      %v3659 = vmul.f32 %v3593, %v3643
      %v3660 = vmul.f32 %v3595, %v3644
      %v3661 = vmul.f32 %v3597, %v3645
      %v3662 = vpack.c.bf16 %v3647, %v3646
      %v3663 = vpack.c.bf16 %v3649, %v3648
      %v3664 = vpack.c.bf16 %v3651, %v3650
      %v3665 = vpack.c.bf16 %v3653, %v3652
      %v3666 = vpack.c.bf16 %v3655, %v3654
      %v3667 = vpack.c.bf16 %v3657, %v3656
      %v3668 = vpack.c.bf16 %v3659, %v3658
      %v3669 = vpack.c.bf16 %v3661, %v3660
      %3670 = vrot.lane.b32.xlu0 %v944, 64
      %v3671 = vpop.permute.xlu0 %3670
      %3672 = vrot.lane.b32.xlu0 %v945, 64
      %v3673 = vpop.permute.xlu0 %3672
      %3674 = vrot.lane.b32.xlu0 %v946, 64
      %v3675 = vpop.permute.xlu0 %3674
      %3676 = vrot.lane.b32.xlu0 %v947, 64
      %v3677 = vpop.permute.xlu0 %3676
      %3678 = vrot.lane.b32.xlu0 %v948, 64
      %v3679 = vpop.permute.xlu0 %3678
      %3680 = vrot.lane.b32.xlu0 %v949, 64
      %v3681 = vpop.permute.xlu0 %3680
      %3682 = vrot.lane.b32.xlu0 %v950, 64
      %v3683 = vpop.permute.xlu0 %3682
      %3684 = vrot.lane.b32.xlu0 %v951, 64
      %v3685 = vpop.permute.xlu0 %3684
      %3694 = vmatprep.subr.bf16.mxu0 0
      %3695 = vmatpush1.bf16.msra.mxu0 %v3671
      %3696 = vmatprep.subr.bf16.mxu0 0
      %3697 = vmatpush1.bf16.msra.mxu0 %v3673
      %3698 = vmatprep.subr.bf16.mxu0 0
      %3699 = vmatpush1.bf16.msra.mxu0 %v3675
      %3700 = vmatprep.subr.bf16.mxu0 0
      %3701 = vmatpush1.bf16.msra.mxu0 %v3677
      %3702 = vmatprep.subr.bf16.mxu0 0
      %3703 = vmatpush1.bf16.msra.mxu0 %v3679
      %3704 = vmatprep.subr.bf16.mxu0 0
      %3705 = vmatpush1.bf16.msra.mxu0 %v3681
      %3706 = vmatprep.subr.bf16.mxu0 0
      %3707 = vmatpush1.bf16.msra.mxu0 %v3683
      %3708 = vmatprep.subr.bf16.mxu0 0
      %3709 = vmatpush1.bf16.msra.mxu0 %v3685
      %3710 = vmatprep.subr.bf16.mxu0 0
      %3711 = vmatpush1.bf16.msra.mxu0 0
      %3712 = vmatprep.subr.bf16.mxu0 0
      %3713 = vmatpush1.bf16.msra.mxu0 0
      %3714 = vmatprep.subr.bf16.mxu0 0
      %3715 = vmatpush1.bf16.msra.mxu0 0
      %3716 = vmatprep.subr.bf16.mxu0 0
      %3717 = vmatpush1.bf16.msra.mxu0 0
      %3718 = vmatprep.subr.bf16.mxu0 0
      %3719 = vmatpush1.bf16.msra.mxu0 0
      %3720 = vmatprep.subr.bf16.mxu0 0
      %3721 = vmatpush1.bf16.msra.mxu0 0
      %3722 = vmatprep.subr.bf16.mxu0 0
      %3723 = vmatpush1.bf16.msra.mxu0 0
      %3724 = vmatprep.subr.bf16.mxu0 0
      %3725 = vmatpush1.bf16.msra.mxu0 0
      %3726 = vmatprep.mubr.bf16.mxu0 0
      %3727 = vmatmul.mubr.bf16.gmra.mrb[0].mxu0 %v3662
      %v3728 = vpop.f32.mrb[0].mxu0
      %v3729 = vadd.f32 0.0, %v3728
      %v3730 = vpop.f32.mrb[0].mxu0
      %v3731 = vpop.f32.mrb[0].mxu0
      %v3732 = vadd.f32 0.0, %v3731
      %v3733 = vpop.f32.mrb[0].mxu0
      %3734 = vmatprep.mubr.bf16.mxu0 0
      %3735 = vmatmul.mubr.bf16.gmra.mrb[0].mxu0 %v3663
      %v3736 = vpop.f32.mrb[0].mxu0
      %v3737 = vadd.f32 0.0, %v3736
      %v3738 = vpop.f32.mrb[0].mxu0
      %v3739 = vpop.f32.mrb[0].mxu0
      %v3740 = vadd.f32 0.0, %v3739
      %v3741 = vpop.f32.mrb[0].mxu0
      %3742 = vmatprep.mubr.bf16.mxu0 0
      %3743 = vmatmul.mubr.bf16.gmra.mrb[0].mxu0 %v3664
      %v3744 = vpop.f32.mrb[0].mxu0
      %v3745 = vadd.f32 0.0, %v3744
      %v3746 = vpop.f32.mrb[0].mxu0
      %v3747 = vpop.f32.mrb[0].mxu0
      %v3748 = vadd.f32 0.0, %v3747
      %v3749 = vpop.f32.mrb[0].mxu0
      %3750 = vmatprep.mubr.bf16.mxu0 0
      %3751 = vmatmul.mubr.bf16.gmra.mrb[0].mxu0 %v3665
      %v3752 = vpop.f32.mrb[0].mxu0
      %v3753 = vadd.f32 0.0, %v3752
      %v3754 = vpop.f32.mrb[0].mxu0
      %v3755 = vpop.f32.mrb[0].mxu0
      %v3756 = vadd.f32 0.0, %v3755
      %v3757 = vpop.f32.mrb[0].mxu0
      %3758 = vmatprep.mubr.bf16.mxu0 0
      %3759 = vmatmul.mubr.bf16.gmra.mrb[0].mxu0 %v3666
      %v3760 = vpop.f32.mrb[0].mxu0
      %v3761 = vadd.f32 0.0, %v3760
      %v3762 = vpop.f32.mrb[0].mxu0
      %v3763 = vpop.f32.mrb[0].mxu0
      %v3764 = vadd.f32 0.0, %v3763
      %v3765 = vpop.f32.mrb[0].mxu0
      %3766 = vmatprep.mubr.bf16.mxu0 0
      %3767 = vmatmul.mubr.bf16.gmra.mrb[0].mxu0 %v3667
      %v3768 = vpop.f32.mrb[0].mxu0
      %v3769 = vadd.f32 0.0, %v3768
      %v3770 = vpop.f32.mrb[0].mxu0
      %v3771 = vpop.f32.mrb[0].mxu0
      %v3772 = vadd.f32 0.0, %v3771
      %v3773 = vpop.f32.mrb[0].mxu0
      %3774 = vmatprep.mubr.bf16.mxu0 0
      %3775 = vmatmul.mubr.bf16.gmra.mrb[0].mxu0 %v3668
      %v3776 = vpop.f32.mrb[0].mxu0
      %v3777 = vadd.f32 0.0, %v3776
      %v3778 = vpop.f32.mrb[0].mxu0
      %v3779 = vpop.f32.mrb[0].mxu0
      %v3780 = vadd.f32 0.0, %v3779
      %v3781 = vpop.f32.mrb[0].mxu0
      %3782 = vmatprep.mubr.bf16.mxu0 0
      %3783 = vmatmul.mubr.bf16.gmra.mrb[0].mxu0 %v3669
      %v3784 = vpop.f32.mrb[0].mxu0
      %v3785 = vadd.f32 0.0, %v3784
      %v3786 = vpop.f32.mrb[0].mxu0
      %v3787 = vpop.f32.mrb[0].mxu0
      %v3788 = vadd.f32 0.0, %v3787
      %v3789 = vpop.f32.mrb[0].mxu0
      %3790 = vdwg.mxu0
      %v3791 = vpack.c.bf16 %v3732, %v3729
      %v3792 = vpack.c.bf16 %v3740, %v3737
      %v3793 = vpack.c.bf16 %v3748, %v3745
      %v3794 = vpack.c.bf16 %v3756, %v3753
      %v3795 = vpack.c.bf16 %v3764, %v3761
      %v3796 = vpack.c.bf16 %v3772, %v3769
      %v3797 = vpack.c.bf16 %v3780, %v3777
      %v3798 = vpack.c.bf16 %v3788, %v3785
      %v3801 = vunpack.c.l.b16 %v992
      %v3802 = vunpack.c.l.b16 %v993
      %v3803 = vpack.c.b16 %v3802, %v3801
      %v3806 = vsel %vm1000, %v3791, 0
      %v3809 = vsel %vm1000, %v3792, 0
      %v3812 = vsel %vm1000, %v3793, 0
      %v3815 = vsel %vm1000, %v3794, 0
      %v3818 = vsel %vm1000, %v3795, 0
      %v3821 = vsel %vm1000, %v3796, 0
      %v3824 = vsel %vm1000, %v3797, 0
      %v3827 = vsel %vm1000, %v3798, 0
      %3829 = vmatprep.subr.bf16.mxu0 0
      %3830 = vmatpush1.bf16.msra.mxu0 %v3803
      %3831 = vmatprep.subr.bf16.mxu0 0
      %3832 = vmatpush1.bf16.msra.mxu0 0
      %3833 = vmatprep.subr.bf16.mxu0 0
      %3834 = vmatpush1.bf16.msra.mxu0 0
      %3835 = vmatprep.subr.bf16.mxu0 0
      %3836 = vmatpush1.bf16.msra.mxu0 0
      %3837 = vmatprep.subr.bf16.mxu0 0
      %3838 = vmatpush1.bf16.msra.mxu0 0
      %3839 = vmatprep.subr.bf16.mxu0 0
      %3840 = vmatpush1.bf16.msra.mxu0 0
      %3841 = vmatprep.subr.bf16.mxu0 0
      %3842 = vmatpush1.bf16.msra.mxu0 0
      %3843 = vmatprep.subr.bf16.mxu0 0
      %3844 = vmatpush1.bf16.msra.mxu0 0
      %3845 = vmatprep.subr.bf16.mxu0 0
      %3846 = vmatpush1.bf16.msra.mxu0 0
      %3847 = vmatprep.subr.bf16.mxu0 0
      %3848 = vmatpush1.bf16.msra.mxu0 0
      %3849 = vmatprep.subr.bf16.mxu0 0
      %3850 = vmatpush1.bf16.msra.mxu0 0
      %3851 = vmatprep.subr.bf16.mxu0 0
      %3852 = vmatpush1.bf16.msra.mxu0 0
      %3853 = vmatprep.subr.bf16.mxu0 0
      %3854 = vmatpush1.bf16.msra.mxu0 0
      %3855 = vmatprep.subr.bf16.mxu0 0
      %3856 = vmatpush1.bf16.msra.mxu0 0
      %3857 = vmatprep.subr.bf16.mxu0 0
      %3858 = vmatpush1.bf16.msra.mxu0 0
      %3859 = vmatprep.subr.bf16.mxu0 0
      %3860 = vmatpush1.bf16.msra.mxu0 0
      %3861 = vmatprep.mubr.bf16.mxu0 0
      %3862 = vmatmul.mubr.bf16.gmra.mrb[0].mxu0 %v3806
      %v3863 = vpop.f32.mrb[0].mxu0
      %v3864 = vadd.f32 0.0, %v3863
      %v3865 = vpop.f32.mrb[0].mxu0
      %v3866 = vpop.f32.mrb[0].mxu0
      %v3867 = vadd.f32 0.0, %v3866
      %v3868 = vpop.f32.mrb[0].mxu0
      %3869 = vmatprep.mubr.bf16.mxu0 0
      %3870 = vmatmul.mubr.bf16.gmra.mrb[0].mxu0 %v3809
      %v3871 = vpop.f32.mrb[0].mxu0
      %v3872 = vadd.f32 0.0, %v3871
      %v3873 = vpop.f32.mrb[0].mxu0
      %v3874 = vpop.f32.mrb[0].mxu0
      %v3875 = vadd.f32 0.0, %v3874
      %v3876 = vpop.f32.mrb[0].mxu0
      %3877 = vmatprep.mubr.bf16.mxu0 0
      %3878 = vmatmul.mubr.bf16.gmra.mrb[0].mxu0 %v3812
      %v3879 = vpop.f32.mrb[0].mxu0
      %v3880 = vadd.f32 0.0, %v3879
      %v3881 = vpop.f32.mrb[0].mxu0
      %v3882 = vpop.f32.mrb[0].mxu0
      %v3883 = vadd.f32 0.0, %v3882
      %v3884 = vpop.f32.mrb[0].mxu0
      %3885 = vmatprep.mubr.bf16.mxu0 0
      %3886 = vmatmul.mubr.bf16.gmra.mrb[0].mxu0 %v3815
      %v3887 = vpop.f32.mrb[0].mxu0
      %v3888 = vadd.f32 0.0, %v3887
      %v3889 = vpop.f32.mrb[0].mxu0
      %v3890 = vpop.f32.mrb[0].mxu0
      %v3891 = vadd.f32 0.0, %v3890
      %v3892 = vpop.f32.mrb[0].mxu0
      %3893 = vmatprep.mubr.bf16.mxu0 0
      %3894 = vmatmul.mubr.bf16.gmra.mrb[0].mxu0 %v3818
      %v3895 = vpop.f32.mrb[0].mxu0
      %v3896 = vadd.f32 0.0, %v3895
      %v3897 = vpop.f32.mrb[0].mxu0
      %v3898 = vpop.f32.mrb[0].mxu0
      %v3899 = vadd.f32 0.0, %v3898
      %v3900 = vpop.f32.mrb[0].mxu0
      %3901 = vmatprep.mubr.bf16.mxu0 0
      %3902 = vmatmul.mubr.bf16.gmra.mrb[0].mxu0 %v3821
      %v3903 = vpop.f32.mrb[0].mxu0
      %v3904 = vadd.f32 0.0, %v3903
      %v3905 = vpop.f32.mrb[0].mxu0
      %v3906 = vpop.f32.mrb[0].mxu0
      %v3907 = vadd.f32 0.0, %v3906
      %v3908 = vpop.f32.mrb[0].mxu0
      %3909 = vmatprep.mubr.bf16.mxu0 0
      %3910 = vmatmul.mubr.bf16.gmra.mrb[0].mxu0 %v3824
      %v3911 = vpop.f32.mrb[0].mxu0
      %v3912 = vadd.f32 0.0, %v3911
      %v3913 = vpop.f32.mrb[0].mxu0
      %v3914 = vpop.f32.mrb[0].mxu0
      %v3915 = vadd.f32 0.0, %v3914
      %v3916 = vpop.f32.mrb[0].mxu0
      %3917 = vmatprep.mubr.bf16.mxu0 0
      %3918 = vmatmul.mubr.bf16.gmra.mrb[0].mxu0 %v3827
      %v3919 = vpop.f32.mrb[0].mxu0
      %v3920 = vadd.f32 0.0, %v3919
      %v3921 = vpop.f32.mrb[0].mxu0
      %v3922 = vpop.f32.mrb[0].mxu0
      %v3923 = vadd.f32 0.0, %v3922
      %v3924 = vpop.f32.mrb[0].mxu0
      %3925 = vdwg.mxu0
      %v3926 = vadd.f32 %v3325, %v3864
      %v3927 = vadd.f32 %v3326, %v3867
      %v3928 = vadd.f32 %v3327, %v3872
      %v3929 = vadd.f32 %v3328, %v3875
      %v3930 = vadd.f32 %v3329, %v3880
      %v3931 = vadd.f32 %v3330, %v3883
      %v3932 = vadd.f32 %v3331, %v3888
      %v3933 = vadd.f32 %v3332, %v3891
      %v3934 = vadd.f32 %v3333, %v3896
      %v3935 = vadd.f32 %v3334, %v3899
      %v3936 = vadd.f32 %v3335, %v3904
      %v3937 = vadd.f32 %v3336, %v3907
      %v3938 = vadd.f32 %v3337, %v3912
      %v3939 = vadd.f32 %v3338, %v3915
      %v3940 = vadd.f32 %v3339, %v3920
      %v3941 = vadd.f32 %v3340, %v3923
      %3942 = vrot.lane.b32.xlu0 %v712, 48
      %v3943 = vpop.permute.xlu0 %3942
      %3944 = vrot.lane.b32.xlu0 %v713, 48
      %v3945 = vpop.permute.xlu0 %3944
      %3946 = vrot.lane.b32.xlu0 %v714, 48
      %v3947 = vpop.permute.xlu0 %3946
      %3948 = vrot.lane.b32.xlu0 %v715, 48
      %v3949 = vpop.permute.xlu0 %3948
      %3950 = vrot.lane.b32.xlu0 %v716, 48
      %v3951 = vpop.permute.xlu0 %3950
      %3952 = vrot.lane.b32.xlu0 %v717, 48
      %v3953 = vpop.permute.xlu0 %3952
      %3954 = vrot.lane.b32.xlu0 %v718, 48
      %v3955 = vpop.permute.xlu0 %3954
      %3956 = vrot.lane.b32.xlu0 %v719, 48
      %v3957 = vpop.permute.xlu0 %3956
      %3958 = vrot.lane.b32.xlu0 %v720, 48
      %v3959 = vpop.permute.xlu0 %3958
      %3960 = vrot.lane.b32.xlu0 %v721, 48
      %v3961 = vpop.permute.xlu0 %3960
      %3962 = vrot.lane.b32.xlu0 %v722, 48
      %v3963 = vpop.permute.xlu0 %3962
      %3964 = vrot.lane.b32.xlu0 %v723, 48
      %v3965 = vpop.permute.xlu0 %3964
      %3966 = vrot.lane.b32.xlu0 %v724, 48
      %v3967 = vpop.permute.xlu0 %3966
      %3968 = vrot.lane.b32.xlu0 %v725, 48
      %v3969 = vpop.permute.xlu0 %3968
      %3970 = vrot.lane.b32.xlu0 %v726, 48
      %v3971 = vpop.permute.xlu0 %3970
      %3972 = vrot.lane.b32.xlu0 %v727, 48
      %v3973 = vpop.permute.xlu0 %3972
      %v3975 = vsel %vm1000, %v3943, 0
      %v3978 = vsel %vm1000, %v3945, 0
      %v3981 = vsel %vm1000, %v3947, 0
      %v3984 = vsel %vm1000, %v3949, 0
      %v3987 = vsel %vm1000, %v3951, 0
      %v3990 = vsel %vm1000, %v3953, 0
      %v3993 = vsel %vm1000, %v3955, 0
      %v3996 = vsel %vm1000, %v3957, 0
      %v3999 = vsel %vm1000, %v3959, 0
      %v4002 = vsel %vm1000, %v3961, 0
      %v4005 = vsel %vm1000, %v3963, 0
      %v4008 = vsel %vm1000, %v3965, 0
      %v4011 = vsel %vm1000, %v3967, 0
      %v4014 = vsel %vm1000, %v3969, 0
      %v4017 = vsel %vm1000, %v3971, 0
      %v4020 = vsel %vm1000, %v3973, 0
      %4022 = vmatprep.subr.bf16.mxu0 0
      %4023 = vmatpush1.bf16.xpose.msra.mxu0 %v3999
      %4024 = vmatprep.subr.bf16.mxu0 0
      %4025 = vmatpush1.bf16.xpose.msra.mxu0 %v4002
      %4026 = vmatprep.subr.bf16.mxu0 0
      %4027 = vmatpush1.bf16.xpose.msra.mxu0 %v4005
      %4028 = vmatprep.subr.bf16.mxu0 0
      %4029 = vmatpush1.bf16.xpose.msra.mxu0 %v4008
      %4030 = vmatprep.subr.bf16.mxu0 0
      %4031 = vmatpush1.bf16.xpose.msra.mxu0 %v4011
      %4032 = vmatprep.subr.bf16.mxu0 0
      %4033 = vmatpush1.bf16.xpose.msra.mxu0 %v4014
      %4034 = vmatprep.subr.bf16.mxu0 0
      %4035 = vmatpush1.bf16.xpose.msra.mxu0 %v4017
      %4036 = vmatprep.subr.bf16.mxu0 0
      %4037 = vmatpush1.bf16.xpose.msra.mxu0 %v4020
      %4038 = vmatprep.subr.bf16.mxu0 0
      %4039 = vmatpush1.bf16.xpose.msra.mxu0 0
      %4040 = vmatprep.subr.bf16.mxu0 0
      %4041 = vmatpush1.bf16.xpose.msra.mxu0 0
      %4042 = vmatprep.subr.bf16.mxu0 0
      %4043 = vmatpush1.bf16.xpose.msra.mxu0 0
      %4044 = vmatprep.subr.bf16.mxu0 0
      %4045 = vmatpush1.bf16.xpose.msra.mxu0 0
      %4046 = vmatprep.subr.bf16.mxu0 0
      %4047 = vmatpush1.bf16.xpose.msra.mxu0 0
      %4048 = vmatprep.subr.bf16.mxu0 0
      %4049 = vmatpush1.bf16.xpose.msra.mxu0 0
      %4050 = vmatprep.subr.bf16.mxu0 0
      %4051 = vmatpush1.bf16.xpose.msra.mxu0 0
      %4052 = vmatprep.subr.bf16.mxu0 0
      %4053 = vmatpush1.bf16.xpose.msra.mxu0 0
      %4054 = vmatprep.mubr.bf16.mxu0 0
      %4055 = vmatmul.mubr.bf16.gmra.mrb[0].mxu0 %v3975
      %v4056 = vpop.f32.mrb[0].mxu0
      %v4057 = vadd.f32 %v968, %v4056
      %v4058 = vpop.f32.mrb[0].mxu0
      %v4059 = vpop.f32.mrb[0].mxu0
      %v4060 = vadd.f32 %v969, %v4059
      %v4061 = vpop.f32.mrb[0].mxu0
      %4062 = vmatprep.mubr.bf16.mxu0 0
      %4063 = vmatmul.mubr.bf16.gmra.mrb[0].mxu0 %v3978
      %v4064 = vpop.f32.mrb[0].mxu0
      %v4065 = vadd.f32 %v970, %v4064
      %v4066 = vpop.f32.mrb[0].mxu0
      %v4067 = vpop.f32.mrb[0].mxu0
      %v4068 = vadd.f32 %v971, %v4067
      %v4069 = vpop.f32.mrb[0].mxu0
      %4070 = vmatprep.mubr.bf16.mxu0 0
      %4071 = vmatmul.mubr.bf16.gmra.mrb[0].mxu0 %v3981
      %v4072 = vpop.f32.mrb[0].mxu0
      %v4073 = vadd.f32 %v972, %v4072
      %v4074 = vpop.f32.mrb[0].mxu0
      %v4075 = vpop.f32.mrb[0].mxu0
      %v4076 = vadd.f32 %v973, %v4075
      %v4077 = vpop.f32.mrb[0].mxu0
      %4078 = vmatprep.mubr.bf16.mxu0 0
      %4079 = vmatmul.mubr.bf16.gmra.mrb[0].mxu0 %v3984
      %v4080 = vpop.f32.mrb[0].mxu0
      %v4081 = vadd.f32 %v974, %v4080
      %v4082 = vpop.f32.mrb[0].mxu0
      %v4083 = vpop.f32.mrb[0].mxu0
      %v4084 = vadd.f32 %v975, %v4083
      %v4085 = vpop.f32.mrb[0].mxu0
      %4086 = vmatprep.mubr.bf16.mxu0 0
      %4087 = vmatmul.mubr.bf16.gmra.mrb[0].mxu0 %v3987
      %v4088 = vpop.f32.mrb[0].mxu0
      %v4089 = vadd.f32 %v976, %v4088
      %v4090 = vpop.f32.mrb[0].mxu0
      %v4091 = vpop.f32.mrb[0].mxu0
      %v4092 = vadd.f32 %v977, %v4091
      %v4093 = vpop.f32.mrb[0].mxu0
      %4094 = vmatprep.mubr.bf16.mxu0 0
      %4095 = vmatmul.mubr.bf16.gmra.mrb[0].mxu0 %v3990
      %v4096 = vpop.f32.mrb[0].mxu0
      %v4097 = vadd.f32 %v978, %v4096
      %v4098 = vpop.f32.mrb[0].mxu0
      %v4099 = vpop.f32.mrb[0].mxu0
      %v4100 = vadd.f32 %v979, %v4099
      %v4101 = vpop.f32.mrb[0].mxu0
      %4102 = vmatprep.mubr.bf16.mxu0 0
      %4103 = vmatmul.mubr.bf16.gmra.mrb[0].mxu0 %v3993
      %v4104 = vpop.f32.mrb[0].mxu0
      %v4105 = vadd.f32 %v980, %v4104
      %v4106 = vpop.f32.mrb[0].mxu0
      %v4107 = vpop.f32.mrb[0].mxu0
      %v4108 = vadd.f32 %v981, %v4107
      %v4109 = vpop.f32.mrb[0].mxu0
      %4110 = vmatprep.mubr.bf16.mxu0 0
      %4111 = vmatmul.mubr.bf16.gmra.mrb[0].mxu0 %v3996
      %v4112 = vpop.f32.mrb[0].mxu0
      %v4113 = vadd.f32 %v982, %v4112
      %v4114 = vpop.f32.mrb[0].mxu0
      %v4115 = vpop.f32.mrb[0].mxu0
      %v4116 = vadd.f32 %v983, %v4115
      %v4117 = vpop.f32.mrb[0].mxu0
      %4118 = vdwg.mxu0
      %4119 = vmax.xlane.f32.xlu0 %v4057
      %v4120 = vpop.xlane.xlu0 %4119
      %4121 = vmax.xlane.f32.xlu0 %v4060
      %v4122 = vpop.xlane.xlu0 %4121
      %4123 = vmax.xlane.f32.xlu0 %v4065
      %v4124 = vpop.xlane.xlu0 %4123
      %4125 = vmax.xlane.f32.xlu0 %v4068
      %v4126 = vpop.xlane.xlu0 %4125
      %4127 = vmax.xlane.f32.xlu0 %v4073
      %v4128 = vpop.xlane.xlu0 %4127
      %4129 = vmax.xlane.f32.xlu0 %v4076
      %v4130 = vpop.xlane.xlu0 %4129
      %4131 = vmax.xlane.f32.xlu0 %v4081
      %v4132 = vpop.xlane.xlu0 %4131
      %4133 = vmax.xlane.f32.xlu0 %v4084
      %v4134 = vpop.xlane.xlu0 %4133
      %4135 = vmax.xlane.f32.xlu0 %v4089
      %v4136 = vpop.xlane.xlu0 %4135
      %4137 = vmax.xlane.f32.xlu0 %v4092
      %v4138 = vpop.xlane.xlu0 %4137
      %4139 = vmax.xlane.f32.xlu0 %v4097
      %v4140 = vpop.xlane.xlu0 %4139
      %4141 = vmax.xlane.f32.xlu0 %v4100
      %v4142 = vpop.xlane.xlu0 %4141
      %4143 = vmax.xlane.f32.xlu0 %v4105
      %v4144 = vpop.xlane.xlu0 %4143
      %4145 = vmax.xlane.f32.xlu0 %v4108
      %v4146 = vpop.xlane.xlu0 %4145
      %4147 = vmax.xlane.f32.xlu0 %v4113
      %v4148 = vpop.xlane.xlu0 %4147
      %4149 = vmax.xlane.f32.xlu0 %v4116
      %v4150 = vpop.xlane.xlu0 %4149
      %v4151 = vsub.f32 %v4057, %v4120
      %v4152 = vsub.f32 %v4060, %v4122
      %v4153 = vsub.f32 %v4065, %v4124
      %v4154 = vsub.f32 %v4068, %v4126
      %v4155 = vsub.f32 %v4073, %v4128
      %v4156 = vsub.f32 %v4076, %v4130
      %v4157 = vsub.f32 %v4081, %v4132
      %v4158 = vsub.f32 %v4084, %v4134
      %v4159 = vsub.f32 %v4089, %v4136
      %v4160 = vsub.f32 %v4092, %v4138
      %v4161 = vsub.f32 %v4097, %v4140
      %v4162 = vsub.f32 %v4100, %v4142
      %v4163 = vsub.f32 %v4105, %v4144
      %v4164 = vsub.f32 %v4108, %v4146
      %v4165 = vsub.f32 %v4113, %v4148
      %v4166 = vsub.f32 %v4116, %v4150
      %v4167 = vmul.f32 %v4151, 1.442695
      %v4168 = vpow.pop %v4167
      %v4169 = vmul.f32 %v4152, 1.442695
      %v4170 = vpow.pop %v4169
      %v4171 = vmul.f32 %v4153, 1.442695
      %v4172 = vpow.pop %v4171
      %v4173 = vmul.f32 %v4154, 1.442695
      %v4174 = vpow.pop %v4173
      %v4175 = vmul.f32 %v4155, 1.442695
      %v4176 = vpow.pop %v4175
      %v4177 = vmul.f32 %v4156, 1.442695
      %v4178 = vpow.pop %v4177
      %v4179 = vmul.f32 %v4157, 1.442695
      %v4180 = vpow.pop %v4179
      %v4181 = vmul.f32 %v4158, 1.442695
      %v4182 = vpow.pop %v4181
      %v4183 = vmul.f32 %v4159, 1.442695
      %v4184 = vpow.pop %v4183
      %v4185 = vmul.f32 %v4160, 1.442695
      %v4186 = vpow.pop %v4185
      %v4187 = vmul.f32 %v4161, 1.442695
      %v4188 = vpow.pop %v4187
      %v4189 = vmul.f32 %v4162, 1.442695
      %v4190 = vpow.pop %v4189
      %v4191 = vmul.f32 %v4163, 1.442695
      %v4192 = vpow.pop %v4191
      %v4193 = vmul.f32 %v4164, 1.442695
      %v4194 = vpow.pop %v4193
      %v4195 = vmul.f32 %v4165, 1.442695
      %v4196 = vpow.pop %v4195
      %v4197 = vmul.f32 %v4166, 1.442695
      %v4198 = vpow.pop %v4197
      %4199 = vadd.xlane.f32.xlu0 %v4168
      %v4200 = vpop.xlane.xlu0 %4199
      %4201 = vadd.xlane.f32.xlu0 %v4170
      %v4202 = vpop.xlane.xlu0 %4201
      %4203 = vadd.xlane.f32.xlu0 %v4172
      %v4204 = vpop.xlane.xlu0 %4203
      %4205 = vadd.xlane.f32.xlu0 %v4174
      %v4206 = vpop.xlane.xlu0 %4205
      %4207 = vadd.xlane.f32.xlu0 %v4176
      %v4208 = vpop.xlane.xlu0 %4207
      %4209 = vadd.xlane.f32.xlu0 %v4178
      %v4210 = vpop.xlane.xlu0 %4209
      %4211 = vadd.xlane.f32.xlu0 %v4180
      %v4212 = vpop.xlane.xlu0 %4211
      %4213 = vadd.xlane.f32.xlu0 %v4182
      %v4214 = vpop.xlane.xlu0 %4213
      %4215 = vadd.xlane.f32.xlu0 %v4184
      %v4216 = vpop.xlane.xlu0 %4215
      %4217 = vadd.xlane.f32.xlu0 %v4186
      %v4218 = vpop.xlane.xlu0 %4217
      %4219 = vadd.xlane.f32.xlu0 %v4188
      %v4220 = vpop.xlane.xlu0 %4219
      %4221 = vadd.xlane.f32.xlu0 %v4190
      %v4222 = vpop.xlane.xlu0 %4221
      %4223 = vadd.xlane.f32.xlu0 %v4192
      %v4224 = vpop.xlane.xlu0 %4223
      %4225 = vadd.xlane.f32.xlu0 %v4194
      %v4226 = vpop.xlane.xlu0 %4225
      %4227 = vadd.xlane.f32.xlu0 %v4196
      %v4228 = vpop.xlane.xlu0 %4227
      %4229 = vadd.xlane.f32.xlu0 %v4198
      %v4230 = vpop.xlane.xlu0 %4229
      %v4231 = vrcp.pop %v4200
      %v4232 = vrcp.pop %v4202
      %v4233 = vrcp.pop %v4204
      %v4234 = vrcp.pop %v4206
      %v4235 = vrcp.pop %v4208
      %v4236 = vrcp.pop %v4210
      %v4237 = vrcp.pop %v4212
      %v4238 = vrcp.pop %v4214
      %v4239 = vrcp.pop %v4216
      %v4240 = vrcp.pop %v4218
      %v4241 = vrcp.pop %v4220
      %v4242 = vrcp.pop %v4222
      %v4243 = vrcp.pop %v4224
      %v4244 = vrcp.pop %v4226
      %v4245 = vrcp.pop %v4228
      %v4246 = vrcp.pop %v4230
      %v4247 = vmul.f32 %v4168, %v4231
      %v4248 = vmul.f32 %v4170, %v4232
      %v4249 = vmul.f32 %v4172, %v4233
      %v4250 = vmul.f32 %v4174, %v4234
      %v4251 = vmul.f32 %v4176, %v4235
      %v4252 = vmul.f32 %v4178, %v4236
      %v4253 = vmul.f32 %v4180, %v4237
      %v4254 = vmul.f32 %v4182, %v4238
      %v4255 = vmul.f32 %v4184, %v4239
      %v4256 = vmul.f32 %v4186, %v4240
      %v4257 = vmul.f32 %v4188, %v4241
      %v4258 = vmul.f32 %v4190, %v4242
      %v4259 = vmul.f32 %v4192, %v4243
      %v4260 = vmul.f32 %v4194, %v4244
      %v4261 = vmul.f32 %v4196, %v4245
      %v4262 = vmul.f32 %v4198, %v4246
      %v4263 = vpack.c.bf16 %v4248, %v4247
      %v4264 = vpack.c.bf16 %v4250, %v4249
      %v4265 = vpack.c.bf16 %v4252, %v4251
      %v4266 = vpack.c.bf16 %v4254, %v4253
      %v4267 = vpack.c.bf16 %v4256, %v4255
      %v4268 = vpack.c.bf16 %v4258, %v4257
      %v4269 = vpack.c.bf16 %v4260, %v4259
      %v4270 = vpack.c.bf16 %v4262, %v4261
      %4271 = vrot.lane.b32.xlu0 %v944, 48
      %v4272 = vpop.permute.xlu0 %4271
      %4273 = vrot.lane.b32.xlu0 %v945, 48
      %v4274 = vpop.permute.xlu0 %4273
      %4275 = vrot.lane.b32.xlu0 %v946, 48
      %v4276 = vpop.permute.xlu0 %4275
      %4277 = vrot.lane.b32.xlu0 %v947, 48
      %v4278 = vpop.permute.xlu0 %4277
      %4279 = vrot.lane.b32.xlu0 %v948, 48
      %v4280 = vpop.permute.xlu0 %4279
      %4281 = vrot.lane.b32.xlu0 %v949, 48
      %v4282 = vpop.permute.xlu0 %4281
      %4283 = vrot.lane.b32.xlu0 %v950, 48
      %v4284 = vpop.permute.xlu0 %4283
      %4285 = vrot.lane.b32.xlu0 %v951, 48
      %v4286 = vpop.permute.xlu0 %4285
      %4295 = vmatprep.subr.bf16.mxu0 0
      %4296 = vmatpush1.bf16.msra.mxu0 %v4272
      %4297 = vmatprep.subr.bf16.mxu0 0
      %4298 = vmatpush1.bf16.msra.mxu0 %v4274
      %4299 = vmatprep.subr.bf16.mxu0 0
      %4300 = vmatpush1.bf16.msra.mxu0 %v4276
      %4301 = vmatprep.subr.bf16.mxu0 0
      %4302 = vmatpush1.bf16.msra.mxu0 %v4278
      %4303 = vmatprep.subr.bf16.mxu0 0
      %4304 = vmatpush1.bf16.msra.mxu0 %v4280
      %4305 = vmatprep.subr.bf16.mxu0 0
      %4306 = vmatpush1.bf16.msra.mxu0 %v4282
      %4307 = vmatprep.subr.bf16.mxu0 0
      %4308 = vmatpush1.bf16.msra.mxu0 %v4284
      %4309 = vmatprep.subr.bf16.mxu0 0
      %4310 = vmatpush1.bf16.msra.mxu0 %v4286
      %4311 = vmatprep.subr.bf16.mxu0 0
      %4312 = vmatpush1.bf16.msra.mxu0 0
      %4313 = vmatprep.subr.bf16.mxu0 0
      %4314 = vmatpush1.bf16.msra.mxu0 0
      %4315 = vmatprep.subr.bf16.mxu0 0
      %4316 = vmatpush1.bf16.msra.mxu0 0
      %4317 = vmatprep.subr.bf16.mxu0 0
      %4318 = vmatpush1.bf16.msra.mxu0 0
      %4319 = vmatprep.subr.bf16.mxu0 0
      %4320 = vmatpush1.bf16.msra.mxu0 0
      %4321 = vmatprep.subr.bf16.mxu0 0
      %4322 = vmatpush1.bf16.msra.mxu0 0
      %4323 = vmatprep.subr.bf16.mxu0 0
      %4324 = vmatpush1.bf16.msra.mxu0 0
      %4325 = vmatprep.subr.bf16.mxu0 0
      %4326 = vmatpush1.bf16.msra.mxu0 0
      %4327 = vmatprep.mubr.bf16.mxu0 0
      %4328 = vmatmul.mubr.bf16.gmra.mrb[0].mxu0 %v4263
      %v4329 = vpop.f32.mrb[0].mxu0
      %v4330 = vadd.f32 0.0, %v4329
      %v4331 = vpop.f32.mrb[0].mxu0
      %v4332 = vpop.f32.mrb[0].mxu0
      %v4333 = vadd.f32 0.0, %v4332
      %v4334 = vpop.f32.mrb[0].mxu0
      %4335 = vmatprep.mubr.bf16.mxu0 0
      %4336 = vmatmul.mubr.bf16.gmra.mrb[0].mxu0 %v4264
      %v4337 = vpop.f32.mrb[0].mxu0
      %v4338 = vadd.f32 0.0, %v4337
      %v4339 = vpop.f32.mrb[0].mxu0
      %v4340 = vpop.f32.mrb[0].mxu0
      %v4341 = vadd.f32 0.0, %v4340
      %v4342 = vpop.f32.mrb[0].mxu0
      %4343 = vmatprep.mubr.bf16.mxu0 0
      %4344 = vmatmul.mubr.bf16.gmra.mrb[0].mxu0 %v4265
      %v4345 = vpop.f32.mrb[0].mxu0
      %v4346 = vadd.f32 0.0, %v4345
      %v4347 = vpop.f32.mrb[0].mxu0
      %v4348 = vpop.f32.mrb[0].mxu0
      %v4349 = vadd.f32 0.0, %v4348
      %v4350 = vpop.f32.mrb[0].mxu0
      %4351 = vmatprep.mubr.bf16.mxu0 0
      %4352 = vmatmul.mubr.bf16.gmra.mrb[0].mxu0 %v4266
      %v4353 = vpop.f32.mrb[0].mxu0
      %v4354 = vadd.f32 0.0, %v4353
      %v4355 = vpop.f32.mrb[0].mxu0
      %v4356 = vpop.f32.mrb[0].mxu0
      %v4357 = vadd.f32 0.0, %v4356
      %v4358 = vpop.f32.mrb[0].mxu0
      %4359 = vmatprep.mubr.bf16.mxu0 0
      %4360 = vmatmul.mubr.bf16.gmra.mrb[0].mxu0 %v4267
      %v4361 = vpop.f32.mrb[0].mxu0
      %v4362 = vadd.f32 0.0, %v4361
      %v4363 = vpop.f32.mrb[0].mxu0
      %v4364 = vpop.f32.mrb[0].mxu0
      %v4365 = vadd.f32 0.0, %v4364
      %v4366 = vpop.f32.mrb[0].mxu0
      %4367 = vmatprep.mubr.bf16.mxu0 0
      %4368 = vmatmul.mubr.bf16.gmra.mrb[0].mxu0 %v4268
      %v4369 = vpop.f32.mrb[0].mxu0
      %v4370 = vadd.f32 0.0, %v4369
      %v4371 = vpop.f32.mrb[0].mxu0
      %v4372 = vpop.f32.mrb[0].mxu0
      %v4373 = vadd.f32 0.0, %v4372
      %v4374 = vpop.f32.mrb[0].mxu0
      %4375 = vmatprep.mubr.bf16.mxu0 0
      %4376 = vmatmul.mubr.bf16.gmra.mrb[0].mxu0 %v4269
      %v4377 = vpop.f32.mrb[0].mxu0
      %v4378 = vadd.f32 0.0, %v4377
      %v4379 = vpop.f32.mrb[0].mxu0
      %v4380 = vpop.f32.mrb[0].mxu0
      %v4381 = vadd.f32 0.0, %v4380
      %v4382 = vpop.f32.mrb[0].mxu0
      %4383 = vmatprep.mubr.bf16.mxu0 0
      %4384 = vmatmul.mubr.bf16.gmra.mrb[0].mxu0 %v4270
      %v4385 = vpop.f32.mrb[0].mxu0
      %v4386 = vadd.f32 0.0, %v4385
      %v4387 = vpop.f32.mrb[0].mxu0
      %v4388 = vpop.f32.mrb[0].mxu0
      %v4389 = vadd.f32 0.0, %v4388
      %v4390 = vpop.f32.mrb[0].mxu0
      %4391 = vdwg.mxu0
      %v4392 = vpack.c.bf16 %v4333, %v4330
      %v4393 = vpack.c.bf16 %v4341, %v4338
      %v4394 = vpack.c.bf16 %v4349, %v4346
      %v4395 = vpack.c.bf16 %v4357, %v4354
      %v4396 = vpack.c.bf16 %v4365, %v4362
      %v4397 = vpack.c.bf16 %v4373, %v4370
      %v4398 = vpack.c.bf16 %v4381, %v4378
      %v4399 = vpack.c.bf16 %v4389, %v4386
      %v4402 = vunpack.c.l.b16 %v994
      %v4403 = vunpack.c.l.b16 %v995
      %v4404 = vpack.c.b16 %v4403, %v4402
      %v4407 = vsel %vm1000, %v4392, 0
      %v4410 = vsel %vm1000, %v4393, 0
      %v4413 = vsel %vm1000, %v4394, 0
      %v4416 = vsel %vm1000, %v4395, 0
      %v4419 = vsel %vm1000, %v4396, 0
      %v4422 = vsel %vm1000, %v4397, 0
      %v4425 = vsel %vm1000, %v4398, 0
      %v4428 = vsel %vm1000, %v4399, 0
      %4430 = vmatprep.subr.bf16.mxu0 0
      %4431 = vmatpush1.bf16.msra.mxu0 %v4404
      %4432 = vmatprep.subr.bf16.mxu0 0
      %4433 = vmatpush1.bf16.msra.mxu0 0
      %4434 = vmatprep.subr.bf16.mxu0 0
      %4435 = vmatpush1.bf16.msra.mxu0 0
      %4436 = vmatprep.subr.bf16.mxu0 0
      %4437 = vmatpush1.bf16.msra.mxu0 0
      %4438 = vmatprep.subr.bf16.mxu0 0
      %4439 = vmatpush1.bf16.msra.mxu0 0
      %4440 = vmatprep.subr.bf16.mxu0 0
      %4441 = vmatpush1.bf16.msra.mxu0 0
      %4442 = vmatprep.subr.bf16.mxu0 0
      %4443 = vmatpush1.bf16.msra.mxu0 0
      %4444 = vmatprep.subr.bf16.mxu0 0
      %4445 = vmatpush1.bf16.msra.mxu0 0
      %4446 = vmatprep.subr.bf16.mxu0 0
      %4447 = vmatpush1.bf16.msra.mxu0 0
      %4448 = vmatprep.subr.bf16.mxu0 0
      %4449 = vmatpush1.bf16.msra.mxu0 0
      %4450 = vmatprep.subr.bf16.mxu0 0
      %4451 = vmatpush1.bf16.msra.mxu0 0
      %4452 = vmatprep.subr.bf16.mxu0 0
      %4453 = vmatpush1.bf16.msra.mxu0 0
      %4454 = vmatprep.subr.bf16.mxu0 0
      %4455 = vmatpush1.bf16.msra.mxu0 0
      %4456 = vmatprep.subr.bf16.mxu0 0
      %4457 = vmatpush1.bf16.msra.mxu0 0
      %4458 = vmatprep.subr.bf16.mxu0 0
      %4459 = vmatpush1.bf16.msra.mxu0 0
      %4460 = vmatprep.subr.bf16.mxu0 0
      %4461 = vmatpush1.bf16.msra.mxu0 0
      %4462 = vmatprep.mubr.bf16.mxu0 0
      %4463 = vmatmul.mubr.bf16.gmra.mrb[0].mxu0 %v4407
      %v4464 = vpop.f32.mrb[0].mxu0
      %v4465 = vadd.f32 0.0, %v4464
      %v4466 = vpop.f32.mrb[0].mxu0
      %v4467 = vpop.f32.mrb[0].mxu0
      %v4468 = vadd.f32 0.0, %v4467
      %v4469 = vpop.f32.mrb[0].mxu0
      %4470 = vmatprep.mubr.bf16.mxu0 0
      %4471 = vmatmul.mubr.bf16.gmra.mrb[0].mxu0 %v4410
      %v4472 = vpop.f32.mrb[0].mxu0
      %v4473 = vadd.f32 0.0, %v4472
      %v4474 = vpop.f32.mrb[0].mxu0
      %v4475 = vpop.f32.mrb[0].mxu0
      %v4476 = vadd.f32 0.0, %v4475
      %v4477 = vpop.f32.mrb[0].mxu0
      %4478 = vmatprep.mubr.bf16.mxu0 0
      %4479 = vmatmul.mubr.bf16.gmra.mrb[0].mxu0 %v4413
      %v4480 = vpop.f32.mrb[0].mxu0
      %v4481 = vadd.f32 0.0, %v4480
      %v4482 = vpop.f32.mrb[0].mxu0
      %v4483 = vpop.f32.mrb[0].mxu0
      %v4484 = vadd.f32 0.0, %v4483
      %v4485 = vpop.f32.mrb[0].mxu0
      %4486 = vmatprep.mubr.bf16.mxu0 0
      %4487 = vmatmul.mubr.bf16.gmra.mrb[0].mxu0 %v4416
      %v4488 = vpop.f32.mrb[0].mxu0
      %v4489 = vadd.f32 0.0, %v4488
      %v4490 = vpop.f32.mrb[0].mxu0
      %v4491 = vpop.f32.mrb[0].mxu0
      %v4492 = vadd.f32 0.0, %v4491
      %v4493 = vpop.f32.mrb[0].mxu0
      %4494 = vmatprep.mubr.bf16.mxu0 0
      %4495 = vmatmul.mubr.bf16.gmra.mrb[0].mxu0 %v4419
      %v4496 = vpop.f32.mrb[0].mxu0
      %v4497 = vadd.f32 0.0, %v4496
      %v4498 = vpop.f32.mrb[0].mxu0
      %v4499 = vpop.f32.mrb[0].mxu0
      %v4500 = vadd.f32 0.0, %v4499
      %v4501 = vpop.f32.mrb[0].mxu0
      %4502 = vmatprep.mubr.bf16.mxu0 0
      %4503 = vmatmul.mubr.bf16.gmra.mrb[0].mxu0 %v4422
      %v4504 = vpop.f32.mrb[0].mxu0
      %v4505 = vadd.f32 0.0, %v4504
      %v4506 = vpop.f32.mrb[0].mxu0
      %v4507 = vpop.f32.mrb[0].mxu0
      %v4508 = vadd.f32 0.0, %v4507
      %v4509 = vpop.f32.mrb[0].mxu0
      %4510 = vmatprep.mubr.bf16.mxu0 0
      %4511 = vmatmul.mubr.bf16.gmra.mrb[0].mxu0 %v4425
      %v4512 = vpop.f32.mrb[0].mxu0
      %v4513 = vadd.f32 0.0, %v4512
      %v4514 = vpop.f32.mrb[0].mxu0
      %v4515 = vpop.f32.mrb[0].mxu0
      %v4516 = vadd.f32 0.0, %v4515
      %v4517 = vpop.f32.mrb[0].mxu0
      %4518 = vmatprep.mubr.bf16.mxu0 0
      %4519 = vmatmul.mubr.bf16.gmra.mrb[0].mxu0 %v4428
      %v4520 = vpop.f32.mrb[0].mxu0
      %v4521 = vadd.f32 0.0, %v4520
      %v4522 = vpop.f32.mrb[0].mxu0
      %v4523 = vpop.f32.mrb[0].mxu0
      %v4524 = vadd.f32 0.0, %v4523
      %v4525 = vpop.f32.mrb[0].mxu0
      %4526 = vdwg.mxu0
      %v4527 = vadd.f32 %v3926, %v4465
      %v4528 = vadd.f32 %v3927, %v4468
      %v4529 = vadd.f32 %v3928, %v4473
      %v4530 = vadd.f32 %v3929, %v4476
      %v4531 = vadd.f32 %v3930, %v4481
      %v4532 = vadd.f32 %v3931, %v4484
      %v4533 = vadd.f32 %v3932, %v4489
      %v4534 = vadd.f32 %v3933, %v4492
      %v4535 = vadd.f32 %v3934, %v4497
      %v4536 = vadd.f32 %v3935, %v4500
      %v4537 = vadd.f32 %v3936, %v4505
      %v4538 = vadd.f32 %v3937, %v4508
      %v4539 = vadd.f32 %v3938, %v4513
      %v4540 = vadd.f32 %v3939, %v4516
      %v4541 = vadd.f32 %v3940, %v4521
      %v4542 = vadd.f32 %v3941, %v4524
      %4543 = vrot.lane.b32.xlu0 %v712, 32
      %v4544 = vpop.permute.xlu0 %4543
      %4545 = vrot.lane.b32.xlu0 %v713, 32
      %v4546 = vpop.permute.xlu0 %4545
      %4547 = vrot.lane.b32.xlu0 %v714, 32
      %v4548 = vpop.permute.xlu0 %4547
      %4549 = vrot.lane.b32.xlu0 %v715, 32
      %v4550 = vpop.permute.xlu0 %4549
      %4551 = vrot.lane.b32.xlu0 %v716, 32
      %v4552 = vpop.permute.xlu0 %4551
      %4553 = vrot.lane.b32.xlu0 %v717, 32
      %v4554 = vpop.permute.xlu0 %4553
      %4555 = vrot.lane.b32.xlu0 %v718, 32
      %v4556 = vpop.permute.xlu0 %4555
      %4557 = vrot.lane.b32.xlu0 %v719, 32
      %v4558 = vpop.permute.xlu0 %4557
      %4559 = vrot.lane.b32.xlu0 %v720, 32
      %v4560 = vpop.permute.xlu0 %4559
      %4561 = vrot.lane.b32.xlu0 %v721, 32
      %v4562 = vpop.permute.xlu0 %4561
      %4563 = vrot.lane.b32.xlu0 %v722, 32
      %v4564 = vpop.permute.xlu0 %4563
      %4565 = vrot.lane.b32.xlu0 %v723, 32
      %v4566 = vpop.permute.xlu0 %4565
      %4567 = vrot.lane.b32.xlu0 %v724, 32
      %v4568 = vpop.permute.xlu0 %4567
      %4569 = vrot.lane.b32.xlu0 %v725, 32
      %v4570 = vpop.permute.xlu0 %4569
      %4571 = vrot.lane.b32.xlu0 %v726, 32
      %v4572 = vpop.permute.xlu0 %4571
      %4573 = vrot.lane.b32.xlu0 %v727, 32
      %v4574 = vpop.permute.xlu0 %4573
      %v4576 = vsel %vm1000, %v4544, 0
      %v4579 = vsel %vm1000, %v4546, 0
      %v4582 = vsel %vm1000, %v4548, 0
      %v4585 = vsel %vm1000, %v4550, 0
      %v4588 = vsel %vm1000, %v4552, 0
      %v4591 = vsel %vm1000, %v4554, 0
      %v4594 = vsel %vm1000, %v4556, 0
      %v4597 = vsel %vm1000, %v4558, 0
      %v4600 = vsel %vm1000, %v4560, 0
      %v4603 = vsel %vm1000, %v4562, 0
      %v4606 = vsel %vm1000, %v4564, 0
      %v4609 = vsel %vm1000, %v4566, 0
      %v4612 = vsel %vm1000, %v4568, 0
      %v4615 = vsel %vm1000, %v4570, 0
      %v4618 = vsel %vm1000, %v4572, 0
      %v4621 = vsel %vm1000, %v4574, 0
      %4623 = vmatprep.subr.bf16.mxu0 0
      %4624 = vmatpush1.bf16.xpose.msra.mxu0 %v4600
      %4625 = vmatprep.subr.bf16.mxu0 0
      %4626 = vmatpush1.bf16.xpose.msra.mxu0 %v4603
      %4627 = vmatprep.subr.bf16.mxu0 0
      %4628 = vmatpush1.bf16.xpose.msra.mxu0 %v4606
      %4629 = vmatprep.subr.bf16.mxu0 0
      %4630 = vmatpush1.bf16.xpose.msra.mxu0 %v4609
      %4631 = vmatprep.subr.bf16.mxu0 0
      %4632 = vmatpush1.bf16.xpose.msra.mxu0 %v4612
      %4633 = vmatprep.subr.bf16.mxu0 0
      %4634 = vmatpush1.bf16.xpose.msra.mxu0 %v4615
      %4635 = vmatprep.subr.bf16.mxu0 0
      %4636 = vmatpush1.bf16.xpose.msra.mxu0 %v4618
      %4637 = vmatprep.subr.bf16.mxu0 0
      %4638 = vmatpush1.bf16.xpose.msra.mxu0 %v4621
      %4639 = vmatprep.subr.bf16.mxu0 0
      %4640 = vmatpush1.bf16.xpose.msra.mxu0 0
      %4641 = vmatprep.subr.bf16.mxu0 0
      %4642 = vmatpush1.bf16.xpose.msra.mxu0 0
      %4643 = vmatprep.subr.bf16.mxu0 0
      %4644 = vmatpush1.bf16.xpose.msra.mxu0 0
      %4645 = vmatprep.subr.bf16.mxu0 0
      %4646 = vmatpush1.bf16.xpose.msra.mxu0 0
      %4647 = vmatprep.subr.bf16.mxu0 0
      %4648 = vmatpush1.bf16.xpose.msra.mxu0 0
      %4649 = vmatprep.subr.bf16.mxu0 0
      %4650 = vmatpush1.bf16.xpose.msra.mxu0 0
      %4651 = vmatprep.subr.bf16.mxu0 0
      %4652 = vmatpush1.bf16.xpose.msra.mxu0 0
      %4653 = vmatprep.subr.bf16.mxu0 0
      %4654 = vmatpush1.bf16.xpose.msra.mxu0 0
      %4655 = vmatprep.mubr.bf16.mxu0 0
      %4656 = vmatmul.mubr.bf16.gmra.mrb[0].mxu0 %v4576
      %v4657 = vpop.f32.mrb[0].mxu0
      %v4658 = vadd.f32 %v968, %v4657
      %v4659 = vpop.f32.mrb[0].mxu0
      %v4660 = vpop.f32.mrb[0].mxu0
      %v4661 = vadd.f32 %v969, %v4660
      %v4662 = vpop.f32.mrb[0].mxu0
      %4663 = vmatprep.mubr.bf16.mxu0 0
      %4664 = vmatmul.mubr.bf16.gmra.mrb[0].mxu0 %v4579
      %v4665 = vpop.f32.mrb[0].mxu0
      %v4666 = vadd.f32 %v970, %v4665
      %v4667 = vpop.f32.mrb[0].mxu0
      %v4668 = vpop.f32.mrb[0].mxu0
      %v4669 = vadd.f32 %v971, %v4668
      %v4670 = vpop.f32.mrb[0].mxu0
      %4671 = vmatprep.mubr.bf16.mxu0 0
      %4672 = vmatmul.mubr.bf16.gmra.mrb[0].mxu0 %v4582
      %v4673 = vpop.f32.mrb[0].mxu0
      %v4674 = vadd.f32 %v972, %v4673
      %v4675 = vpop.f32.mrb[0].mxu0
      %v4676 = vpop.f32.mrb[0].mxu0
      %v4677 = vadd.f32 %v973, %v4676
      %v4678 = vpop.f32.mrb[0].mxu0
      %4679 = vmatprep.mubr.bf16.mxu0 0
      %4680 = vmatmul.mubr.bf16.gmra.mrb[0].mxu0 %v4585
      %v4681 = vpop.f32.mrb[0].mxu0
      %v4682 = vadd.f32 %v974, %v4681
      %v4683 = vpop.f32.mrb[0].mxu0
      %v4684 = vpop.f32.mrb[0].mxu0
      %v4685 = vadd.f32 %v975, %v4684
      %v4686 = vpop.f32.mrb[0].mxu0
      %4687 = vmatprep.mubr.bf16.mxu0 0
      %4688 = vmatmul.mubr.bf16.gmra.mrb[0].mxu0 %v4588
      %v4689 = vpop.f32.mrb[0].mxu0
      %v4690 = vadd.f32 %v976, %v4689
      %v4691 = vpop.f32.mrb[0].mxu0
      %v4692 = vpop.f32.mrb[0].mxu0
      %v4693 = vadd.f32 %v977, %v4692
      %v4694 = vpop.f32.mrb[0].mxu0
      %4695 = vmatprep.mubr.bf16.mxu0 0
      %4696 = vmatmul.mubr.bf16.gmra.mrb[0].mxu0 %v4591
      %v4697 = vpop.f32.mrb[0].mxu0
      %v4698 = vadd.f32 %v978, %v4697
      %v4699 = vpop.f32.mrb[0].mxu0
      %v4700 = vpop.f32.mrb[0].mxu0
      %v4701 = vadd.f32 %v979, %v4700
      %v4702 = vpop.f32.mrb[0].mxu0
      %4703 = vmatprep.mubr.bf16.mxu0 0
      %4704 = vmatmul.mubr.bf16.gmra.mrb[0].mxu0 %v4594
      %v4705 = vpop.f32.mrb[0].mxu0
      %v4706 = vadd.f32 %v980, %v4705
      %v4707 = vpop.f32.mrb[0].mxu0
      %v4708 = vpop.f32.mrb[0].mxu0
      %v4709 = vadd.f32 %v981, %v4708
      %v4710 = vpop.f32.mrb[0].mxu0
      %4711 = vmatprep.mubr.bf16.mxu0 0
      %4712 = vmatmul.mubr.bf16.gmra.mrb[0].mxu0 %v4597
      %v4713 = vpop.f32.mrb[0].mxu0
      %v4714 = vadd.f32 %v982, %v4713
      %v4715 = vpop.f32.mrb[0].mxu0
      %v4716 = vpop.f32.mrb[0].mxu0
      %v4717 = vadd.f32 %v983, %v4716
      %v4718 = vpop.f32.mrb[0].mxu0
      %4719 = vdwg.mxu0
      %4720 = vmax.xlane.f32.xlu0 %v4658
      %v4721 = vpop.xlane.xlu0 %4720
      %4722 = vmax.xlane.f32.xlu0 %v4661
      %v4723 = vpop.xlane.xlu0 %4722
      %4724 = vmax.xlane.f32.xlu0 %v4666
      %v4725 = vpop.xlane.xlu0 %4724
      %4726 = vmax.xlane.f32.xlu0 %v4669
      %v4727 = vpop.xlane.xlu0 %4726
      %4728 = vmax.xlane.f32.xlu0 %v4674
      %v4729 = vpop.xlane.xlu0 %4728
      %4730 = vmax.xlane.f32.xlu0 %v4677
      %v4731 = vpop.xlane.xlu0 %4730
      %4732 = vmax.xlane.f32.xlu0 %v4682
      %v4733 = vpop.xlane.xlu0 %4732
      %4734 = vmax.xlane.f32.xlu0 %v4685
      %v4735 = vpop.xlane.xlu0 %4734
      %4736 = vmax.xlane.f32.xlu0 %v4690
      %v4737 = vpop.xlane.xlu0 %4736
      %4738 = vmax.xlane.f32.xlu0 %v4693
      %v4739 = vpop.xlane.xlu0 %4738
      %4740 = vmax.xlane.f32.xlu0 %v4698
      %v4741 = vpop.xlane.xlu0 %4740
      %4742 = vmax.xlane.f32.xlu0 %v4701
      %v4743 = vpop.xlane.xlu0 %4742
      %4744 = vmax.xlane.f32.xlu0 %v4706
      %v4745 = vpop.xlane.xlu0 %4744
      %4746 = vmax.xlane.f32.xlu0 %v4709
      %v4747 = vpop.xlane.xlu0 %4746
      %4748 = vmax.xlane.f32.xlu0 %v4714
      %v4749 = vpop.xlane.xlu0 %4748
      %4750 = vmax.xlane.f32.xlu0 %v4717
      %v4751 = vpop.xlane.xlu0 %4750
      %v4752 = vsub.f32 %v4658, %v4721
      %v4753 = vsub.f32 %v4661, %v4723
      %v4754 = vsub.f32 %v4666, %v4725
      %v4755 = vsub.f32 %v4669, %v4727
      %v4756 = vsub.f32 %v4674, %v4729
      %v4757 = vsub.f32 %v4677, %v4731
      %v4758 = vsub.f32 %v4682, %v4733
      %v4759 = vsub.f32 %v4685, %v4735
      %v4760 = vsub.f32 %v4690, %v4737
      %v4761 = vsub.f32 %v4693, %v4739
      %v4762 = vsub.f32 %v4698, %v4741
      %v4763 = vsub.f32 %v4701, %v4743
      %v4764 = vsub.f32 %v4706, %v4745
      %v4765 = vsub.f32 %v4709, %v4747
      %v4766 = vsub.f32 %v4714, %v4749
      %v4767 = vsub.f32 %v4717, %v4751
      %v4768 = vmul.f32 %v4752, 1.442695
      %v4769 = vpow.pop %v4768
      %v4770 = vmul.f32 %v4753, 1.442695
      %v4771 = vpow.pop %v4770
      %v4772 = vmul.f32 %v4754, 1.442695
      %v4773 = vpow.pop %v4772
      %v4774 = vmul.f32 %v4755, 1.442695
      %v4775 = vpow.pop %v4774
      %v4776 = vmul.f32 %v4756, 1.442695
      %v4777 = vpow.pop %v4776
      %v4778 = vmul.f32 %v4757, 1.442695
      %v4779 = vpow.pop %v4778
      %v4780 = vmul.f32 %v4758, 1.442695
      %v4781 = vpow.pop %v4780
      %v4782 = vmul.f32 %v4759, 1.442695
      %v4783 = vpow.pop %v4782
      %v4784 = vmul.f32 %v4760, 1.442695
      %v4785 = vpow.pop %v4784
      %v4786 = vmul.f32 %v4761, 1.442695
      %v4787 = vpow.pop %v4786
      %v4788 = vmul.f32 %v4762, 1.442695
      %v4789 = vpow.pop %v4788
      %v4790 = vmul.f32 %v4763, 1.442695
      %v4791 = vpow.pop %v4790
      %v4792 = vmul.f32 %v4764, 1.442695
      %v4793 = vpow.pop %v4792
      %v4794 = vmul.f32 %v4765, 1.442695
      %v4795 = vpow.pop %v4794
      %v4796 = vmul.f32 %v4766, 1.442695
      %v4797 = vpow.pop %v4796
      %v4798 = vmul.f32 %v4767, 1.442695
      %v4799 = vpow.pop %v4798
      %4800 = vadd.xlane.f32.xlu0 %v4769
      %v4801 = vpop.xlane.xlu0 %4800
      %4802 = vadd.xlane.f32.xlu0 %v4771
      %v4803 = vpop.xlane.xlu0 %4802
      %4804 = vadd.xlane.f32.xlu0 %v4773
      %v4805 = vpop.xlane.xlu0 %4804
      %4806 = vadd.xlane.f32.xlu0 %v4775
      %v4807 = vpop.xlane.xlu0 %4806
      %4808 = vadd.xlane.f32.xlu0 %v4777
      %v4809 = vpop.xlane.xlu0 %4808
      %4810 = vadd.xlane.f32.xlu0 %v4779
      %v4811 = vpop.xlane.xlu0 %4810
      %4812 = vadd.xlane.f32.xlu0 %v4781
      %v4813 = vpop.xlane.xlu0 %4812
      %4814 = vadd.xlane.f32.xlu0 %v4783
      %v4815 = vpop.xlane.xlu0 %4814
      %4816 = vadd.xlane.f32.xlu0 %v4785
      %v4817 = vpop.xlane.xlu0 %4816
      %4818 = vadd.xlane.f32.xlu0 %v4787
      %v4819 = vpop.xlane.xlu0 %4818
      %4820 = vadd.xlane.f32.xlu0 %v4789
      %v4821 = vpop.xlane.xlu0 %4820
      %4822 = vadd.xlane.f32.xlu0 %v4791
      %v4823 = vpop.xlane.xlu0 %4822
      %4824 = vadd.xlane.f32.xlu0 %v4793
      %v4825 = vpop.xlane.xlu0 %4824
      %4826 = vadd.xlane.f32.xlu0 %v4795
      %v4827 = vpop.xlane.xlu0 %4826
      %4828 = vadd.xlane.f32.xlu0 %v4797
      %v4829 = vpop.xlane.xlu0 %4828
      %4830 = vadd.xlane.f32.xlu0 %v4799
      %v4831 = vpop.xlane.xlu0 %4830
      %v4832 = vrcp.pop %v4801
      %v4833 = vrcp.pop %v4803
      %v4834 = vrcp.pop %v4805
      %v4835 = vrcp.pop %v4807
      %v4836 = vrcp.pop %v4809
      %v4837 = vrcp.pop %v4811
      %v4838 = vrcp.pop %v4813
      %v4839 = vrcp.pop %v4815
      %v4840 = vrcp.pop %v4817
      %v4841 = vrcp.pop %v4819
      %v4842 = vrcp.pop %v4821
      %v4843 = vrcp.pop %v4823
      %v4844 = vrcp.pop %v4825
      %v4845 = vrcp.pop %v4827
      %v4846 = vrcp.pop %v4829
      %v4847 = vrcp.pop %v4831
      %v4848 = vmul.f32 %v4769, %v4832
      %v4849 = vmul.f32 %v4771, %v4833
      %v4850 = vmul.f32 %v4773, %v4834
      %v4851 = vmul.f32 %v4775, %v4835
      %v4852 = vmul.f32 %v4777, %v4836
      %v4853 = vmul.f32 %v4779, %v4837
      %v4854 = vmul.f32 %v4781, %v4838
      %v4855 = vmul.f32 %v4783, %v4839
      %v4856 = vmul.f32 %v4785, %v4840
      %v4857 = vmul.f32 %v4787, %v4841
      %v4858 = vmul.f32 %v4789, %v4842
      %v4859 = vmul.f32 %v4791, %v4843
      %v4860 = vmul.f32 %v4793, %v4844
      %v4861 = vmul.f32 %v4795, %v4845
      %v4862 = vmul.f32 %v4797, %v4846
      %v4863 = vmul.f32 %v4799, %v4847
      %v4864 = vpack.c.bf16 %v4849, %v4848
      %v4865 = vpack.c.bf16 %v4851, %v4850
      %v4866 = vpack.c.bf16 %v4853, %v4852
      %v4867 = vpack.c.bf16 %v4855, %v4854
      %v4868 = vpack.c.bf16 %v4857, %v4856
      %v4869 = vpack.c.bf16 %v4859, %v4858
      %v4870 = vpack.c.bf16 %v4861, %v4860
      %v4871 = vpack.c.bf16 %v4863, %v4862
      %4872 = vrot.lane.b32.xlu0 %v944, 32
      %v4873 = vpop.permute.xlu0 %4872
      %4874 = vrot.lane.b32.xlu0 %v945, 32
      %v4875 = vpop.permute.xlu0 %4874
      %4876 = vrot.lane.b32.xlu0 %v946, 32
      %v4877 = vpop.permute.xlu0 %4876
      %4878 = vrot.lane.b32.xlu0 %v947, 32
      %v4879 = vpop.permute.xlu0 %4878
      %4880 = vrot.lane.b32.xlu0 %v948, 32
      %v4881 = vpop.permute.xlu0 %4880
      %4882 = vrot.lane.b32.xlu0 %v949, 32
      %v4883 = vpop.permute.xlu0 %4882
      %4884 = vrot.lane.b32.xlu0 %v950, 32
      %v4885 = vpop.permute.xlu0 %4884
      %4886 = vrot.lane.b32.xlu0 %v951, 32
      %v4887 = vpop.permute.xlu0 %4886
      %4896 = vmatprep.subr.bf16.mxu0 0
      %4897 = vmatpush1.bf16.msra.mxu0 %v4873
      %4898 = vmatprep.subr.bf16.mxu0 0
      %4899 = vmatpush1.bf16.msra.mxu0 %v4875
      %4900 = vmatprep.subr.bf16.mxu0 0
      %4901 = vmatpush1.bf16.msra.mxu0 %v4877
      %4902 = vmatprep.subr.bf16.mxu0 0
      %4903 = vmatpush1.bf16.msra.mxu0 %v4879
      %4904 = vmatprep.subr.bf16.mxu0 0
      %4905 = vmatpush1.bf16.msra.mxu0 %v4881
      %4906 = vmatprep.subr.bf16.mxu0 0
      %4907 = vmatpush1.bf16.msra.mxu0 %v4883
      %4908 = vmatprep.subr.bf16.mxu0 0
      %4909 = vmatpush1.bf16.msra.mxu0 %v4885
      %4910 = vmatprep.subr.bf16.mxu0 0
      %4911 = vmatpush1.bf16.msra.mxu0 %v4887
      %4912 = vmatprep.subr.bf16.mxu0 0
      %4913 = vmatpush1.bf16.msra.mxu0 0
      %4914 = vmatprep.subr.bf16.mxu0 0
      %4915 = vmatpush1.bf16.msra.mxu0 0
      %4916 = vmatprep.subr.bf16.mxu0 0
      %4917 = vmatpush1.bf16.msra.mxu0 0
      %4918 = vmatprep.subr.bf16.mxu0 0
      %4919 = vmatpush1.bf16.msra.mxu0 0
      %4920 = vmatprep.subr.bf16.mxu0 0
      %4921 = vmatpush1.bf16.msra.mxu0 0
      %4922 = vmatprep.subr.bf16.mxu0 0
      %4923 = vmatpush1.bf16.msra.mxu0 0
      %4924 = vmatprep.subr.bf16.mxu0 0
      %4925 = vmatpush1.bf16.msra.mxu0 0
      %4926 = vmatprep.subr.bf16.mxu0 0
      %4927 = vmatpush1.bf16.msra.mxu0 0
      %4928 = vmatprep.mubr.bf16.mxu0 0
      %4929 = vmatmul.mubr.bf16.gmra.mrb[0].mxu0 %v4864
      %v4930 = vpop.f32.mrb[0].mxu0
      %v4931 = vadd.f32 0.0, %v4930
      %v4932 = vpop.f32.mrb[0].mxu0
      %v4933 = vpop.f32.mrb[0].mxu0
      %v4934 = vadd.f32 0.0, %v4933
      %v4935 = vpop.f32.mrb[0].mxu0
      %4936 = vmatprep.mubr.bf16.mxu0 0
      %4937 = vmatmul.mubr.bf16.gmra.mrb[0].mxu0 %v4865
      %v4938 = vpop.f32.mrb[0].mxu0
      %v4939 = vadd.f32 0.0, %v4938
      %v4940 = vpop.f32.mrb[0].mxu0
      %v4941 = vpop.f32.mrb[0].mxu0
      %v4942 = vadd.f32 0.0, %v4941
      %v4943 = vpop.f32.mrb[0].mxu0
      %4944 = vmatprep.mubr.bf16.mxu0 0
      %4945 = vmatmul.mubr.bf16.gmra.mrb[0].mxu0 %v4866
      %v4946 = vpop.f32.mrb[0].mxu0
      %v4947 = vadd.f32 0.0, %v4946
      %v4948 = vpop.f32.mrb[0].mxu0
      %v4949 = vpop.f32.mrb[0].mxu0
      %v4950 = vadd.f32 0.0, %v4949
      %v4951 = vpop.f32.mrb[0].mxu0
      %4952 = vmatprep.mubr.bf16.mxu0 0
      %4953 = vmatmul.mubr.bf16.gmra.mrb[0].mxu0 %v4867
      %v4954 = vpop.f32.mrb[0].mxu0
      %v4955 = vadd.f32 0.0, %v4954
      %v4956 = vpop.f32.mrb[0].mxu0
      %v4957 = vpop.f32.mrb[0].mxu0
      %v4958 = vadd.f32 0.0, %v4957
      %v4959 = vpop.f32.mrb[0].mxu0
      %4960 = vmatprep.mubr.bf16.mxu0 0
      %4961 = vmatmul.mubr.bf16.gmra.mrb[0].mxu0 %v4868
      %v4962 = vpop.f32.mrb[0].mxu0
      %v4963 = vadd.f32 0.0, %v4962
      %v4964 = vpop.f32.mrb[0].mxu0
      %v4965 = vpop.f32.mrb[0].mxu0
      %v4966 = vadd.f32 0.0, %v4965
      %v4967 = vpop.f32.mrb[0].mxu0
      %4968 = vmatprep.mubr.bf16.mxu0 0
      %4969 = vmatmul.mubr.bf16.gmra.mrb[0].mxu0 %v4869
      %v4970 = vpop.f32.mrb[0].mxu0
      %v4971 = vadd.f32 0.0, %v4970
      %v4972 = vpop.f32.mrb[0].mxu0
      %v4973 = vpop.f32.mrb[0].mxu0
      %v4974 = vadd.f32 0.0, %v4973
      %v4975 = vpop.f32.mrb[0].mxu0
      %4976 = vmatprep.mubr.bf16.mxu0 0
      %4977 = vmatmul.mubr.bf16.gmra.mrb[0].mxu0 %v4870
      %v4978 = vpop.f32.mrb[0].mxu0
      %v4979 = vadd.f32 0.0, %v4978
      %v4980 = vpop.f32.mrb[0].mxu0
      %v4981 = vpop.f32.mrb[0].mxu0
      %v4982 = vadd.f32 0.0, %v4981
      %v4983 = vpop.f32.mrb[0].mxu0
      %4984 = vmatprep.mubr.bf16.mxu0 0
      %4985 = vmatmul.mubr.bf16.gmra.mrb[0].mxu0 %v4871
      %v4986 = vpop.f32.mrb[0].mxu0
      %v4987 = vadd.f32 0.0, %v4986
      %v4988 = vpop.f32.mrb[0].mxu0
      %v4989 = vpop.f32.mrb[0].mxu0
      %v4990 = vadd.f32 0.0, %v4989
      %v4991 = vpop.f32.mrb[0].mxu0
      %4992 = vdwg.mxu0
      %v4993 = vpack.c.bf16 %v4934, %v4931
      %v4994 = vpack.c.bf16 %v4942, %v4939
      %v4995 = vpack.c.bf16 %v4950, %v4947
      %v4996 = vpack.c.bf16 %v4958, %v4955
      %v4997 = vpack.c.bf16 %v4966, %v4963
      %v4998 = vpack.c.bf16 %v4974, %v4971
      %v4999 = vpack.c.bf16 %v4982, %v4979
      %v5000 = vpack.c.bf16 %v4990, %v4987
      %v5003 = vunpack.c.l.b16 %v996
      %v5004 = vunpack.c.l.b16 %v997
      %v5005 = vpack.c.b16 %v5004, %v5003
      %v5008 = vsel %vm1000, %v4993, 0
      %v5011 = vsel %vm1000, %v4994, 0
      %v5014 = vsel %vm1000, %v4995, 0
      %v5017 = vsel %vm1000, %v4996, 0
      %v5020 = vsel %vm1000, %v4997, 0
      %v5023 = vsel %vm1000, %v4998, 0
      %v5026 = vsel %vm1000, %v4999, 0
      %v5029 = vsel %vm1000, %v5000, 0
      %5031 = vmatprep.subr.bf16.mxu0 0
      %5032 = vmatpush1.bf16.msra.mxu0 %v5005
      %5033 = vmatprep.subr.bf16.mxu0 0
      %5034 = vmatpush1.bf16.msra.mxu0 0
      %5035 = vmatprep.subr.bf16.mxu0 0
      %5036 = vmatpush1.bf16.msra.mxu0 0
      %5037 = vmatprep.subr.bf16.mxu0 0
      %5038 = vmatpush1.bf16.msra.mxu0 0
      %5039 = vmatprep.subr.bf16.mxu0 0
      %5040 = vmatpush1.bf16.msra.mxu0 0
      %5041 = vmatprep.subr.bf16.mxu0 0
      %5042 = vmatpush1.bf16.msra.mxu0 0
      %5043 = vmatprep.subr.bf16.mxu0 0
      %5044 = vmatpush1.bf16.msra.mxu0 0
      %5045 = vmatprep.subr.bf16.mxu0 0
      %5046 = vmatpush1.bf16.msra.mxu0 0
      %5047 = vmatprep.subr.bf16.mxu0 0
      %5048 = vmatpush1.bf16.msra.mxu0 0
      %5049 = vmatprep.subr.bf16.mxu0 0
      %5050 = vmatpush1.bf16.msra.mxu0 0
      %5051 = vmatprep.subr.bf16.mxu0 0
      %5052 = vmatpush1.bf16.msra.mxu0 0
      %5053 = vmatprep.subr.bf16.mxu0 0
      %5054 = vmatpush1.bf16.msra.mxu0 0
      %5055 = vmatprep.subr.bf16.mxu0 0
      %5056 = vmatpush1.bf16.msra.mxu0 0
      %5057 = vmatprep.subr.bf16.mxu0 0
      %5058 = vmatpush1.bf16.msra.mxu0 0
      %5059 = vmatprep.subr.bf16.mxu0 0
      %5060 = vmatpush1.bf16.msra.mxu0 0
      %5061 = vmatprep.subr.bf16.mxu0 0
      %5062 = vmatpush1.bf16.msra.mxu0 0
      %5063 = vmatprep.mubr.bf16.mxu0 0
      %5064 = vmatmul.mubr.bf16.gmra.mrb[0].mxu0 %v5008
      %v5065 = vpop.f32.mrb[0].mxu0
      %v5066 = vadd.f32 0.0, %v5065
      %v5067 = vpop.f32.mrb[0].mxu0
      %v5068 = vpop.f32.mrb[0].mxu0
      %v5069 = vadd.f32 0.0, %v5068
      %v5070 = vpop.f32.mrb[0].mxu0
      %5071 = vmatprep.mubr.bf16.mxu0 0
      %5072 = vmatmul.mubr.bf16.gmra.mrb[0].mxu0 %v5011
      %v5073 = vpop.f32.mrb[0].mxu0
      %v5074 = vadd.f32 0.0, %v5073
      %v5075 = vpop.f32.mrb[0].mxu0
      %v5076 = vpop.f32.mrb[0].mxu0
      %v5077 = vadd.f32 0.0, %v5076
      %v5078 = vpop.f32.mrb[0].mxu0
      %5079 = vmatprep.mubr.bf16.mxu0 0
      %5080 = vmatmul.mubr.bf16.gmra.mrb[0].mxu0 %v5014
      %v5081 = vpop.f32.mrb[0].mxu0
      %v5082 = vadd.f32 0.0, %v5081
      %v5083 = vpop.f32.mrb[0].mxu0
      %v5084 = vpop.f32.mrb[0].mxu0
      %v5085 = vadd.f32 0.0, %v5084
      %v5086 = vpop.f32.mrb[0].mxu0
      %5087 = vmatprep.mubr.bf16.mxu0 0
      %5088 = vmatmul.mubr.bf16.gmra.mrb[0].mxu0 %v5017
      %v5089 = vpop.f32.mrb[0].mxu0
      %v5090 = vadd.f32 0.0, %v5089
      %v5091 = vpop.f32.mrb[0].mxu0
      %v5092 = vpop.f32.mrb[0].mxu0
      %v5093 = vadd.f32 0.0, %v5092
      %v5094 = vpop.f32.mrb[0].mxu0
      %5095 = vmatprep.mubr.bf16.mxu0 0
      %5096 = vmatmul.mubr.bf16.gmra.mrb[0].mxu0 %v5020
      %v5097 = vpop.f32.mrb[0].mxu0
      %v5098 = vadd.f32 0.0, %v5097
      %v5099 = vpop.f32.mrb[0].mxu0
      %v5100 = vpop.f32.mrb[0].mxu0
      %v5101 = vadd.f32 0.0, %v5100
      %v5102 = vpop.f32.mrb[0].mxu0
      %5103 = vmatprep.mubr.bf16.mxu0 0
      %5104 = vmatmul.mubr.bf16.gmra.mrb[0].mxu0 %v5023
      %v5105 = vpop.f32.mrb[0].mxu0
      %v5106 = vadd.f32 0.0, %v5105
      %v5107 = vpop.f32.mrb[0].mxu0
      %v5108 = vpop.f32.mrb[0].mxu0
      %v5109 = vadd.f32 0.0, %v5108
      %v5110 = vpop.f32.mrb[0].mxu0
      %5111 = vmatprep.mubr.bf16.mxu0 0
      %5112 = vmatmul.mubr.bf16.gmra.mrb[0].mxu0 %v5026
      %v5113 = vpop.f32.mrb[0].mxu0
      %v5114 = vadd.f32 0.0, %v5113
      %v5115 = vpop.f32.mrb[0].mxu0
      %v5116 = vpop.f32.mrb[0].mxu0
      %v5117 = vadd.f32 0.0, %v5116
      %v5118 = vpop.f32.mrb[0].mxu0
      %5119 = vmatprep.mubr.bf16.mxu0 0
      %5120 = vmatmul.mubr.bf16.gmra.mrb[0].mxu0 %v5029
      %v5121 = vpop.f32.mrb[0].mxu0
      %v5122 = vadd.f32 0.0, %v5121
      %v5123 = vpop.f32.mrb[0].mxu0
      %v5124 = vpop.f32.mrb[0].mxu0
      %v5125 = vadd.f32 0.0, %v5124
      %v5126 = vpop.f32.mrb[0].mxu0
      %5127 = vdwg.mxu0
      %v5128 = vadd.f32 %v4527, %v5066
      %v5129 = vadd.f32 %v4528, %v5069
      %v5130 = vadd.f32 %v4529, %v5074
      %v5131 = vadd.f32 %v4530, %v5077
      %v5132 = vadd.f32 %v4531, %v5082
      %v5133 = vadd.f32 %v4532, %v5085
      %v5134 = vadd.f32 %v4533, %v5090
      %v5135 = vadd.f32 %v4534, %v5093
      %v5136 = vadd.f32 %v4535, %v5098
      %v5137 = vadd.f32 %v4536, %v5101
      %v5138 = vadd.f32 %v4537, %v5106
      %v5139 = vadd.f32 %v4538, %v5109
      %v5140 = vadd.f32 %v4539, %v5114
      %v5141 = vadd.f32 %v4540, %v5117
      %v5142 = vadd.f32 %v4541, %v5122
      %v5143 = vadd.f32 %v4542, %v5125
      %5144 = vrot.lane.b32.xlu0 %v712, 16
      %v5145 = vpop.permute.xlu0 %5144
      %5146 = vrot.lane.b32.xlu0 %v713, 16
      %v5147 = vpop.permute.xlu0 %5146
      %5148 = vrot.lane.b32.xlu0 %v714, 16
      %v5149 = vpop.permute.xlu0 %5148
      %5150 = vrot.lane.b32.xlu0 %v715, 16
      %v5151 = vpop.permute.xlu0 %5150
      %5152 = vrot.lane.b32.xlu0 %v716, 16
      %v5153 = vpop.permute.xlu0 %5152
      %5154 = vrot.lane.b32.xlu0 %v717, 16
      %v5155 = vpop.permute.xlu0 %5154
      %5156 = vrot.lane.b32.xlu0 %v718, 16
      %v5157 = vpop.permute.xlu0 %5156
      %5158 = vrot.lane.b32.xlu0 %v719, 16
      %v5159 = vpop.permute.xlu0 %5158
      %5160 = vrot.lane.b32.xlu0 %v720, 16
      %v5161 = vpop.permute.xlu0 %5160
      %5162 = vrot.lane.b32.xlu0 %v721, 16
      %v5163 = vpop.permute.xlu0 %5162
      %5164 = vrot.lane.b32.xlu0 %v722, 16
      %v5165 = vpop.permute.xlu0 %5164
      %5166 = vrot.lane.b32.xlu0 %v723, 16
      %v5167 = vpop.permute.xlu0 %5166
      %5168 = vrot.lane.b32.xlu0 %v724, 16
      %v5169 = vpop.permute.xlu0 %5168
      %5170 = vrot.lane.b32.xlu0 %v725, 16
      %v5171 = vpop.permute.xlu0 %5170
      %5172 = vrot.lane.b32.xlu0 %v726, 16
      %v5173 = vpop.permute.xlu0 %5172
      %5174 = vrot.lane.b32.xlu0 %v727, 16
      %v5175 = vpop.permute.xlu0 %5174
      %v5177 = vsel %vm1000, %v5145, 0
      %v5180 = vsel %vm1000, %v5147, 0
      %v5183 = vsel %vm1000, %v5149, 0
      %v5186 = vsel %vm1000, %v5151, 0
      %v5189 = vsel %vm1000, %v5153, 0
      %v5192 = vsel %vm1000, %v5155, 0
      %v5195 = vsel %vm1000, %v5157, 0
      %v5198 = vsel %vm1000, %v5159, 0
      %v5201 = vsel %vm1000, %v5161, 0
      %v5204 = vsel %vm1000, %v5163, 0
      %v5207 = vsel %vm1000, %v5165, 0
      %v5210 = vsel %vm1000, %v5167, 0
      %v5213 = vsel %vm1000, %v5169, 0
      %v5216 = vsel %vm1000, %v5171, 0
      %v5219 = vsel %vm1000, %v5173, 0
      %v5222 = vsel %vm1000, %v5175, 0
      %5224 = vmatprep.subr.bf16.mxu0 0
      %5225 = vmatpush1.bf16.xpose.msra.mxu0 %v5201
      %5226 = vmatprep.subr.bf16.mxu0 0
      %5227 = vmatpush1.bf16.xpose.msra.mxu0 %v5204
      %5228 = vmatprep.subr.bf16.mxu0 0
      %5229 = vmatpush1.bf16.xpose.msra.mxu0 %v5207
      %5230 = vmatprep.subr.bf16.mxu0 0
      %5231 = vmatpush1.bf16.xpose.msra.mxu0 %v5210
      %5232 = vmatprep.subr.bf16.mxu0 0
      %5233 = vmatpush1.bf16.xpose.msra.mxu0 %v5213
      %5234 = vmatprep.subr.bf16.mxu0 0
      %5235 = vmatpush1.bf16.xpose.msra.mxu0 %v5216
      %5236 = vmatprep.subr.bf16.mxu0 0
      %5237 = vmatpush1.bf16.xpose.msra.mxu0 %v5219
      %5238 = vmatprep.subr.bf16.mxu0 0
      %5239 = vmatpush1.bf16.xpose.msra.mxu0 %v5222
      %5240 = vmatprep.subr.bf16.mxu0 0
      %5241 = vmatpush1.bf16.xpose.msra.mxu0 0
      %5242 = vmatprep.subr.bf16.mxu0 0
      %5243 = vmatpush1.bf16.xpose.msra.mxu0 0
      %5244 = vmatprep.subr.bf16.mxu0 0
      %5245 = vmatpush1.bf16.xpose.msra.mxu0 0
      %5246 = vmatprep.subr.bf16.mxu0 0
      %5247 = vmatpush1.bf16.xpose.msra.mxu0 0
      %5248 = vmatprep.subr.bf16.mxu0 0
      %5249 = vmatpush1.bf16.xpose.msra.mxu0 0
      %5250 = vmatprep.subr.bf16.mxu0 0
      %5251 = vmatpush1.bf16.xpose.msra.mxu0 0
      %5252 = vmatprep.subr.bf16.mxu0 0
      %5253 = vmatpush1.bf16.xpose.msra.mxu0 0
      %5254 = vmatprep.subr.bf16.mxu0 0
      %5255 = vmatpush1.bf16.xpose.msra.mxu0 0
      %5256 = vmatprep.mubr.bf16.mxu0 0
      %5257 = vmatmul.mubr.bf16.gmra.mrb[0].mxu0 %v5177
      %v5258 = vpop.f32.mrb[0].mxu0
      %v5259 = vadd.f32 %v968, %v5258
      %v5260 = vpop.f32.mrb[0].mxu0
      %v5261 = vpop.f32.mrb[0].mxu0
      %v5262 = vadd.f32 %v969, %v5261
      %v5263 = vpop.f32.mrb[0].mxu0
      %5264 = vmatprep.mubr.bf16.mxu0 0
      %5265 = vmatmul.mubr.bf16.gmra.mrb[0].mxu0 %v5180
      %v5266 = vpop.f32.mrb[0].mxu0
      %v5267 = vadd.f32 %v970, %v5266
      %v5268 = vpop.f32.mrb[0].mxu0
      %v5269 = vpop.f32.mrb[0].mxu0
      %v5270 = vadd.f32 %v971, %v5269
      %v5271 = vpop.f32.mrb[0].mxu0
      %5272 = vmatprep.mubr.bf16.mxu0 0
      %5273 = vmatmul.mubr.bf16.gmra.mrb[0].mxu0 %v5183
      %v5274 = vpop.f32.mrb[0].mxu0
      %v5275 = vadd.f32 %v972, %v5274
      %v5276 = vpop.f32.mrb[0].mxu0
      %v5277 = vpop.f32.mrb[0].mxu0
      %v5278 = vadd.f32 %v973, %v5277
      %v5279 = vpop.f32.mrb[0].mxu0
      %5280 = vmatprep.mubr.bf16.mxu0 0
      %5281 = vmatmul.mubr.bf16.gmra.mrb[0].mxu0 %v5186
      %v5282 = vpop.f32.mrb[0].mxu0
      %v5283 = vadd.f32 %v974, %v5282
      %v5284 = vpop.f32.mrb[0].mxu0
      %v5285 = vpop.f32.mrb[0].mxu0
      %v5286 = vadd.f32 %v975, %v5285
      %v5287 = vpop.f32.mrb[0].mxu0
      %5288 = vmatprep.mubr.bf16.mxu0 0
      %5289 = vmatmul.mubr.bf16.gmra.mrb[0].mxu0 %v5189
      %v5290 = vpop.f32.mrb[0].mxu0
      %v5291 = vadd.f32 %v976, %v5290
      %v5292 = vpop.f32.mrb[0].mxu0
      %v5293 = vpop.f32.mrb[0].mxu0
      %v5294 = vadd.f32 %v977, %v5293
      %v5295 = vpop.f32.mrb[0].mxu0
      %5296 = vmatprep.mubr.bf16.mxu0 0
      %5297 = vmatmul.mubr.bf16.gmra.mrb[0].mxu0 %v5192
      %v5298 = vpop.f32.mrb[0].mxu0
      %v5299 = vadd.f32 %v978, %v5298
      %v5300 = vpop.f32.mrb[0].mxu0
      %v5301 = vpop.f32.mrb[0].mxu0
      %v5302 = vadd.f32 %v979, %v5301
      %v5303 = vpop.f32.mrb[0].mxu0
      %5304 = vmatprep.mubr.bf16.mxu0 0
      %5305 = vmatmul.mubr.bf16.gmra.mrb[0].mxu0 %v5195
      %v5306 = vpop.f32.mrb[0].mxu0
      %v5307 = vadd.f32 %v980, %v5306
      %v5308 = vpop.f32.mrb[0].mxu0
      %v5309 = vpop.f32.mrb[0].mxu0
      %v5310 = vadd.f32 %v981, %v5309
      %v5311 = vpop.f32.mrb[0].mxu0
      %5312 = vmatprep.mubr.bf16.mxu0 0
      %5313 = vmatmul.mubr.bf16.gmra.mrb[0].mxu0 %v5198
      %v5314 = vpop.f32.mrb[0].mxu0
      %v5315 = vadd.f32 %v982, %v5314
      %v5316 = vpop.f32.mrb[0].mxu0
      %v5317 = vpop.f32.mrb[0].mxu0
      %v5318 = vadd.f32 %v983, %v5317
      %v5319 = vpop.f32.mrb[0].mxu0
      %5320 = vdwg.mxu0
      %5321 = vmax.xlane.f32.xlu0 %v5259
      %v5322 = vpop.xlane.xlu0 %5321
      %5323 = vmax.xlane.f32.xlu0 %v5262
      %v5324 = vpop.xlane.xlu0 %5323
      %5325 = vmax.xlane.f32.xlu0 %v5267
      %v5326 = vpop.xlane.xlu0 %5325
      %5327 = vmax.xlane.f32.xlu0 %v5270
      %v5328 = vpop.xlane.xlu0 %5327
      %5329 = vmax.xlane.f32.xlu0 %v5275
      %v5330 = vpop.xlane.xlu0 %5329
      %5331 = vmax.xlane.f32.xlu0 %v5278
      %v5332 = vpop.xlane.xlu0 %5331
      %5333 = vmax.xlane.f32.xlu0 %v5283
      %v5334 = vpop.xlane.xlu0 %5333
      %5335 = vmax.xlane.f32.xlu0 %v5286
      %v5336 = vpop.xlane.xlu0 %5335
      %5337 = vmax.xlane.f32.xlu0 %v5291
      %v5338 = vpop.xlane.xlu0 %5337
      %5339 = vmax.xlane.f32.xlu0 %v5294
      %v5340 = vpop.xlane.xlu0 %5339
      %5341 = vmax.xlane.f32.xlu0 %v5299
      %v5342 = vpop.xlane.xlu0 %5341
      %5343 = vmax.xlane.f32.xlu0 %v5302
      %v5344 = vpop.xlane.xlu0 %5343
      %5345 = vmax.xlane.f32.xlu0 %v5307
      %v5346 = vpop.xlane.xlu0 %5345
      %5347 = vmax.xlane.f32.xlu0 %v5310
      %v5348 = vpop.xlane.xlu0 %5347
      %5349 = vmax.xlane.f32.xlu0 %v5315
      %v5350 = vpop.xlane.xlu0 %5349
      %5351 = vmax.xlane.f32.xlu0 %v5318
      %v5352 = vpop.xlane.xlu0 %5351
      %v5353 = vsub.f32 %v5259, %v5322
      %v5354 = vsub.f32 %v5262, %v5324
      %v5355 = vsub.f32 %v5267, %v5326
      %v5356 = vsub.f32 %v5270, %v5328
      %v5357 = vsub.f32 %v5275, %v5330
      %v5358 = vsub.f32 %v5278, %v5332
      %v5359 = vsub.f32 %v5283, %v5334
      %v5360 = vsub.f32 %v5286, %v5336
      %v5361 = vsub.f32 %v5291, %v5338
      %v5362 = vsub.f32 %v5294, %v5340
      %v5363 = vsub.f32 %v5299, %v5342
      %v5364 = vsub.f32 %v5302, %v5344
      %v5365 = vsub.f32 %v5307, %v5346
      %v5366 = vsub.f32 %v5310, %v5348
      %v5367 = vsub.f32 %v5315, %v5350
      %v5368 = vsub.f32 %v5318, %v5352
      %v5369 = vmul.f32 %v5353, 1.442695
      %v5370 = vpow.pop %v5369
      %v5371 = vmul.f32 %v5354, 1.442695
      %v5372 = vpow.pop %v5371
      %v5373 = vmul.f32 %v5355, 1.442695
      %v5374 = vpow.pop %v5373
      %v5375 = vmul.f32 %v5356, 1.442695
      %v5376 = vpow.pop %v5375
      %v5377 = vmul.f32 %v5357, 1.442695
      %v5378 = vpow.pop %v5377
      %v5379 = vmul.f32 %v5358, 1.442695
      %v5380 = vpow.pop %v5379
      %v5381 = vmul.f32 %v5359, 1.442695
      %v5382 = vpow.pop %v5381
      %v5383 = vmul.f32 %v5360, 1.442695
      %v5384 = vpow.pop %v5383
      %v5385 = vmul.f32 %v5361, 1.442695
      %v5386 = vpow.pop %v5385
      %v5387 = vmul.f32 %v5362, 1.442695
      %v5388 = vpow.pop %v5387
      %v5389 = vmul.f32 %v5363, 1.442695
      %v5390 = vpow.pop %v5389
      %v5391 = vmul.f32 %v5364, 1.442695
      %v5392 = vpow.pop %v5391
      %v5393 = vmul.f32 %v5365, 1.442695
      %v5394 = vpow.pop %v5393
      %v5395 = vmul.f32 %v5366, 1.442695
      %v5396 = vpow.pop %v5395
      %v5397 = vmul.f32 %v5367, 1.442695
      %v5398 = vpow.pop %v5397
      %v5399 = vmul.f32 %v5368, 1.442695
      %v5400 = vpow.pop %v5399
      %5401 = vadd.xlane.f32.xlu0 %v5370
      %v5402 = vpop.xlane.xlu0 %5401
      %5403 = vadd.xlane.f32.xlu0 %v5372
      %v5404 = vpop.xlane.xlu0 %5403
      %5405 = vadd.xlane.f32.xlu0 %v5374
      %v5406 = vpop.xlane.xlu0 %5405
      %5407 = vadd.xlane.f32.xlu0 %v5376
      %v5408 = vpop.xlane.xlu0 %5407
      %5409 = vadd.xlane.f32.xlu0 %v5378
      %v5410 = vpop.xlane.xlu0 %5409
      %5411 = vadd.xlane.f32.xlu0 %v5380
      %v5412 = vpop.xlane.xlu0 %5411
      %5413 = vadd.xlane.f32.xlu0 %v5382
      %v5414 = vpop.xlane.xlu0 %5413
      %5415 = vadd.xlane.f32.xlu0 %v5384
      %v5416 = vpop.xlane.xlu0 %5415
      %5417 = vadd.xlane.f32.xlu0 %v5386
      %v5418 = vpop.xlane.xlu0 %5417
      %5419 = vadd.xlane.f32.xlu0 %v5388
      %v5420 = vpop.xlane.xlu0 %5419
      %5421 = vadd.xlane.f32.xlu0 %v5390
      %v5422 = vpop.xlane.xlu0 %5421
      %5423 = vadd.xlane.f32.xlu0 %v5392
      %v5424 = vpop.xlane.xlu0 %5423
      %5425 = vadd.xlane.f32.xlu0 %v5394
      %v5426 = vpop.xlane.xlu0 %5425
      %5427 = vadd.xlane.f32.xlu0 %v5396
      %v5428 = vpop.xlane.xlu0 %5427
      %5429 = vadd.xlane.f32.xlu0 %v5398
      %v5430 = vpop.xlane.xlu0 %5429
      %5431 = vadd.xlane.f32.xlu0 %v5400
      %v5432 = vpop.xlane.xlu0 %5431
      %v5433 = vrcp.pop %v5402
      %v5434 = vrcp.pop %v5404
      %v5435 = vrcp.pop %v5406
      %v5436 = vrcp.pop %v5408
      %v5437 = vrcp.pop %v5410
      %v5438 = vrcp.pop %v5412
      %v5439 = vrcp.pop %v5414
      %v5440 = vrcp.pop %v5416
      %v5441 = vrcp.pop %v5418
      %v5442 = vrcp.pop %v5420
      %v5443 = vrcp.pop %v5422
      %v5444 = vrcp.pop %v5424
      %v5445 = vrcp.pop %v5426
      %v5446 = vrcp.pop %v5428
      %v5447 = vrcp.pop %v5430
      %v5448 = vrcp.pop %v5432
      %v5449 = vmul.f32 %v5370, %v5433
      %v5450 = vmul.f32 %v5372, %v5434
      %v5451 = vmul.f32 %v5374, %v5435
      %v5452 = vmul.f32 %v5376, %v5436
      %v5453 = vmul.f32 %v5378, %v5437
      %v5454 = vmul.f32 %v5380, %v5438
      %v5455 = vmul.f32 %v5382, %v5439
      %v5456 = vmul.f32 %v5384, %v5440
      %v5457 = vmul.f32 %v5386, %v5441
      %v5458 = vmul.f32 %v5388, %v5442
      %v5459 = vmul.f32 %v5390, %v5443
      %v5460 = vmul.f32 %v5392, %v5444
      %v5461 = vmul.f32 %v5394, %v5445
      %v5462 = vmul.f32 %v5396, %v5446
      %v5463 = vmul.f32 %v5398, %v5447
      %v5464 = vmul.f32 %v5400, %v5448
      %v5465 = vpack.c.bf16 %v5450, %v5449
      %v5466 = vpack.c.bf16 %v5452, %v5451
      %v5467 = vpack.c.bf16 %v5454, %v5453
      %v5468 = vpack.c.bf16 %v5456, %v5455
      %v5469 = vpack.c.bf16 %v5458, %v5457
      %v5470 = vpack.c.bf16 %v5460, %v5459
      %v5471 = vpack.c.bf16 %v5462, %v5461
      %v5472 = vpack.c.bf16 %v5464, %v5463
      %5473 = vrot.lane.b32.xlu0 %v944, 16
      %v5474 = vpop.permute.xlu0 %5473
      %5475 = vrot.lane.b32.xlu0 %v945, 16
      %v5476 = vpop.permute.xlu0 %5475
      %5477 = vrot.lane.b32.xlu0 %v946, 16
      %v5478 = vpop.permute.xlu0 %5477
      %5479 = vrot.lane.b32.xlu0 %v947, 16
      %v5480 = vpop.permute.xlu0 %5479
      %5481 = vrot.lane.b32.xlu0 %v948, 16
      %v5482 = vpop.permute.xlu0 %5481
      %5483 = vrot.lane.b32.xlu0 %v949, 16
      %v5484 = vpop.permute.xlu0 %5483
      %5485 = vrot.lane.b32.xlu0 %v950, 16
      %v5486 = vpop.permute.xlu0 %5485
      %5487 = vrot.lane.b32.xlu0 %v951, 16
      %v5488 = vpop.permute.xlu0 %5487
      %5497 = vmatprep.subr.bf16.mxu0 0
      %5498 = vmatpush1.bf16.msra.mxu0 %v5474
      %5499 = vmatprep.subr.bf16.mxu0 0
      %5500 = vmatpush1.bf16.msra.mxu0 %v5476
      %5501 = vmatprep.subr.bf16.mxu0 0
      %5502 = vmatpush1.bf16.msra.mxu0 %v5478
      %5503 = vmatprep.subr.bf16.mxu0 0
      %5504 = vmatpush1.bf16.msra.mxu0 %v5480
      %5505 = vmatprep.subr.bf16.mxu0 0
      %5506 = vmatpush1.bf16.msra.mxu0 %v5482
      %5507 = vmatprep.subr.bf16.mxu0 0
      %5508 = vmatpush1.bf16.msra.mxu0 %v5484
      %5509 = vmatprep.subr.bf16.mxu0 0
      %5510 = vmatpush1.bf16.msra.mxu0 %v5486
      %5511 = vmatprep.subr.bf16.mxu0 0
      %5512 = vmatpush1.bf16.msra.mxu0 %v5488
      %5513 = vmatprep.subr.bf16.mxu0 0
      %5514 = vmatpush1.bf16.msra.mxu0 0
      %5515 = vmatprep.subr.bf16.mxu0 0
      %5516 = vmatpush1.bf16.msra.mxu0 0
      %5517 = vmatprep.subr.bf16.mxu0 0
      %5518 = vmatpush1.bf16.msra.mxu0 0
      %5519 = vmatprep.subr.bf16.mxu0 0
      %5520 = vmatpush1.bf16.msra.mxu0 0
      %5521 = vmatprep.subr.bf16.mxu0 0
      %5522 = vmatpush1.bf16.msra.mxu0 0
      %5523 = vmatprep.subr.bf16.mxu0 0
      %5524 = vmatpush1.bf16.msra.mxu0 0
      %5525 = vmatprep.subr.bf16.mxu0 0
      %5526 = vmatpush1.bf16.msra.mxu0 0
      %5527 = vmatprep.subr.bf16.mxu0 0
      %5528 = vmatpush1.bf16.msra.mxu0 0
      %5529 = vmatprep.mubr.bf16.mxu0 0
      %5530 = vmatmul.mubr.bf16.gmra.mrb[0].mxu0 %v5465
      %v5531 = vpop.f32.mrb[0].mxu0
      %v5532 = vadd.f32 0.0, %v5531
      %v5533 = vpop.f32.mrb[0].mxu0
      %v5534 = vpop.f32.mrb[0].mxu0
      %v5535 = vadd.f32 0.0, %v5534
      %v5536 = vpop.f32.mrb[0].mxu0
      %5537 = vmatprep.mubr.bf16.mxu0 0
      %5538 = vmatmul.mubr.bf16.gmra.mrb[0].mxu0 %v5466
      %v5539 = vpop.f32.mrb[0].mxu0
      %v5540 = vadd.f32 0.0, %v5539
      %v5541 = vpop.f32.mrb[0].mxu0
      %v5542 = vpop.f32.mrb[0].mxu0
      %v5543 = vadd.f32 0.0, %v5542
      %v5544 = vpop.f32.mrb[0].mxu0
      %5545 = vmatprep.mubr.bf16.mxu0 0
      %5546 = vmatmul.mubr.bf16.gmra.mrb[0].mxu0 %v5467
      %v5547 = vpop.f32.mrb[0].mxu0
      %v5548 = vadd.f32 0.0, %v5547
      %v5549 = vpop.f32.mrb[0].mxu0
      %v5550 = vpop.f32.mrb[0].mxu0
      %v5551 = vadd.f32 0.0, %v5550
      %v5552 = vpop.f32.mrb[0].mxu0
      %5553 = vmatprep.mubr.bf16.mxu0 0
      %5554 = vmatmul.mubr.bf16.gmra.mrb[0].mxu0 %v5468
      %v5555 = vpop.f32.mrb[0].mxu0
      %v5556 = vadd.f32 0.0, %v5555
      %v5557 = vpop.f32.mrb[0].mxu0
      %v5558 = vpop.f32.mrb[0].mxu0
      %v5559 = vadd.f32 0.0, %v5558
      %v5560 = vpop.f32.mrb[0].mxu0
      %5561 = vmatprep.mubr.bf16.mxu0 0
      %5562 = vmatmul.mubr.bf16.gmra.mrb[0].mxu0 %v5469
      %v5563 = vpop.f32.mrb[0].mxu0
      %v5564 = vadd.f32 0.0, %v5563
      %v5565 = vpop.f32.mrb[0].mxu0
      %v5566 = vpop.f32.mrb[0].mxu0
      %v5567 = vadd.f32 0.0, %v5566
      %v5568 = vpop.f32.mrb[0].mxu0
      %5569 = vmatprep.mubr.bf16.mxu0 0
      %5570 = vmatmul.mubr.bf16.gmra.mrb[0].mxu0 %v5470
      %v5571 = vpop.f32.mrb[0].mxu0
      %v5572 = vadd.f32 0.0, %v5571
      %v5573 = vpop.f32.mrb[0].mxu0
      %v5574 = vpop.f32.mrb[0].mxu0
      %v5575 = vadd.f32 0.0, %v5574
      %v5576 = vpop.f32.mrb[0].mxu0
      %5577 = vmatprep.mubr.bf16.mxu0 0
      %5578 = vmatmul.mubr.bf16.gmra.mrb[0].mxu0 %v5471
      %v5579 = vpop.f32.mrb[0].mxu0
      %v5580 = vadd.f32 0.0, %v5579
      %v5581 = vpop.f32.mrb[0].mxu0
      %v5582 = vpop.f32.mrb[0].mxu0
      %v5583 = vadd.f32 0.0, %v5582
      %v5584 = vpop.f32.mrb[0].mxu0
      %5585 = vmatprep.mubr.bf16.mxu0 0
      %5586 = vmatmul.mubr.bf16.gmra.mrb[0].mxu0 %v5472
      %v5587 = vpop.f32.mrb[0].mxu0
      %v5588 = vadd.f32 0.0, %v5587
      %v5589 = vpop.f32.mrb[0].mxu0
      %v5590 = vpop.f32.mrb[0].mxu0
      %v5591 = vadd.f32 0.0, %v5590
      %v5592 = vpop.f32.mrb[0].mxu0
      %5593 = vdwg.mxu0
      %v5594 = vpack.c.bf16 %v5535, %v5532
      %v5595 = vpack.c.bf16 %v5543, %v5540
      %v5596 = vpack.c.bf16 %v5551, %v5548
      %v5597 = vpack.c.bf16 %v5559, %v5556
      %v5598 = vpack.c.bf16 %v5567, %v5564
      %v5599 = vpack.c.bf16 %v5575, %v5572
      %v5600 = vpack.c.bf16 %v5583, %v5580
      %v5601 = vpack.c.bf16 %v5591, %v5588
      %v5604 = vunpack.c.l.b16 %v998
      %v5605 = vunpack.c.l.b16 %v999
      %v5606 = vpack.c.b16 %v5605, %v5604
      %v5609 = vsel %vm1000, %v5594, 0
      %v5612 = vsel %vm1000, %v5595, 0
      %v5615 = vsel %vm1000, %v5596, 0
      %v5618 = vsel %vm1000, %v5597, 0
      %v5621 = vsel %vm1000, %v5598, 0
      %v5624 = vsel %vm1000, %v5599, 0
      %v5627 = vsel %vm1000, %v5600, 0
      %v5630 = vsel %vm1000, %v5601, 0
      %5632 = vmatprep.subr.bf16.mxu0 0
      %5633 = vmatpush1.bf16.msra.mxu0 %v5606
      %5634 = vmatprep.subr.bf16.mxu0 0
      %5635 = vmatpush1.bf16.msra.mxu0 0
      %5636 = vmatprep.subr.bf16.mxu0 0
      %5637 = vmatpush1.bf16.msra.mxu0 0
      %5638 = vmatprep.subr.bf16.mxu0 0
      %5639 = vmatpush1.bf16.msra.mxu0 0
      %5640 = vmatprep.subr.bf16.mxu0 0
      %5641 = vmatpush1.bf16.msra.mxu0 0
      %5642 = vmatprep.subr.bf16.mxu0 0
      %5643 = vmatpush1.bf16.msra.mxu0 0
      %5644 = vmatprep.subr.bf16.mxu0 0
      %5645 = vmatpush1.bf16.msra.mxu0 0
      %5646 = vmatprep.subr.bf16.mxu0 0
      %5647 = vmatpush1.bf16.msra.mxu0 0
      %5648 = vmatprep.subr.bf16.mxu0 0
      %5649 = vmatpush1.bf16.msra.mxu0 0
      %5650 = vmatprep.subr.bf16.mxu0 0
      %5651 = vmatpush1.bf16.msra.mxu0 0
      %5652 = vmatprep.subr.bf16.mxu0 0
      %5653 = vmatpush1.bf16.msra.mxu0 0
      %5654 = vmatprep.subr.bf16.mxu0 0
      %5655 = vmatpush1.bf16.msra.mxu0 0
      %5656 = vmatprep.subr.bf16.mxu0 0
      %5657 = vmatpush1.bf16.msra.mxu0 0
      %5658 = vmatprep.subr.bf16.mxu0 0
      %5659 = vmatpush1.bf16.msra.mxu0 0
      %5660 = vmatprep.subr.bf16.mxu0 0
      %5661 = vmatpush1.bf16.msra.mxu0 0
      %5662 = vmatprep.subr.bf16.mxu0 0
      %5663 = vmatpush1.bf16.msra.mxu0 0
      %5664 = vmatprep.mubr.bf16.mxu0 0
      %5665 = vmatmul.mubr.bf16.gmra.mrb[0].mxu0 %v5609
      %v5666 = vpop.f32.mrb[0].mxu0
      %v5667 = vadd.f32 0.0, %v5666
      %v5668 = vpop.f32.mrb[0].mxu0
      %v5669 = vpop.f32.mrb[0].mxu0
      %v5670 = vadd.f32 0.0, %v5669
      %v5671 = vpop.f32.mrb[0].mxu0
      %5672 = vmatprep.mubr.bf16.mxu0 0
      %5673 = vmatmul.mubr.bf16.gmra.mrb[0].mxu0 %v5612
      %v5674 = vpop.f32.mrb[0].mxu0
      %v5675 = vadd.f32 0.0, %v5674
      %v5676 = vpop.f32.mrb[0].mxu0
      %v5677 = vpop.f32.mrb[0].mxu0
      %v5678 = vadd.f32 0.0, %v5677
      %v5679 = vpop.f32.mrb[0].mxu0
      %5680 = vmatprep.mubr.bf16.mxu0 0
      %5681 = vmatmul.mubr.bf16.gmra.mrb[0].mxu0 %v5615
      %v5682 = vpop.f32.mrb[0].mxu0
      %v5683 = vadd.f32 0.0, %v5682
      %v5684 = vpop.f32.mrb[0].mxu0
      %v5685 = vpop.f32.mrb[0].mxu0
      %v5686 = vadd.f32 0.0, %v5685
      %v5687 = vpop.f32.mrb[0].mxu0
      %5688 = vmatprep.mubr.bf16.mxu0 0
      %5689 = vmatmul.mubr.bf16.gmra.mrb[0].mxu0 %v5618
      %v5690 = vpop.f32.mrb[0].mxu0
      %v5691 = vadd.f32 0.0, %v5690
      %v5692 = vpop.f32.mrb[0].mxu0
      %v5693 = vpop.f32.mrb[0].mxu0
      %v5694 = vadd.f32 0.0, %v5693
      %v5695 = vpop.f32.mrb[0].mxu0
      %5696 = vmatprep.mubr.bf16.mxu0 0
      %5697 = vmatmul.mubr.bf16.gmra.mrb[0].mxu0 %v5621
      %v5698 = vpop.f32.mrb[0].mxu0
      %v5699 = vadd.f32 0.0, %v5698
      %v5700 = vpop.f32.mrb[0].mxu0
      %v5701 = vpop.f32.mrb[0].mxu0
      %v5702 = vadd.f32 0.0, %v5701
      %v5703 = vpop.f32.mrb[0].mxu0
      %5704 = vmatprep.mubr.bf16.mxu0 0
      %5705 = vmatmul.mubr.bf16.gmra.mrb[0].mxu0 %v5624
      %v5706 = vpop.f32.mrb[0].mxu0
      %v5707 = vadd.f32 0.0, %v5706
      %v5708 = vpop.f32.mrb[0].mxu0
      %v5709 = vpop.f32.mrb[0].mxu0
      %v5710 = vadd.f32 0.0, %v5709
      %v5711 = vpop.f32.mrb[0].mxu0
      %5712 = vmatprep.mubr.bf16.mxu0 0
      %5713 = vmatmul.mubr.bf16.gmra.mrb[0].mxu0 %v5627
      %v5714 = vpop.f32.mrb[0].mxu0
      %v5715 = vadd.f32 0.0, %v5714
      %v5716 = vpop.f32.mrb[0].mxu0
      %v5717 = vpop.f32.mrb[0].mxu0
      %v5718 = vadd.f32 0.0, %v5717
      %v5719 = vpop.f32.mrb[0].mxu0
      %5720 = vmatprep.mubr.bf16.mxu0 0
      %5721 = vmatmul.mubr.bf16.gmra.mrb[0].mxu0 %v5630
      %v5722 = vpop.f32.mrb[0].mxu0
      %v5723 = vadd.f32 0.0, %v5722
      %v5724 = vpop.f32.mrb[0].mxu0
      %v5725 = vpop.f32.mrb[0].mxu0
      %v5726 = vadd.f32 0.0, %v5725
      %v5727 = vpop.f32.mrb[0].mxu0
      %5728 = vdwg.mxu0
      %v5729 = vadd.f32 %v5128, %v5667
      %v5730 = vadd.f32 %v5129, %v5670
      %v5731 = vadd.f32 %v5130, %v5675
      %v5732 = vadd.f32 %v5131, %v5678
      %v5733 = vadd.f32 %v5132, %v5683
      %v5734 = vadd.f32 %v5133, %v5686
      %v5735 = vadd.f32 %v5134, %v5691
      %v5736 = vadd.f32 %v5135, %v5694
      %v5737 = vadd.f32 %v5136, %v5699
      %v5738 = vadd.f32 %v5137, %v5702
      %v5739 = vadd.f32 %v5138, %v5707
      %v5740 = vadd.f32 %v5139, %v5710
      %v5741 = vadd.f32 %v5140, %v5715
      %v5742 = vadd.f32 %v5141, %v5718
      %v5743 = vadd.f32 %v5142, %v5723
      %v5744 = vadd.f32 %v5143, %v5726
      %v5745 = vld [vmem:[%s8] sm:$0x1]
      %v5747 = vlaneseq
      %v5748 = vshrl.u32 %v5747, 7
      %v5749 = vsub.s32 0, %v5748
      %v5750 = vrot.slane %v5745, %v5749
      %v5752 = vadd.f32 %v5729, %v5750
      %v5753 = vadd.f32 %v5730, %v5750
      %v5754 = vadd.f32 %v5731, %v5750
      %v5755 = vadd.f32 %v5732, %v5750
      %v5756 = vadd.f32 %v5733, %v5750
      %v5757 = vadd.f32 %v5734, %v5750
      %v5758 = vadd.f32 %v5735, %v5750
      %v5759 = vadd.f32 %v5736, %v5750
      %v5760 = vadd.f32 %v5737, %v5750
      %v5761 = vadd.f32 %v5738, %v5750
      %v5762 = vadd.f32 %v5739, %v5750
      %v5763 = vadd.f32 %v5740, %v5750
      %v5764 = vadd.f32 %v5741, %v5750
      %v5765 = vadd.f32 %v5742, %v5750
      %v5766 = vadd.f32 %v5743, %v5750
      %v5767 = vadd.f32 %v5744, %v5750
      %5768 = vst [vmem:[%s376] sm:$0xff] %v5752
      %5769 = vst [vmem:[%s376 + $0x8] sm:$0xff] %v5753
      %5770 = vst [vmem:[%s376 + $0x10] sm:$0xff] %v5754
      %5771 = vst [vmem:[%s376 + $0x18] sm:$0xff] %v5755
      %5772 = vst [vmem:[%s376 + $0x20] sm:$0xff] %v5756
      %5773 = vst [vmem:[%s376 + $0x28] sm:$0xff] %v5757
      %5774 = vst [vmem:[%s376 + $0x30] sm:$0xff] %v5758
      %5775 = vst [vmem:[%s376 + $0x38] sm:$0xff] %v5759
      %5776 = vst [vmem:[%s376 + $0x40] sm:$0xff] %v5760
      %5777 = vst [vmem:[%s376 + $0x48] sm:$0xff] %v5761
      %5778 = vst [vmem:[%s376 + $0x50] sm:$0xff] %v5762
      %5779 = vst [vmem:[%s376 + $0x58] sm:$0xff] %v5763
      %5780 = vst [vmem:[%s376 + $0x60] sm:$0xff] %v5764
      %5781 = vst [vmem:[%s376 + $0x68] sm:$0xff] %v5765
      %5782 = vst [vmem:[%s376 + $0x70] sm:$0xff] %v5766
      %5783 = vst [vmem:[%s376 + $0x78] sm:$0xff] %v5767
      %s5784 = smul.u32 16, %s20
      %p5785 = scmp.lt.s32.totalorder %s5784, 47
      %s5786 = scalar_select %p5785, %s5784, 47
      %s5787 = smul.addr %s5786, 8
      %s5788 = scalar_lea.vmem %s9, %s5787
      // Predicated region
      $region57: #{window_attention_pallas.1} parent=55 // pred_check
        %p5789 = pneg %p242
      $region58: #{window_attention_pallas.1} parent=55 // pred_check_branch
        %5791 = sbr.rel (%p5789) target = $region60
      $region59: #{window_attention_pallas.1} parent=55 // pred_region
        %s5792 = smul.u32 16, %s20
      $region60: #{window_attention_pallas.1} parent=55 // pred_fallthru
        _
    $region56: #{window_attention_pallas.1} parent=5 // pred_fallthru
      _
    %p5793 = scmp.le.s32.totalorder 2, %s15
    // Predicated region
    $region61: #{window_attention_pallas.1} parent=5 // pred_check
      %p5794 = pneg %p5793
    $region62: #{window_attention_pallas.1} parent=5 // pred_check_branch
      %5796 = sbr.rel (%p5794) target = $region64
    $region63: #{window_attention_pallas.1} parent=5 // pred_region
      %s5797 = ssub.s32 %s15, 2
      // Predicated region
      $region65: #{window_attention_pallas.1} parent=63 // pred_check
        %p5798 = pneg %p248
      $region66: #{window_attention_pallas.1} parent=63 // pred_check_branch
        %5800 = sbr.rel (%p5798) target = $region68
      $region67: #{window_attention_pallas.1} parent=63 // pred_region
        %s5801 = smul.u32 16, %s21
        %p5802 = scmp.lt.s32.totalorder %s5801, 47
        %s5803 = scalar_select %p5802, %s5801, 47
        %s5804 = smul.addr %s5803, 8
        %s5805 = scalar_lea.vmem %s9, %s5804
      $region68: #{window_attention_pallas.1} parent=63 // pred_fallthru
        _
    $region64: #{window_attention_pallas.1} parent=5 // pred_fallthru
      _
  $region6: #{window_attention_pallas.1} parent=0 // loop_footer
    %s19 = sadd.s32 1, %s15
  $region7: #{window_attention_pallas.1} parent=0 // loop_footer_branch
    %14 = sbr.rel target = $region3
  $region8: #{window_attention_pallas.1} parent=0 // loop_exit
    _

</llo_original>
